<compile_context>
chip_gen: v7x
topology: tpu7x:2x2x1
jax: 0.10.0
libtpu: 0.0.40
codegen_flags: <defaults>
</compile_context>

<pallas_src>
import functools

import jax
import jax.numpy as jnp
from jax import lax
from jax.experimental import pallas as pl
from jax.experimental.pallas import tpu as pltpu


def _encoder_layer_kernel(x_ref,                      # (L, E)  full sequence, one batch elem
                          wq_ref, bq_ref,             # Q proj (scale pre-folded)
                          wk_ref, bk_ref,
                          wv_ref, bv_ref,
                          wo_ref, bo_ref,
                          w1_ref, b1_ref,
                          w2_ref, b2_ref,
                          g1_ref, be1_ref, g2_ref, be2_ref,
                          out_ref,                    # (tq, E)
                          k_scr, v_scr, o_scr,        # VMEM scratch
                          *, nhead, tq, eps, matmul_dtype, approx_softmax):
    md = matmul_dtype
    L, E = x_ref.shape
    hd = E // nhead
    qi = pl.program_id(1)

    # ---- K/V projection: once per batch element (q-tile axis is 'arbitrary'
    # ---- and iterates fastest); cached in VMEM scratch across query tiles.
    # NOTE: this relies on the query-tile axis staying the innermost sequential
    # ("arbitrary") grid axis; do not mark it parallel without hoisting this.
    @pl.when(qi == 0)
    def _():
        xf = x_ref[...].astype(md)
        k_full = jnp.dot(xf, wk_ref[...], preferred_element_type=jnp.float32) + bk_ref[...]
        v_full = jnp.dot(xf, wv_ref[...], preferred_element_type=jnp.float32) + bv_ref[...]
        k_scr[...] = k_full.astype(md)
        v_scr[...] = v_full.astype(md)

    # ---- current query tile --------------------------------------------------
    row0 = pl.multiple_of(qi * tq, tq)
    xq_md = x_ref[pl.ds(row0, tq), :].astype(md)                # matmul operands
    xq_f32 = xq_md.astype(jnp.float32)                          # residual path (f32)

    # Q projection; 1/sqrt(hd) is already folded into wq/bq on the host.
    q = (jnp.dot(xq_md, wq_ref[...], preferred_element_type=jnp.float32)
         + bq_ref[...]).astype(md)                              # (tq, E)
    k = k_scr[...]                                              # (L, E)
    v = v_scr[...]

    # ---- multi-head attention ------------------------------------------------
    # Scores via dot_general (rhs contracting dim) -> K^T folded into the MXU
    # operand load.  Per-head outputs land in o_scr (matmul dtype); a single
    # (tq,E)@(E,E) matmul against W_o follows the loop (full-K MXU utilisation).
    for h in range(nhead):
        sl = slice(h * hd, (h + 1) * hd)
        s = lax.dot_general(q[:, sl], k[:, sl], (((1,), (1,)), ((), ())),
                            preferred_element_type=jnp.float32)          # (tq, L)
        s = s - jnp.max(s, axis=-1, keepdims=True)
        p = jnp.exp(s)
        p = p * pl.reciprocal(jnp.sum(p, axis=-1, keepdims=True),
                              approx=approx_softmax)
        o_scr[:, sl] = jnp.dot(p.astype(md), v[:, sl],
                               preferred_element_type=jnp.float32).astype(md)

    attn = jnp.dot(o_scr[...], wo_ref[...],
                   preferred_element_type=jnp.float32) + bo_ref[...]

    # ---- residual + LayerNorm 1 (dropout1 = identity) -------------------------
    r1 = xq_f32 + attn
    mu1 = jnp.mean(r1, axis=-1, keepdims=True)
    var1 = jnp.mean((r1 - mu1) ** 2, axis=-1, keepdims=True)
    ln1 = (r1 - mu1) * lax.rsqrt(var1 + eps) * g1_ref[...] + be1_ref[...]

    # ---- feed-forward: linear1 -> relu -> linear2 (dropout = identity) --------
    h1 = jnp.dot(ln1.astype(md), w1_ref[...],
                 preferred_element_type=jnp.float32) + b1_ref[...]
    h1 = jnp.maximum(h1, 0.0)
    h2 = jnp.dot(h1.astype(md), w2_ref[...],
                 preferred_element_type=jnp.float32) + b2_ref[...]

    # ---- residual + LayerNorm 2 (dropout2 = identity) -------------------------
    r2 = ln1 + h2
    mu2 = jnp.mean(r2, axis=-1, keepdims=True)
    var2 = jnp.mean((r2 - mu2) ** 2, axis=-1, keepdims=True)
    ln2 = (r2 - mu2) * lax.rsqrt(var2 + eps) * g2_ref[...] + be2_ref[...]

    out_ref[...] = ln2.astype(out_ref.dtype)


def prepare_params(params, *, d_model, nhead, matmul_dtype=jnp.bfloat16):
    """One-time host transform: split fused QKV weights, fold 1/sqrt(head_dim)
    into the Q projection, cast matmul weights to the MXU operand dtype
    (bf16 default; f32 accumulation is kept in-kernel).  Biases/LN params f32."""
    E = d_model
    hd = E // nhead
    scale = 1.0 / (hd ** 0.5)
    wqkv, bqkv = params["wqkv"], params["bqkv"]
    md = matmul_dtype
    f32 = jnp.float32
    return dict(
        wq=(wqkv[:, :E] * scale).astype(md), bq=(bqkv[:, :E] * scale).astype(f32),
        wk=wqkv[:, E:2 * E].astype(md),      bk=bqkv[:, E:2 * E].astype(f32),
        wv=wqkv[:, 2 * E:].astype(md),       bv=bqkv[:, 2 * E:].astype(f32),
        wo=params["wo"].astype(md),          bo=params["bo"].astype(f32),
        w1=params["w1"].astype(md),          b1=params["b1"].astype(f32),
        w2=params["w2"].astype(md),          b2=params["b2"].astype(f32),
        g1=params["g1"].astype(f32),         be1=params["be1"].astype(f32),
        g2=params["g2"].astype(f32),         be2=params["be2"].astype(f32),
    )


def _vmem_limit_bytes(L, E, FF, tq, matmul_dtype, weights, out_itemsize):
    """Generation-aware VMEM budget for the resident set (clamped to chip cap)."""
    mdb = jnp.dtype(matmul_dtype).itemsize
    x_block = 2 * L * E * mdb                       # double-buffered activation block
    w_bytes = sum(int(a.size) * a.dtype.itemsize for a in weights)  # single-buffered
    scr = (2 * L * E + tq * E) * mdb                # K/V cache + head-output scratch
    out_block = 2 * tq * E * out_itemsize
    tmp = 4 * tq * (L + FF + 6 * E)                 # f32 temporaries (scores, FFN, LN)
    need = x_block + w_bytes + scr + out_block + tmp + (2 << 20)
    try:
        cap = int(pltpu.get_tpu_info().vmem_capacity_bytes)  # 128 MiB v5e/v6e, 64 MiB v7x
    except Exception:
        cap = 64 * 1024 * 1024
    return int(min(max(need, 32 * 1024 * 1024), int(cap * 0.9)))


def transformer_encoder_layer(src, prepared, *, nhead, q_block=256,
                              matmul_dtype=jnp.bfloat16, eps=1e-5,
                              batch_major=False, approx_softmax=None):
    """src: (L, N, E) PyTorch seq-first layout (or (N, L, E) if batch_major=True).
    Returns the same layout as the input."""
    if batch_major:
        x = src
        N, L, E = src.shape
    else:
        # One extra HBM read+write of the activations; multi-layer stacks should
        # keep batch-major activations and pass batch_major=True.
        x = jnp.transpose(src, (1, 0, 2))                       # (N, L, E)
        L, N, E = src.shape
    assert E % nhead == 0
    tq = min(q_block, L)
    assert L % tq == 0 and (tq % 8 == 0 or tq == L)
    nq = L // tq
    out_dtype = src.dtype
    if approx_softmax is None:
        # EUP approx reciprocal only in the mixed-precision production path.
        approx_softmax = jnp.dtype(matmul_dtype) != jnp.dtype(jnp.float32)

    # Stream activations at the MXU operand width (halves the largest DMA in bf16).
    x = x.astype(matmul_dtype)

    kern = functools.partial(_encoder_layer_kernel, nhead=nhead, tq=tq, eps=eps,
                             matmul_dtype=matmul_dtype,
                             approx_softmax=bool(approx_softmax))

    w_names = ("wq", "bq", "wk", "bk", "wv", "bv", "wo", "bo",
               "w1", "b1", "w2", "b2", "g1", "be1", "g2", "be2")
    w_args = tuple(prepared[n] for n in w_names)
    FF = prepared["w1"].shape[1]

    vmem_limit = _vmem_limit_bytes(L, E, FF, tq, matmul_dtype, w_args,
                                   jnp.dtype(out_dtype).itemsize)

    def build_call(single_buffer_weights):
        def whole(a):
            # Whole (small) weight array as one resident block; constant index_map
            # so it is fetched once.  Single-buffer it (double-buffering a constant
            # block only burns VMEM — matters most on v7x's 64 MiB).
            if single_buffer_weights:
                return pl.BlockSpec(a.shape, lambda b, qi: (0, 0),
                                    pipeline_mode=pl.Buffered(1))
            return pl.BlockSpec(a.shape, lambda b, qi: (0, 0))

        return pl.pallas_call(
            kern,
            out_shape=jax.ShapeDtypeStruct((N, L, E), out_dtype),
            grid_spec=pltpu.PrefetchScalarGridSpec(
                num_scalar_prefetch=0,
                grid=(N, nq),
                in_specs=[pl.BlockSpec((None, L, E), lambda b, qi: (b, 0, 0))]
                         + [whole(a) for a in w_args],
                out_specs=pl.BlockSpec((None, tq, E), lambda b, qi: (b, qi, 0)),
                scratch_shapes=[
                    pltpu.VMEM((L, E), matmul_dtype),     # K cache (per sequence)
                    pltpu.VMEM((L, E), matmul_dtype),     # V cache (per sequence)
                    pltpu.VMEM((tq, E), matmul_dtype),    # concat(head outputs)
                ],
            ),
            compiler_params=pltpu.CompilerParams(
                # batch axis independent -> megacore parallel; query-tile axis
                # carries the K/V scratch dependency -> arbitrary.
                dimension_semantics=("parallel", "arbitrary"),
                vmem_limit_bytes=vmem_limit,
            ),
        )

    try:
        out = build_call(True)(x, *w_args)
    except Exception:
        # Fallback for jax builds where pipeline_mode=pl.Buffered(1) is not
        # plumbed through the top-level TPU pallas_call: double-buffer weights.
        out = build_call(False)(x, *w_args)

    if batch_major:
        return out
    return jnp.transpose(out, (1, 0, 2))


# --------------------------- pure-JAX reference ---------------------------
def _layernorm(x, g, b, eps=1e-5):
    mu = jnp.mean(x, axis=-1, keepdims=True)
    var = jnp.mean((x - mu) ** 2, axis=-1, keepdims=True)
    return (x - mu) * lax.rsqrt(var + eps) * g + b


def _reference(src, params, *, nhead):
    L, N, E = src.shape
    hd = E // nhead
    x = jnp.transpose(src, (1, 0, 2))                                # (N, L, E)
    qkv = x @ params["wqkv"] + params["bqkv"]
    q, k, v = jnp.split(qkv, 3, axis=-1)
    q = q.reshape(N, L, nhead, hd).transpose(0, 2, 1, 3) / (hd ** 0.5)
    k = k.reshape(N, L, nhead, hd).transpose(0, 2, 1, 3)
    v = v.reshape(N, L, nhead, hd).transpose(0, 2, 1, 3)
    s = jnp.einsum("nhqd,nhkd->nhqk", q, k)
    p = jax.nn.softmax(s, axis=-1)
    o = jnp.einsum("nhqk,nhkd->nhqd", p, v).transpose(0, 2, 1, 3).reshape(N, L, E)
    attn = o @ params["wo"] + params["bo"]
    ln1 = _layernorm(x + attn, params["g1"], params["be1"])
    h = jnp.maximum(ln1 @ params["w1"] + params["b1"], 0.0)
    ln2 = _layernorm(ln1 + (h @ params["w2"] + params["b2"]),
                     params["g2"], params["be2"])
    return jnp.transpose(ln2, (1, 0, 2))


if __name__ == "__main__":
    # seq, batch, d_model, nhead, dim_feedforward (small, exercises nq=2 q tiles)
    L, N, E, H, FF = 16, 2, 32, 4, 64

    key = jax.random.PRNGKey(0)
    ks = jax.random.split(key, 10)

    def rnd(k, shape, scale=0.1):
        return jax.random.normal(k, shape, jnp.float32) * scale

    # Weights stored pre-transposed (in_features, out_features): kernel computes
    # x @ W + b (== PyTorch x @ W_pt.T + b).
    params = dict(
        wqkv=rnd(ks[0], (E, 3 * E)),   # in_proj_weight.T
        bqkv=rnd(ks[1], (1, 3 * E)),   # in_proj_bias
        wo=rnd(ks[2], (E, E)),         # out_proj.weight.T
        bo=rnd(ks[3], (1, E)),
        w1=rnd(ks[4], (E, FF)),        # linear1.weight.T
        b1=rnd(ks[5], (1, FF)),
        w2=rnd(ks[6], (FF, E)),        # linear2.weight.T
        b2=rnd(ks[7], (1, E)),
        g1=jnp.ones((1, E), jnp.float32),
        be1=jnp.zeros((1, E), jnp.float32),
        g2=jnp.ones((1, E), jnp.float32),
        be2=jnp.zeros((1, E), jnp.float32),
    )

    src = jax.random.normal(ks[8], (L, N, E), jnp.float32)
    ref = _reference(src, params, nhead=H)

    # Strict f32 parity path (exact softmax reciprocal).
    prep32 = prepare_params(params, d_model=E, nhead=H, matmul_dtype=jnp.float32)
    out32 = transformer_encoder_layer(src, prep32, nhead=H, q_block=8,
                                      matmul_dtype=jnp.float32)
    out32 = jax.block_until_ready(out32)
    assert out32.shape == (L, N, E)
    assert jnp.allclose(out32, ref, atol=2e-3, rtol=2e-3), "f32 kernel mismatch vs reference"

    # bf16-operand / f32-accumulate production (default) path.
    prep16 = prepare_params(params, d_model=E, nhead=H)          # bf16 default
    out16 = transformer_encoder_layer(src, prep16, nhead=H, q_block=8)
    out16 = jax.block_until_ready(out16)
    assert out16.shape == (L, N, E)
    assert jnp.allclose(out16, ref, atol=7e-2, rtol=7e-2), "bf16 kernel mismatch vs reference"

    # Batch-major path (no host-side layout transposes).
    out_bm = transformer_encoder_layer(jnp.transpose(src, (1, 0, 2)), prep16,
                                       nhead=H, q_block=8, batch_major=True)
    out_bm = jax.block_until_ready(out_bm)
    assert out_bm.shape == (N, L, E)
    assert jnp.allclose(jnp.transpose(out_bm, (1, 0, 2)), out16, atol=1e-5, rtol=1e-5), \
        "batch-major path mismatch"

    print("KERNEL_OK")
</pallas_src>

<mosaic_0001>
module attributes {stable_mosaic.version = 11 : i64} {
  func.func @_encoder_layer_kernel(%arg0: i32, %arg1: i32, %arg2: memref<1x16x32xf32, #tpu.memory_space<vmem>>, %arg3: memref<32x32xf32, #tpu.memory_space<vmem>>, %arg4: memref<1x32xf32, #tpu.memory_space<vmem>>, %arg5: memref<32x32xf32, #tpu.memory_space<vmem>>, %arg6: memref<1x32xf32, #tpu.memory_space<vmem>>, %arg7: memref<32x32xf32, #tpu.memory_space<vmem>>, %arg8: memref<1x32xf32, #tpu.memory_space<vmem>>, %arg9: memref<32x32xf32, #tpu.memory_space<vmem>>, %arg10: memref<1x32xf32, #tpu.memory_space<vmem>>, %arg11: memref<32x64xf32, #tpu.memory_space<vmem>>, %arg12: memref<1x64xf32, #tpu.memory_space<vmem>>, %arg13: memref<64x32xf32, #tpu.memory_space<vmem>>, %arg14: memref<1x32xf32, #tpu.memory_space<vmem>>, %arg15: memref<1x32xf32, #tpu.memory_space<vmem>>, %arg16: memref<1x32xf32, #tpu.memory_space<vmem>>, %arg17: memref<1x32xf32, #tpu.memory_space<vmem>>, %arg18: memref<1x32xf32, #tpu.memory_space<vmem>>, %arg19: memref<1x8x32xf32, #tpu.memory_space<vmem>>, %arg20: memref<16x32xf32, #tpu.memory_space<vmem>>, %arg21: memref<16x32xf32, #tpu.memory_space<vmem>>, %arg22: memref<8x32xf32, #tpu.memory_space<vmem>>) attributes {dimension_semantics = [#tpu.dimension_semantics<parallel>, #tpu.dimension_semantics<arbitrary>], iteration_bounds = array<i64: 2, 2>, scalar_prefetch = 0 : i64, scratch_operands = 3 : i64, tpu.core_type = #tpu.core_type<tc>, window_params = [{transform_indices = @transform_0, window_bounds = array<i64: 1, 16, 32>}, {pipeline_mode = #tpu.pipeline_mode<synchronous>, transform_indices = @transform_1, window_bounds = array<i64: 32, 32>}, {pipeline_mode = #tpu.pipeline_mode<synchronous>, transform_indices = @transform_2, window_bounds = array<i64: 1, 32>}, {pipeline_mode = #tpu.pipeline_mode<synchronous>, transform_indices = @transform_3, window_bounds = array<i64: 32, 32>}, {pipeline_mode = #tpu.pipeline_mode<synchronous>, transform_indices = @transform_4, window_bounds = array<i64: 1, 32>}, {pipeline_mode = #tpu.pipeline_mode<synchronous>, transform_indices = @transform_5, window_bounds = array<i64: 32, 32>}, {pipeline_mode = #tpu.pipeline_mode<synchronous>, transform_indices = @transform_6, window_bounds = array<i64: 1, 32>}, {pipeline_mode = #tpu.pipeline_mode<synchronous>, transform_indices = @transform_7, window_bounds = array<i64: 32, 32>}, {pipeline_mode = #tpu.pipeline_mode<synchronous>, transform_indices = @transform_8, window_bounds = array<i64: 1, 32>}, {pipeline_mode = #tpu.pipeline_mode<synchronous>, transform_indices = @transform_9, window_bounds = array<i64: 32, 64>}, {pipeline_mode = #tpu.pipeline_mode<synchronous>, transform_indices = @transform_10, window_bounds = array<i64: 1, 64>}, {pipeline_mode = #tpu.pipeline_mode<synchronous>, transform_indices = @transform_11, window_bounds = array<i64: 64, 32>}, {pipeline_mode = #tpu.pipeline_mode<synchronous>, transform_indices = @transform_12, window_bounds = array<i64: 1, 32>}, {pipeline_mode = #tpu.pipeline_mode<synchronous>, transform_indices = @transform_13, window_bounds = array<i64: 1, 32>}, {pipeline_mode = #tpu.pipeline_mode<synchronous>, transform_indices = @transform_14, window_bounds = array<i64: 1, 32>}, {pipeline_mode = #tpu.pipeline_mode<synchronous>, transform_indices = @transform_15, window_bounds = array<i64: 1, 32>}, {pipeline_mode = #tpu.pipeline_mode<synchronous>, transform_indices = @transform_16, window_bounds = array<i64: 1, 32>}, {transform_indices = @transform_17, window_bounds = array<i64: 1, 8, 32>}]} {
    %c0_i32 = arith.constant 0 : i32
    %0 = arith.cmpi eq, %arg1, %c0_i32 : i32
    %1 = arith.extui %0 : i1 to i32
    %c0_i32_0 = arith.constant 0 : i32
    %2 = arith.cmpi ne, %1, %c0_i32_0 : i32
    scf.if %2 {
      %c0_70 = arith.constant 0 : index
      %c0_71 = arith.constant 0 : index
      %c0_72 = arith.constant 0 : index
      %150 = vector.load %arg2[%c0_70, %c0_71, %c0_72] : memref<1x16x32xf32, #tpu.memory_space<vmem>>, vector<1x16x32xf32>
      %151 = vector.shape_cast %150 : vector<1x16x32xf32> to vector<16x32xf32>
      %c0_73 = arith.constant 0 : index
      %c0_74 = arith.constant 0 : index
      %152 = vector.load %arg5[%c0_73, %c0_74] : memref<32x32xf32, #tpu.memory_space<vmem>>, vector<32x32xf32>
      %cst_75 = arith.constant dense<0.000000e+00> : vector<16x32xf32>
      %153 = tpu.matmul %151, %152, %cst_75 {dimension_numbers = #tpu.dot_dimension_numbers<[1], [0], [0], [1], [0, 0, 1, 1], [], []>} : vector<16x32xf32>, vector<32x32xf32>, vector<16x32xf32> -> vector<16x32xf32>
      %c0_76 = arith.constant 0 : index
      %c0_77 = arith.constant 0 : index
      %154 = vector.load %arg6[%c0_76, %c0_77] : memref<1x32xf32, #tpu.memory_space<vmem>>, vector<1x32xf32>
      %155 = vector.broadcast %154 : vector<1x32xf32> to vector<16x32xf32>
      %156 = arith.addf %153, %155 : vector<16x32xf32>
      %c0_78 = arith.constant 0 : index
      %c0_79 = arith.constant 0 : index
      %157 = vector.load %arg7[%c0_78, %c0_79] : memref<32x32xf32, #tpu.memory_space<vmem>>, vector<32x32xf32>
      %cst_80 = arith.constant dense<0.000000e+00> : vector<16x32xf32>
      %158 = tpu.matmul %151, %157, %cst_80 {dimension_numbers = #tpu.dot_dimension_numbers<[1], [0], [0], [1], [0, 0, 1, 1], [], []>} : vector<16x32xf32>, vector<32x32xf32>, vector<16x32xf32> -> vector<16x32xf32>
      %c0_81 = arith.constant 0 : index
      %c0_82 = arith.constant 0 : index
      %159 = vector.load %arg8[%c0_81, %c0_82] : memref<1x32xf32, #tpu.memory_space<vmem>>, vector<1x32xf32>
      %160 = vector.broadcast %159 : vector<1x32xf32> to vector<16x32xf32>
      %161 = arith.addf %158, %160 : vector<16x32xf32>
      %c0_83 = arith.constant 0 : index
      %c0_84 = arith.constant 0 : index
      %162 = vector.load %arg20[%c0_83, %c0_84] : memref<16x32xf32, #tpu.memory_space<vmem>>, vector<16x32xf32>
      tpu.vector_store %arg20[%c0_83, %c0_84], %156 {strides = array<i32>} : memref<16x32xf32, #tpu.memory_space<vmem>>, vector<16x32xf32>,
      %c0_85 = arith.constant 0 : index
      %c0_86 = arith.constant 0 : index
      %163 = vector.load %arg21[%c0_85, %c0_86] : memref<16x32xf32, #tpu.memory_space<vmem>>, vector<16x32xf32>
      tpu.vector_store %arg21[%c0_85, %c0_86], %161 {strides = array<i32>} : memref<16x32xf32, #tpu.memory_space<vmem>>, vector<16x32xf32>,
    } else {
    }
    %c8_i32 = arith.constant 8 : i32
    %3 = arith.muli %arg1, %c8_i32 : i32
    %4 = tpu.assume_multiple %3, 8 : i32
    %c0 = arith.constant 0 : index
    %5 = arith.index_cast %4 : i32 to index
    %c0_1 = arith.constant 0 : index
    %6 = vector.load %arg2[%c0, %5, %c0_1] : memref<1x16x32xf32, #tpu.memory_space<vmem>>, vector<1x8x32xf32>
    %7 = vector.shape_cast %6 : vector<1x8x32xf32> to vector<8x32xf32>
    %c0_2 = arith.constant 0 : index
    %c0_3 = arith.constant 0 : index
    %8 = vector.load %arg3[%c0_2, %c0_3] : memref<32x32xf32, #tpu.memory_space<vmem>>, vector<32x32xf32>
    %cst = arith.constant dense<0.000000e+00> : vector<8x32xf32>
    %9 = tpu.matmul %7, %8, %cst {dimension_numbers = #tpu.dot_dimension_numbers<[1], [0], [0], [1], [0, 0, 1, 1], [], []>} : vector<8x32xf32>, vector<32x32xf32>, vector<8x32xf32> -> vector<8x32xf32>
    %c0_4 = arith.constant 0 : index
    %c0_5 = arith.constant 0 : index
    %10 = vector.load %arg4[%c0_4, %c0_5] : memref<1x32xf32, #tpu.memory_space<vmem>>, vector<1x32xf32>
    %11 = vector.broadcast %10 : vector<1x32xf32> to vector<8x32xf32>
    %12 = arith.addf %9, %11 : vector<8x32xf32>
    %c0_6 = arith.constant 0 : index
    %c0_7 = arith.constant 0 : index
    %13 = vector.load %arg20[%c0_6, %c0_7] : memref<16x32xf32, #tpu.memory_space<vmem>>, vector<16x32xf32>
    %c0_8 = arith.constant 0 : index
    %c0_9 = arith.constant 0 : index
    %14 = vector.load %arg21[%c0_8, %c0_9] : memref<16x32xf32, #tpu.memory_space<vmem>>, vector<16x32xf32>
    %15 = vector.extract_strided_slice %12 {offsets = [0, 0], sizes = [8, 8], strides = [1, 1]} : vector<8x32xf32> to vector<8x8xf32>
    %16 = vector.extract_strided_slice %13 {offsets = [0, 0], sizes = [16, 8], strides = [1, 1]} : vector<16x32xf32> to vector<16x8xf32>
    %cst_10 = arith.constant dense<0.000000e+00> : vector<8x16xf32>
    %17 = tpu.matmul %15, %16, %cst_10 {dimension_numbers = #tpu.dot_dimension_numbers<[1], [1], [0], [0], [0, 0, 1, 0], [], []>} : vector<8x8xf32>, vector<16x8xf32>, vector<8x16xf32> -> vector<8x16xf32>
    %cst_11 = arith.constant dense<0xFF800000> : vector<8xf32>
    %18 = vector.multi_reduction <maximumf>, %17, %cst_11 [1] : vector<8x16xf32> to vector<8xf32>
    %19 = vector.shape_cast %18 : vector<8xf32> to vector<8x1xf32>
    %20 = vector.broadcast %19 : vector<8x1xf32> to vector<8x16xf32>
    %21 = arith.subf %17, %20 : vector<8x16xf32>
    %22 = math.exp %21 : vector<8x16xf32>
    %cst_12 = arith.constant dense<0.000000e+00> : vector<8xf32>
    %23 = vector.multi_reduction <add>, %22, %cst_12 [1] : vector<8x16xf32> to vector<8xf32>
    %24 = vector.shape_cast %23 : vector<8xf32> to vector<8x1xf32>
    %25 = tpu.reciprocal %24 : vector<8x1xf32> -> vector<8x1xf32>
    %26 = vector.broadcast %25 : vector<8x1xf32> to vector<8x16xf32>
    %27 = arith.mulf %22, %26 : vector<8x16xf32>
    %28 = vector.extract_strided_slice %14 {offsets = [0, 0], sizes = [16, 8], strides = [1, 1]} : vector<16x32xf32> to vector<16x8xf32>
    %cst_13 = arith.constant dense<0.000000e+00> : vector<8x8xf32>
    %29 = tpu.matmul %27, %28, %cst_13 {dimension_numbers = #tpu.dot_dimension_numbers<[1], [0], [0], [1], [0, 0, 1, 1], [], []>} : vector<8x16xf32>, vector<16x8xf32>, vector<8x8xf32> -> vector<8x8xf32>
    %c0_14 = arith.constant 0 : index
    %c0_15 = arith.constant 0 : index
    %30 = vector.load %arg22[%c0_14, %c0_15] : memref<8x32xf32, #tpu.memory_space<vmem>>, vector<8x8xf32>
    tpu.vector_store %arg22[%c0_14, %c0_15], %29 {strides = array<i32>} : memref<8x32xf32, #tpu.memory_space<vmem>>, vector<8x8xf32>,
    %31 = vector.extract_strided_slice %12 {offsets = [0, 8], sizes = [8, 8], strides = [1, 1]} : vector<8x32xf32> to vector<8x8xf32>
    %32 = vector.extract_strided_slice %13 {offsets = [0, 8], sizes = [16, 8], strides = [1, 1]} : vector<16x32xf32> to vector<16x8xf32>
    %cst_16 = arith.constant dense<0.000000e+00> : vector<8x16xf32>
    %33 = tpu.matmul %31, %32, %cst_16 {dimension_numbers = #tpu.dot_dimension_numbers<[1], [1], [0], [0], [0, 0, 1, 0], [], []>} : vector<8x8xf32>, vector<16x8xf32>, vector<8x16xf32> -> vector<8x16xf32>
    %cst_17 = arith.constant dense<0xFF800000> : vector<8xf32>
    %34 = vector.multi_reduction <maximumf>, %33, %cst_17 [1] : vector<8x16xf32> to vector<8xf32>
    %35 = vector.shape_cast %34 : vector<8xf32> to vector<8x1xf32>
    %36 = vector.broadcast %35 : vector<8x1xf32> to vector<8x16xf32>
    %37 = arith.subf %33, %36 : vector<8x16xf32>
    %38 = math.exp %37 : vector<8x16xf32>
    %cst_18 = arith.constant dense<0.000000e+00> : vector<8xf32>
    %39 = vector.multi_reduction <add>, %38, %cst_18 [1] : vector<8x16xf32> to vector<8xf32>
    %40 = vector.shape_cast %39 : vector<8xf32> to vector<8x1xf32>
    %41 = tpu.reciprocal %40 : vector<8x1xf32> -> vector<8x1xf32>
    %42 = vector.broadcast %41 : vector<8x1xf32> to vector<8x16xf32>
    %43 = arith.mulf %38, %42 : vector<8x16xf32>
    %44 = vector.extract_strided_slice %14 {offsets = [0, 8], sizes = [16, 8], strides = [1, 1]} : vector<16x32xf32> to vector<16x8xf32>
    %cst_19 = arith.constant dense<0.000000e+00> : vector<8x8xf32>
    %45 = tpu.matmul %43, %44, %cst_19 {dimension_numbers = #tpu.dot_dimension_numbers<[1], [0], [0], [1], [0, 0, 1, 1], [], []>} : vector<8x16xf32>, vector<16x8xf32>, vector<8x8xf32> -> vector<8x8xf32>
    %c0_20 = arith.constant 0 : index
    %c8 = arith.constant 8 : index
    %46 = vector.load %arg22[%c0_20, %c8] : memref<8x32xf32, #tpu.memory_space<vmem>>, vector<8x8xf32>
    tpu.vector_store %arg22[%c0_20, %c8], %45 {strides = array<i32>} : memref<8x32xf32, #tpu.memory_space<vmem>>, vector<8x8xf32>,
    %47 = vector.extract_strided_slice %12 {offsets = [0, 16], sizes = [8, 8], strides = [1, 1]} : vector<8x32xf32> to vector<8x8xf32>
    %48 = vector.extract_strided_slice %13 {offsets = [0, 16], sizes = [16, 8], strides = [1, 1]} : vector<16x32xf32> to vector<16x8xf32>
    %cst_21 = arith.constant dense<0.000000e+00> : vector<8x16xf32>
    %49 = tpu.matmul %47, %48, %cst_21 {dimension_numbers = #tpu.dot_dimension_numbers<[1], [1], [0], [0], [0, 0, 1, 0], [], []>} : vector<8x8xf32>, vector<16x8xf32>, vector<8x16xf32> -> vector<8x16xf32>
    %cst_22 = arith.constant dense<0xFF800000> : vector<8xf32>
    %50 = vector.multi_reduction <maximumf>, %49, %cst_22 [1] : vector<8x16xf32> to vector<8xf32>
    %51 = vector.shape_cast %50 : vector<8xf32> to vector<8x1xf32>
    %52 = vector.broadcast %51 : vector<8x1xf32> to vector<8x16xf32>
    %53 = arith.subf %49, %52 : vector<8x16xf32>
    %54 = math.exp %53 : vector<8x16xf32>
    %cst_23 = arith.constant dense<0.000000e+00> : vector<8xf32>
    %55 = vector.multi_reduction <add>, %54, %cst_23 [1] : vector<8x16xf32> to vector<8xf32>
    %56 = vector.shape_cast %55 : vector<8xf32> to vector<8x1xf32>
    %57 = tpu.reciprocal %56 : vector<8x1xf32> -> vector<8x1xf32>
    %58 = vector.broadcast %57 : vector<8x1xf32> to vector<8x16xf32>
    %59 = arith.mulf %54, %58 : vector<8x16xf32>
    %60 = vector.extract_strided_slice %14 {offsets = [0, 16], sizes = [16, 8], strides = [1, 1]} : vector<16x32xf32> to vector<16x8xf32>
    %cst_24 = arith.constant dense<0.000000e+00> : vector<8x8xf32>
    %61 = tpu.matmul %59, %60, %cst_24 {dimension_numbers = #tpu.dot_dimension_numbers<[1], [0], [0], [1], [0, 0, 1, 1], [], []>} : vector<8x16xf32>, vector<16x8xf32>, vector<8x8xf32> -> vector<8x8xf32>
    %c0_25 = arith.constant 0 : index
    %c16 = arith.constant 16 : index
    %62 = vector.load %arg22[%c0_25, %c16] : memref<8x32xf32, #tpu.memory_space<vmem>>, vector<8x8xf32>
    tpu.vector_store %arg22[%c0_25, %c16], %61 {strides = array<i32>} : memref<8x32xf32, #tpu.memory_space<vmem>>, vector<8x8xf32>,
    %63 = vector.extract_strided_slice %12 {offsets = [0, 24], sizes = [8, 8], strides = [1, 1]} : vector<8x32xf32> to vector<8x8xf32>
    %64 = vector.extract_strided_slice %13 {offsets = [0, 24], sizes = [16, 8], strides = [1, 1]} : vector<16x32xf32> to vector<16x8xf32>
    %cst_26 = arith.constant dense<0.000000e+00> : vector<8x16xf32>
    %65 = tpu.matmul %63, %64, %cst_26 {dimension_numbers = #tpu.dot_dimension_numbers<[1], [1], [0], [0], [0, 0, 1, 0], [], []>} : vector<8x8xf32>, vector<16x8xf32>, vector<8x16xf32> -> vector<8x16xf32>
    %cst_27 = arith.constant dense<0xFF800000> : vector<8xf32>
    %66 = vector.multi_reduction <maximumf>, %65, %cst_27 [1] : vector<8x16xf32> to vector<8xf32>
    %67 = vector.shape_cast %66 : vector<8xf32> to vector<8x1xf32>
    %68 = vector.broadcast %67 : vector<8x1xf32> to vector<8x16xf32>
    %69 = arith.subf %65, %68 : vector<8x16xf32>
    %70 = math.exp %69 : vector<8x16xf32>
    %cst_28 = arith.constant dense<0.000000e+00> : vector<8xf32>
    %71 = vector.multi_reduction <add>, %70, %cst_28 [1] : vector<8x16xf32> to vector<8xf32>
    %72 = vector.shape_cast %71 : vector<8xf32> to vector<8x1xf32>
    %73 = tpu.reciprocal %72 : vector<8x1xf32> -> vector<8x1xf32>
    %74 = vector.broadcast %73 : vector<8x1xf32> to vector<8x16xf32>
    %75 = arith.mulf %70, %74 : vector<8x16xf32>
    %76 = vector.extract_strided_slice %14 {offsets = [0, 24], sizes = [16, 8], strides = [1, 1]} : vector<16x32xf32> to vector<16x8xf32>
    %cst_29 = arith.constant dense<0.000000e+00> : vector<8x8xf32>
    %77 = tpu.matmul %75, %76, %cst_29 {dimension_numbers = #tpu.dot_dimension_numbers<[1], [0], [0], [1], [0, 0, 1, 1], [], []>} : vector<8x16xf32>, vector<16x8xf32>, vector<8x8xf32> -> vector<8x8xf32>
    %c0_30 = arith.constant 0 : index
    %c24 = arith.constant 24 : index
    %78 = vector.load %arg22[%c0_30, %c24] : memref<8x32xf32, #tpu.memory_space<vmem>>, vector<8x8xf32>
    tpu.vector_store %arg22[%c0_30, %c24], %77 {strides = array<i32>} : memref<8x32xf32, #tpu.memory_space<vmem>>, vector<8x8xf32>,
    %c0_31 = arith.constant 0 : index
    %c0_32 = arith.constant 0 : index
    %79 = vector.load %arg22[%c0_31, %c0_32] : memref<8x32xf32, #tpu.memory_space<vmem>>, vector<8x32xf32>
    %c0_33 = arith.constant 0 : index
    %c0_34 = arith.constant 0 : index
    %80 = vector.load %arg9[%c0_33, %c0_34] : memref<32x32xf32, #tpu.memory_space<vmem>>, vector<32x32xf32>
    %cst_35 = arith.constant dense<0.000000e+00> : vector<8x32xf32>
    %81 = tpu.matmul %79, %80, %cst_35 {dimension_numbers = #tpu.dot_dimension_numbers<[1], [0], [0], [1], [0, 0, 1, 1], [], []>} : vector<8x32xf32>, vector<32x32xf32>, vector<8x32xf32> -> vector<8x32xf32>
    %c0_36 = arith.constant 0 : index
    %c0_37 = arith.constant 0 : index
    %82 = vector.load %arg10[%c0_36, %c0_37] : memref<1x32xf32, #tpu.memory_space<vmem>>, vector<1x32xf32>
    %83 = vector.broadcast %82 : vector<1x32xf32> to vector<8x32xf32>
    %84 = arith.addf %81, %83 : vector<8x32xf32>
    %85 = arith.addf %7, %84 : vector<8x32xf32>
    %cst_38 = arith.constant dense<0.000000e+00> : vector<8xf32>
    %86 = vector.multi_reduction <add>, %85, %cst_38 [1] : vector<8x32xf32> to vector<8xf32>
    %87 = vector.shape_cast %86 : vector<8xf32> to vector<8x1xf32>
    %cst_39 = arith.constant 3.200000e+01 : f32
    %88 = vector.broadcast %cst_39 : f32 to vector<8x1xf32>
    %89 = arith.divf %87, %88 : vector<8x1xf32>
    %90 = vector.broadcast %89 : vector<8x1xf32> to vector<8x32xf32>
    %91 = arith.subf %85, %90 : vector<8x32xf32>
    %92 = arith.mulf %91, %91 : vector<8x32xf32>
    %cst_40 = arith.constant dense<0.000000e+00> : vector<8xf32>
    %93 = vector.multi_reduction <add>, %92, %cst_40 [1] : vector<8x32xf32> to vector<8xf32>
    %94 = vector.shape_cast %93 : vector<8xf32> to vector<8x1xf32>
    %cst_41 = arith.constant 3.200000e+01 : f32
    %95 = vector.broadcast %cst_41 : f32 to vector<8x1xf32>
    %96 = arith.divf %94, %95 : vector<8x1xf32>
    %97 = vector.broadcast %89 : vector<8x1xf32> to vector<8x32xf32>
    %98 = arith.subf %85, %97 : vector<8x32xf32>
    %cst_42 = arith.constant 9.99999974E-6 : f32
    %99 = vector.broadcast %cst_42 : f32 to vector<8x1xf32>
    %100 = arith.addf %96, %99 : vector<8x1xf32>
    %101 = math.rsqrt %100 : vector<8x1xf32>
    %102 = vector.broadcast %101 : vector<8x1xf32> to vector<8x32xf32>
    %103 = arith.mulf %98, %102 : vector<8x32xf32>
    %c0_43 = arith.constant 0 : index
    %c0_44 = arith.constant 0 : index
    %104 = vector.load %arg15[%c0_43, %c0_44] : memref<1x32xf32, #tpu.memory_space<vmem>>, vector<1x32xf32>
    %105 = vector.broadcast %104 : vector<1x32xf32> to vector<8x32xf32>
    %106 = arith.mulf %103, %105 : vector<8x32xf32>
    %c0_45 = arith.constant 0 : index
    %c0_46 = arith.constant 0 : index
    %107 = vector.load %arg16[%c0_45, %c0_46] : memref<1x32xf32, #tpu.memory_space<vmem>>, vector<1x32xf32>
    %108 = vector.broadcast %107 : vector<1x32xf32> to vector<8x32xf32>
    %109 = arith.addf %106, %108 : vector<8x32xf32>
    %c0_47 = arith.constant 0 : index
    %c0_48 = arith.constant 0 : index
    %110 = vector.load %arg11[%c0_47, %c0_48] : memref<32x64xf32, #tpu.memory_space<vmem>>, vector<32x64xf32>
    %cst_49 = arith.constant dense<0.000000e+00> : vector<8x64xf32>
    %111 = tpu.matmul %109, %110, %cst_49 {dimension_numbers = #tpu.dot_dimension_numbers<[1], [0], [0], [1], [0, 0, 1, 1], [], []>} : vector<8x32xf32>, vector<32x64xf32>, vector<8x64xf32> -> vector<8x64xf32>
    %c0_50 = arith.constant 0 : index
    %c0_51 = arith.constant 0 : index
    %112 = vector.load %arg12[%c0_50, %c0_51] : memref<1x64xf32, #tpu.memory_space<vmem>>, vector<1x64xf32>
    %113 = vector.broadcast %112 : vector<1x64xf32> to vector<8x64xf32>
    %114 = arith.addf %111, %113 : vector<8x64xf32>
    %cst_52 = arith.constant 0.000000e+00 : f32
    %115 = vector.broadcast %cst_52 : f32 to vector<8x64xf32>
    %116 = arith.maximumf %114, %115 : vector<8x64xf32>
    %c0_53 = arith.constant 0 : index
    %c0_54 = arith.constant 0 : index
    %117 = vector.load %arg13[%c0_53, %c0_54] : memref<64x32xf32, #tpu.memory_space<vmem>>, vector<64x32xf32>
    %cst_55 = arith.constant dense<0.000000e+00> : vector<8x32xf32>
    %118 = tpu.matmul %116, %117, %cst_55 {dimension_numbers = #tpu.dot_dimension_numbers<[1], [0], [0], [1], [0, 0, 1, 1], [], []>} : vector<8x64xf32>, vector<64x32xf32>, vector<8x32xf32> -> vector<8x32xf32>
    %c0_56 = arith.constant 0 : index
    %c0_57 = arith.constant 0 : index
    %119 = vector.load %arg14[%c0_56, %c0_57] : memref<1x32xf32, #tpu.memory_space<vmem>>, vector<1x32xf32>
    %120 = vector.broadcast %119 : vector<1x32xf32> to vector<8x32xf32>
    %121 = arith.addf %118, %120 : vector<8x32xf32>
    %122 = arith.addf %109, %121 : vector<8x32xf32>
    %cst_58 = arith.constant dense<0.000000e+00> : vector<8xf32>
    %123 = vector.multi_reduction <add>, %122, %cst_58 [1] : vector<8x32xf32> to vector<8xf32>
    %124 = vector.shape_cast %123 : vector<8xf32> to vector<8x1xf32>
    %cst_59 = arith.constant 3.200000e+01 : f32
    %125 = vector.broadcast %cst_59 : f32 to vector<8x1xf32>
    %126 = arith.divf %124, %125 : vector<8x1xf32>
    %127 = vector.broadcast %126 : vector<8x1xf32> to vector<8x32xf32>
    %128 = arith.subf %122, %127 : vector<8x32xf32>
    %129 = arith.mulf %128, %128 : vector<8x32xf32>
    %cst_60 = arith.constant dense<0.000000e+00> : vector<8xf32>
    %130 = vector.multi_reduction <add>, %129, %cst_60 [1] : vector<8x32xf32> to vector<8xf32>
    %131 = vector.shape_cast %130 : vector<8xf32> to vector<8x1xf32>
    %cst_61 = arith.constant 3.200000e+01 : f32
    %132 = vector.broadcast %cst_61 : f32 to vector<8x1xf32>
    %133 = arith.divf %131, %132 : vector<8x1xf32>
    %134 = vector.broadcast %126 : vector<8x1xf32> to vector<8x32xf32>
    %135 = arith.subf %122, %134 : vector<8x32xf32>
    %cst_62 = arith.constant 9.99999974E-6 : f32
    %136 = vector.broadcast %cst_62 : f32 to vector<8x1xf32>
    %137 = arith.addf %133, %136 : vector<8x1xf32>
    %138 = math.rsqrt %137 : vector<8x1xf32>
    %139 = vector.broadcast %138 : vector<8x1xf32> to vector<8x32xf32>
    %140 = arith.mulf %135, %139 : vector<8x32xf32>
    %c0_63 = arith.constant 0 : index
    %c0_64 = arith.constant 0 : index
    %141 = vector.load %arg17[%c0_63, %c0_64] : memref<1x32xf32, #tpu.memory_space<vmem>>, vector<1x32xf32>
    %142 = vector.broadcast %141 : vector<1x32xf32> to vector<8x32xf32>
    %143 = arith.mulf %140, %142 : vector<8x32xf32>
    %c0_65 = arith.constant 0 : index
    %c0_66 = arith.constant 0 : index
    %144 = vector.load %arg18[%c0_65, %c0_66] : memref<1x32xf32, #tpu.memory_space<vmem>>, vector<1x32xf32>
    %145 = vector.broadcast %144 : vector<1x32xf32> to vector<8x32xf32>
    %146 = arith.addf %143, %145 : vector<8x32xf32>
    %c0_67 = arith.constant 0 : index
    %c0_68 = arith.constant 0 : index
    %c0_69 = arith.constant 0 : index
    %147 = vector.load %arg19[%c0_67, %c0_68, %c0_69] : memref<1x8x32xf32, #tpu.memory_space<vmem>>, vector<1x8x32xf32>
    %148 = vector.shape_cast %147 : vector<1x8x32xf32> to vector<8x32xf32>
    %149 = vector.shape_cast %146 : vector<8x32xf32> to vector<1x8x32xf32>
    tpu.vector_store %arg19[%c0_67, %c0_68, %c0_69], %149 {strides = array<i32>} : memref<1x8x32xf32, #tpu.memory_space<vmem>>, vector<1x8x32xf32>,
    return
  }
  func.func @transform_0(%arg0: i32, %arg1: i32) -> (i32, i32, i32) {
    %c0_i32 = arith.constant 0 : i32
    %c0_i32_0 = arith.constant 0 : i32
    %c0_i32_1 = arith.constant 0 : i32
    return %arg0, %c0_i32, %c0_i32_0 : i32, i32, i32
  }
  func.func @transform_1(%arg0: i32, %arg1: i32) -> (i32, i32) {
    %c0_i32 = arith.constant 0 : i32
    %c0_i32_0 = arith.constant 0 : i32
    %c0_i32_1 = arith.constant 0 : i32
    return %c0_i32, %c0_i32_0 : i32, i32
  }
  func.func @transform_2(%arg0: i32, %arg1: i32) -> (i32, i32) {
    %c0_i32 = arith.constant 0 : i32
    %c0_i32_0 = arith.constant 0 : i32
    %c0_i32_1 = arith.constant 0 : i32
    return %c0_i32, %c0_i32_0 : i32, i32
  }
  func.func @transform_3(%arg0: i32, %arg1: i32) -> (i32, i32) {
    %c0_i32 = arith.constant 0 : i32
    %c0_i32_0 = arith.constant 0 : i32
    %c0_i32_1 = arith.constant 0 : i32
    return %c0_i32, %c0_i32_0 : i32, i32
  }
  func.func @transform_4(%arg0: i32, %arg1: i32) -> (i32, i32) {
    %c0_i32 = arith.constant 0 : i32
    %c0_i32_0 = arith.constant 0 : i32
    %c0_i32_1 = arith.constant 0 : i32
    return %c0_i32, %c0_i32_0 : i32, i32
  }
  func.func @transform_5(%arg0: i32, %arg1: i32) -> (i32, i32) {
    %c0_i32 = arith.constant 0 : i32
    %c0_i32_0 = arith.constant 0 : i32
    %c0_i32_1 = arith.constant 0 : i32
    return %c0_i32, %c0_i32_0 : i32, i32
  }
  func.func @transform_6(%arg0: i32, %arg1: i32) -> (i32, i32) {
    %c0_i32 = arith.constant 0 : i32
    %c0_i32_0 = arith.constant 0 : i32
    %c0_i32_1 = arith.constant 0 : i32
    return %c0_i32, %c0_i32_0 : i32, i32
  }
  func.func @transform_7(%arg0: i32, %arg1: i32) -> (i32, i32) {
    %c0_i32 = arith.constant 0 : i32
    %c0_i32_0 = arith.constant 0 : i32
    %c0_i32_1 = arith.constant 0 : i32
    return %c0_i32, %c0_i32_0 : i32, i32
  }
  func.func @transform_8(%arg0: i32, %arg1: i32) -> (i32, i32) {
    %c0_i32 = arith.constant 0 : i32
    %c0_i32_0 = arith.constant 0 : i32
    %c0_i32_1 = arith.constant 0 : i32
    return %c0_i32, %c0_i32_0 : i32, i32
  }
  func.func @transform_9(%arg0: i32, %arg1: i32) -> (i32, i32) {
    %c0_i32 = arith.constant 0 : i32
    %c0_i32_0 = arith.constant 0 : i32
    %c0_i32_1 = arith.constant 0 : i32
    return %c0_i32, %c0_i32_0 : i32, i32
  }
  func.func @transform_10(%arg0: i32, %arg1: i32) -> (i32, i32) {
    %c0_i32 = arith.constant 0 : i32
    %c0_i32_0 = arith.constant 0 : i32
    %c0_i32_1 = arith.constant 0 : i32
    return %c0_i32, %c0_i32_0 : i32, i32
  }
  func.func @transform_11(%arg0: i32, %arg1: i32) -> (i32, i32) {
    %c0_i32 = arith.constant 0 : i32
    %c0_i32_0 = arith.constant 0 : i32
    %c0_i32_1 = arith.constant 0 : i32
    return %c0_i32, %c0_i32_0 : i32, i32
  }
  func.func @transform_12(%arg0: i32, %arg1: i32) -> (i32, i32) {
    %c0_i32 = arith.constant 0 : i32
    %c0_i32_0 = arith.constant 0 : i32
    %c0_i32_1 = arith.constant 0 : i32
    return %c0_i32, %c0_i32_0 : i32, i32
  }
  func.func @transform_13(%arg0: i32, %arg1: i32) -> (i32, i32) {
    %c0_i32 = arith.constant 0 : i32
    %c0_i32_0 = arith.constant 0 : i32
    %c0_i32_1 = arith.constant 0 : i32
    return %c0_i32, %c0_i32_0 : i32, i32
  }
  func.func @transform_14(%arg0: i32, %arg1: i32) -> (i32, i32) {
    %c0_i32 = arith.constant 0 : i32
    %c0_i32_0 = arith.constant 0 : i32
    %c0_i32_1 = arith.constant 0 : i32
    return %c0_i32, %c0_i32_0 : i32, i32
  }
  func.func @transform_15(%arg0: i32, %arg1: i32) -> (i32, i32) {
    %c0_i32 = arith.constant 0 : i32
    %c0_i32_0 = arith.constant 0 : i32
    %c0_i32_1 = arith.constant 0 : i32
    return %c0_i32, %c0_i32_0 : i32, i32
  }
  func.func @transform_16(%arg0: i32, %arg1: i32) -> (i32, i32) {
    %c0_i32 = arith.constant 0 : i32
    %c0_i32_0 = arith.constant 0 : i32
    %c0_i32_1 = arith.constant 0 : i32
    return %c0_i32, %c0_i32_0 : i32, i32
  }
  func.func @transform_17(%arg0: i32, %arg1: i32) -> (i32, i32, i32) {
    %c0_i32 = arith.constant 0 : i32
    %c0_i32_0 = arith.constant 0 : i32
    return %arg0, %arg1, %c0_i32 : i32, i32, i32
  }
}

module attributes {stable_mosaic.version = 11 : i64} {
  func.func @_encoder_layer_kernel(%arg0: i32, %arg1: i32, %arg2: memref<1x16x32xf32, #tpu.memory_space<vmem>>, %arg3: memref<32x32xf32, #tpu.memory_space<vmem>>, %arg4: memref<1x32xf32, #tpu.memory_space<vmem>>, %arg5: memref<32x32xf32, #tpu.memory_space<vmem>>, %arg6: memref<1x32xf32, #tpu.memory_space<vmem>>, %arg7: memref<32x32xf32, #tpu.memory_space<vmem>>, %arg8: memref<1x32xf32, #tpu.memory_space<vmem>>, %arg9: memref<32x32xf32, #tpu.memory_space<vmem>>, %arg10: memref<1x32xf32, #tpu.memory_space<vmem>>, %arg11: memref<32x64xf32, #tpu.memory_space<vmem>>, %arg12: memref<1x64xf32, #tpu.memory_space<vmem>>, %arg13: memref<64x32xf32, #tpu.memory_space<vmem>>, %arg14: memref<1x32xf32, #tpu.memory_space<vmem>>, %arg15: memref<1x32xf32, #tpu.memory_space<vmem>>, %arg16: memref<1x32xf32, #tpu.memory_space<vmem>>, %arg17: memref<1x32xf32, #tpu.memory_space<vmem>>, %arg18: memref<1x32xf32, #tpu.memory_space<vmem>>, %arg19: memref<1x8x32xf32, #tpu.memory_space<vmem>>, %arg20: memref<16x32xf32, #tpu.memory_space<vmem>>, %arg21: memref<16x32xf32, #tpu.memory_space<vmem>>, %arg22: memref<8x32xf32, #tpu.memory_space<vmem>>) attributes {dimension_semantics = [#tpu.dimension_semantics<parallel>, #tpu.dimension_semantics<arbitrary>], iteration_bounds = array<i64: 2, 2>, scalar_prefetch = 0 : i64, scratch_operands = 3 : i64, tpu.core_type = #tpu.core_type<tc>, window_params = [{transform_indices = @transform_0, window_bounds = array<i64: 1, 16, 32>}, {pipeline_mode = #tpu.pipeline_mode<synchronous>, transform_indices = @transform_1, window_bounds = array<i64: 32, 32>}, {pipeline_mode = #tpu.pipeline_mode<synchronous>, transform_indices = @transform_2, window_bounds = array<i64: 1, 32>}, {pipeline_mode = #tpu.pipeline_mode<synchronous>, transform_indices = @transform_3, window_bounds = array<i64: 32, 32>}, {pipeline_mode = #tpu.pipeline_mode<synchronous>, transform_indices = @transform_4, window_bounds = array<i64: 1, 32>}, {pipeline_mode = #tpu.pipeline_mode<synchronous>, transform_indices = @transform_5, window_bounds = array<i64: 32, 32>}, {pipeline_mode = #tpu.pipeline_mode<synchronous>, transform_indices = @transform_6, window_bounds = array<i64: 1, 32>}, {pipeline_mode = #tpu.pipeline_mode<synchronous>, transform_indices = @transform_7, window_bounds = array<i64: 32, 32>}, {pipeline_mode = #tpu.pipeline_mode<synchronous>, transform_indices = @transform_8, window_bounds = array<i64: 1, 32>}, {pipeline_mode = #tpu.pipeline_mode<synchronous>, transform_indices = @transform_9, window_bounds = array<i64: 32, 64>}, {pipeline_mode = #tpu.pipeline_mode<synchronous>, transform_indices = @transform_10, window_bounds = array<i64: 1, 64>}, {pipeline_mode = #tpu.pipeline_mode<synchronous>, transform_indices = @transform_11, window_bounds = array<i64: 64, 32>}, {pipeline_mode = #tpu.pipeline_mode<synchronous>, transform_indices = @transform_12, window_bounds = array<i64: 1, 32>}, {pipeline_mode = #tpu.pipeline_mode<synchronous>, transform_indices = @transform_13, window_bounds = array<i64: 1, 32>}, {pipeline_mode = #tpu.pipeline_mode<synchronous>, transform_indices = @transform_14, window_bounds = array<i64: 1, 32>}, {pipeline_mode = #tpu.pipeline_mode<synchronous>, transform_indices = @transform_15, window_bounds = array<i64: 1, 32>}, {pipeline_mode = #tpu.pipeline_mode<synchronous>, transform_indices = @transform_16, window_bounds = array<i64: 1, 32>}, {transform_indices = @transform_17, window_bounds = array<i64: 1, 8, 32>}]} {
    %c0_i32 = arith.constant 0 : i32
    %0 = arith.cmpi eq, %arg1, %c0_i32 : i32
    %1 = arith.extui %0 : i1 to i32
    %c0_i32_0 = arith.constant 0 : i32
    %2 = arith.cmpi ne, %1, %c0_i32_0 : i32
    scf.if %2 {
      %c0_70 = arith.constant 0 : index
      %c0_71 = arith.constant 0 : index
      %c0_72 = arith.constant 0 : index
      %150 = vector.load %arg2[%c0_70, %c0_71, %c0_72] : memref<1x16x32xf32, #tpu.memory_space<vmem>>, vector<1x16x32xf32>
      %151 = vector.shape_cast %150 : vector<1x16x32xf32> to vector<16x32xf32>
      %c0_73 = arith.constant 0 : index
      %c0_74 = arith.constant 0 : index
      %152 = vector.load %arg5[%c0_73, %c0_74] : memref<32x32xf32, #tpu.memory_space<vmem>>, vector<32x32xf32>
      %cst_75 = arith.constant dense<0.000000e+00> : vector<16x32xf32>
      %153 = tpu.matmul %151, %152, %cst_75 {dimension_numbers = #tpu.dot_dimension_numbers<[1], [0], [0], [1], [0, 0, 1, 1], [], []>} : vector<16x32xf32>, vector<32x32xf32>, vector<16x32xf32> -> vector<16x32xf32>
      %c0_76 = arith.constant 0 : index
      %c0_77 = arith.constant 0 : index
      %154 = vector.load %arg6[%c0_76, %c0_77] : memref<1x32xf32, #tpu.memory_space<vmem>>, vector<1x32xf32>
      %155 = vector.broadcast %154 : vector<1x32xf32> to vector<16x32xf32>
      %156 = arith.addf %153, %155 : vector<16x32xf32>
      %c0_78 = arith.constant 0 : index
      %c0_79 = arith.constant 0 : index
      %157 = vector.load %arg7[%c0_78, %c0_79] : memref<32x32xf32, #tpu.memory_space<vmem>>, vector<32x32xf32>
      %cst_80 = arith.constant dense<0.000000e+00> : vector<16x32xf32>
      %158 = tpu.matmul %151, %157, %cst_80 {dimension_numbers = #tpu.dot_dimension_numbers<[1], [0], [0], [1], [0, 0, 1, 1], [], []>} : vector<16x32xf32>, vector<32x32xf32>, vector<16x32xf32> -> vector<16x32xf32>
      %c0_81 = arith.constant 0 : index
      %c0_82 = arith.constant 0 : index
      %159 = vector.load %arg8[%c0_81, %c0_82] : memref<1x32xf32, #tpu.memory_space<vmem>>, vector<1x32xf32>
      %160 = vector.broadcast %159 : vector<1x32xf32> to vector<16x32xf32>
      %161 = arith.addf %158, %160 : vector<16x32xf32>
      %c0_83 = arith.constant 0 : index
      %c0_84 = arith.constant 0 : index
      %162 = vector.load %arg20[%c0_83, %c0_84] : memref<16x32xf32, #tpu.memory_space<vmem>>, vector<16x32xf32>
      tpu.vector_store %arg20[%c0_83, %c0_84], %156 {strides = array<i32>} : memref<16x32xf32, #tpu.memory_space<vmem>>, vector<16x32xf32>,
      %c0_85 = arith.constant 0 : index
      %c0_86 = arith.constant 0 : index
      %163 = vector.load %arg21[%c0_85, %c0_86] : memref<16x32xf32, #tpu.memory_space<vmem>>, vector<16x32xf32>
      tpu.vector_store %arg21[%c0_85, %c0_86], %161 {strides = array<i32>} : memref<16x32xf32, #tpu.memory_space<vmem>>, vector<16x32xf32>,
    } else {
    }
    %c8_i32 = arith.constant 8 : i32
    %3 = arith.muli %arg1, %c8_i32 : i32
    %4 = tpu.assume_multiple %3, 8 : i32
    %c0 = arith.constant 0 : index
    %5 = arith.index_cast %4 : i32 to index
    %c0_1 = arith.constant 0 : index
    %6 = vector.load %arg2[%c0, %5, %c0_1] : memref<1x16x32xf32, #tpu.memory_space<vmem>>, vector<1x8x32xf32>
    %7 = vector.shape_cast %6 : vector<1x8x32xf32> to vector<8x32xf32>
    %c0_2 = arith.constant 0 : index
    %c0_3 = arith.constant 0 : index
    %8 = vector.load %arg3[%c0_2, %c0_3] : memref<32x32xf32, #tpu.memory_space<vmem>>, vector<32x32xf32>
    %cst = arith.constant dense<0.000000e+00> : vector<8x32xf32>
    %9 = tpu.matmul %7, %8, %cst {dimension_numbers = #tpu.dot_dimension_numbers<[1], [0], [0], [1], [0, 0, 1, 1], [], []>} : vector<8x32xf32>, vector<32x32xf32>, vector<8x32xf32> -> vector<8x32xf32>
    %c0_4 = arith.constant 0 : index
    %c0_5 = arith.constant 0 : index
    %10 = vector.load %arg4[%c0_4, %c0_5] : memref<1x32xf32, #tpu.memory_space<vmem>>, vector<1x32xf32>
    %11 = vector.broadcast %10 : vector<1x32xf32> to vector<8x32xf32>
    %12 = arith.addf %9, %11 : vector<8x32xf32>
    %c0_6 = arith.constant 0 : index
    %c0_7 = arith.constant 0 : index
    %13 = vector.load %arg20[%c0_6, %c0_7] : memref<16x32xf32, #tpu.memory_space<vmem>>, vector<16x32xf32>
    %c0_8 = arith.constant 0 : index
    %c0_9 = arith.constant 0 : index
    %14 = vector.load %arg21[%c0_8, %c0_9] : memref<16x32xf32, #tpu.memory_space<vmem>>, vector<16x32xf32>
    %15 = vector.extract_strided_slice %12 {offsets = [0, 0], sizes = [8, 8], strides = [1, 1]} : vector<8x32xf32> to vector<8x8xf32>
    %16 = vector.extract_strided_slice %13 {offsets = [0, 0], sizes = [16, 8], strides = [1, 1]} : vector<16x32xf32> to vector<16x8xf32>
    %cst_10 = arith.constant dense<0.000000e+00> : vector<8x16xf32>
    %17 = tpu.matmul %15, %16, %cst_10 {dimension_numbers = #tpu.dot_dimension_numbers<[1], [1], [0], [0], [0, 0, 1, 0], [], []>} : vector<8x8xf32>, vector<16x8xf32>, vector<8x16xf32> -> vector<8x16xf32>
    %cst_11 = arith.constant dense<0xFF800000> : vector<8xf32>
    %18 = vector.multi_reduction <maximumf>, %17, %cst_11 [1] : vector<8x16xf32> to vector<8xf32>
    %19 = vector.shape_cast %18 : vector<8xf32> to vector<8x1xf32>
    %20 = vector.broadcast %19 : vector<8x1xf32> to vector<8x16xf32>
    %21 = arith.subf %17, %20 : vector<8x16xf32>
    %22 = math.exp %21 : vector<8x16xf32>
    %cst_12 = arith.constant dense<0.000000e+00> : vector<8xf32>
    %23 = vector.multi_reduction <add>, %22, %cst_12 [1] : vector<8x16xf32> to vector<8xf32>
    %24 = vector.shape_cast %23 : vector<8xf32> to vector<8x1xf32>
    %25 = tpu.reciprocal %24 : vector<8x1xf32> -> vector<8x1xf32>
    %26 = vector.broadcast %25 : vector<8x1xf32> to vector<8x16xf32>
    %27 = arith.mulf %22, %26 : vector<8x16xf32>
    %28 = vector.extract_strided_slice %14 {offsets = [0, 0], sizes = [16, 8], strides = [1, 1]} : vector<16x32xf32> to vector<16x8xf32>
    %cst_13 = arith.constant dense<0.000000e+00> : vector<8x8xf32>
    %29 = tpu.matmul %27, %28, %cst_13 {dimension_numbers = #tpu.dot_dimension_numbers<[1], [0], [0], [1], [0, 0, 1, 1], [], []>} : vector<8x16xf32>, vector<16x8xf32>, vector<8x8xf32> -> vector<8x8xf32>
    %c0_14 = arith.constant 0 : index
    %c0_15 = arith.constant 0 : index
    %30 = vector.load %arg22[%c0_14, %c0_15] : memref<8x32xf32, #tpu.memory_space<vmem>>, vector<8x8xf32>
    tpu.vector_store %arg22[%c0_14, %c0_15], %29 {strides = array<i32>} : memref<8x32xf32, #tpu.memory_space<vmem>>, vector<8x8xf32>,
    %31 = vector.extract_strided_slice %12 {offsets = [0, 8], sizes = [8, 8], strides = [1, 1]} : vector<8x32xf32> to vector<8x8xf32>
    %32 = vector.extract_strided_slice %13 {offsets = [0, 8], sizes = [16, 8], strides = [1, 1]} : vector<16x32xf32> to vector<16x8xf32>
    %cst_16 = arith.constant dense<0.000000e+00> : vector<8x16xf32>
    %33 = tpu.matmul %31, %32, %cst_16 {dimension_numbers = #tpu.dot_dimension_numbers<[1], [1], [0], [0], [0, 0, 1, 0], [], []>} : vector<8x8xf32>, vector<16x8xf32>, vector<8x16xf32> -> vector<8x16xf32>
    %cst_17 = arith.constant dense<0xFF800000> : vector<8xf32>
    %34 = vector.multi_reduction <maximumf>, %33, %cst_17 [1] : vector<8x16xf32> to vector<8xf32>
    %35 = vector.shape_cast %34 : vector<8xf32> to vector<8x1xf32>
    %36 = vector.broadcast %35 : vector<8x1xf32> to vector<8x16xf32>
    %37 = arith.subf %33, %36 : vector<8x16xf32>
    %38 = math.exp %37 : vector<8x16xf32>
    %cst_18 = arith.constant dense<0.000000e+00> : vector<8xf32>
    %39 = vector.multi_reduction <add>, %38, %cst_18 [1] : vector<8x16xf32> to vector<8xf32>
    %40 = vector.shape_cast %39 : vector<8xf32> to vector<8x1xf32>
    %41 = tpu.reciprocal %40 : vector<8x1xf32> -> vector<8x1xf32>
    %42 = vector.broadcast %41 : vector<8x1xf32> to vector<8x16xf32>
    %43 = arith.mulf %38, %42 : vector<8x16xf32>
    %44 = vector.extract_strided_slice %14 {offsets = [0, 8], sizes = [16, 8], strides = [1, 1]} : vector<16x32xf32> to vector<16x8xf32>
    %cst_19 = arith.constant dense<0.000000e+00> : vector<8x8xf32>
    %45 = tpu.matmul %43, %44, %cst_19 {dimension_numbers = #tpu.dot_dimension_numbers<[1], [0], [0], [1], [0, 0, 1, 1], [], []>} : vector<8x16xf32>, vector<16x8xf32>, vector<8x8xf32> -> vector<8x8xf32>
    %c0_20 = arith.constant 0 : index
    %c8 = arith.constant 8 : index
    %46 = vector.load %arg22[%c0_20, %c8] : memref<8x32xf32, #tpu.memory_space<vmem>>, vector<8x8xf32>
    tpu.vector_store %arg22[%c0_20, %c8], %45 {strides = array<i32>} : memref<8x32xf32, #tpu.memory_space<vmem>>, vector<8x8xf32>,
    %47 = vector.extract_strided_slice %12 {offsets = [0, 16], sizes = [8, 8], strides = [1, 1]} : vector<8x32xf32> to vector<8x8xf32>
    %48 = vector.extract_strided_slice %13 {offsets = [0, 16], sizes = [16, 8], strides = [1, 1]} : vector<16x32xf32> to vector<16x8xf32>
    %cst_21 = arith.constant dense<0.000000e+00> : vector<8x16xf32>
    %49 = tpu.matmul %47, %48, %cst_21 {dimension_numbers = #tpu.dot_dimension_numbers<[1], [1], [0], [0], [0, 0, 1, 0], [], []>} : vector<8x8xf32>, vector<16x8xf32>, vector<8x16xf32> -> vector<8x16xf32>
    %cst_22 = arith.constant dense<0xFF800000> : vector<8xf32>
    %50 = vector.multi_reduction <maximumf>, %49, %cst_22 [1] : vector<8x16xf32> to vector<8xf32>
    %51 = vector.shape_cast %50 : vector<8xf32> to vector<8x1xf32>
    %52 = vector.broadcast %51 : vector<8x1xf32> to vector<8x16xf32>
    %53 = arith.subf %49, %52 : vector<8x16xf32>
    %54 = math.exp %53 : vector<8x16xf32>
    %cst_23 = arith.constant dense<0.000000e+00> : vector<8xf32>
    %55 = vector.multi_reduction <add>, %54, %cst_23 [1] : vector<8x16xf32> to vector<8xf32>
    %56 = vector.shape_cast %55 : vector<8xf32> to vector<8x1xf32>
    %57 = tpu.reciprocal %56 : vector<8x1xf32> -> vector<8x1xf32>
    %58 = vector.broadcast %57 : vector<8x1xf32> to vector<8x16xf32>
    %59 = arith.mulf %54, %58 : vector<8x16xf32>
    %60 = vector.extract_strided_slice %14 {offsets = [0, 16], sizes = [16, 8], strides = [1, 1]} : vector<16x32xf32> to vector<16x8xf32>
    %cst_24 = arith.constant dense<0.000000e+00> : vector<8x8xf32>
    %61 = tpu.matmul %59, %60, %cst_24 {dimension_numbers = #tpu.dot_dimension_numbers<[1], [0], [0], [1], [0, 0, 1, 1], [], []>} : vector<8x16xf32>, vector<16x8xf32>, vector<8x8xf32> -> vector<8x8xf32>
    %c0_25 = arith.constant 0 : index
    %c16 = arith.constant 16 : index
    %62 = vector.load %arg22[%c0_25, %c16] : memref<8x32xf32, #tpu.memory_space<vmem>>, vector<8x8xf32>
    tpu.vector_store %arg22[%c0_25, %c16], %61 {strides = array<i32>} : memref<8x32xf32, #tpu.memory_space<vmem>>, vector<8x8xf32>,
    %63 = vector.extract_strided_slice %12 {offsets = [0, 24], sizes = [8, 8], strides = [1, 1]} : vector<8x32xf32> to vector<8x8xf32>
    %64 = vector.extract_strided_slice %13 {offsets = [0, 24], sizes = [16, 8], strides = [1, 1]} : vector<16x32xf32> to vector<16x8xf32>
    %cst_26 = arith.constant dense<0.000000e+00> : vector<8x16xf32>
    %65 = tpu.matmul %63, %64, %cst_26 {dimension_numbers = #tpu.dot_dimension_numbers<[1], [1], [0], [0], [0, 0, 1, 0], [], []>} : vector<8x8xf32>, vector<16x8xf32>, vector<8x16xf32> -> vector<8x16xf32>
    %cst_27 = arith.constant dense<0xFF800000> : vector<8xf32>
    %66 = vector.multi_reduction <maximumf>, %65, %cst_27 [1] : vector<8x16xf32> to vector<8xf32>
    %67 = vector.shape_cast %66 : vector<8xf32> to vector<8x1xf32>
    %68 = vector.broadcast %67 : vector<8x1xf32> to vector<8x16xf32>
    %69 = arith.subf %65, %68 : vector<8x16xf32>
    %70 = math.exp %69 : vector<8x16xf32>
    %cst_28 = arith.constant dense<0.000000e+00> : vector<8xf32>
    %71 = vector.multi_reduction <add>, %70, %cst_28 [1] : vector<8x16xf32> to vector<8xf32>
    %72 = vector.shape_cast %71 : vector<8xf32> to vector<8x1xf32>
    %73 = tpu.reciprocal %72 : vector<8x1xf32> -> vector<8x1xf32>
    %74 = vector.broadcast %73 : vector<8x1xf32> to vector<8x16xf32>
    %75 = arith.mulf %70, %74 : vector<8x16xf32>
    %76 = vector.extract_strided_slice %14 {offsets = [0, 24], sizes = [16, 8], strides = [1, 1]} : vector<16x32xf32> to vector<16x8xf32>
    %cst_29 = arith.constant dense<0.000000e+00> : vector<8x8xf32>
    %77 = tpu.matmul %75, %76, %cst_29 {dimension_numbers = #tpu.dot_dimension_numbers<[1], [0], [0], [1], [0, 0, 1, 1], [], []>} : vector<8x16xf32>, vector<16x8xf32>, vector<8x8xf32> -> vector<8x8xf32>
    %c0_30 = arith.constant 0 : index
    %c24 = arith.constant 24 : index
    %78 = vector.load %arg22[%c0_30, %c24] : memref<8x32xf32, #tpu.memory_space<vmem>>, vector<8x8xf32>
    tpu.vector_store %arg22[%c0_30, %c24], %77 {strides = array<i32>} : memref<8x32xf32, #tpu.memory_space<vmem>>, vector<8x8xf32>,
    %c0_31 = arith.constant 0 : index
    %c0_32 = arith.constant 0 : index
    %79 = vector.load %arg22[%c0_31, %c0_32] : memref<8x32xf32, #tpu.memory_space<vmem>>, vector<8x32xf32>
    %c0_33 = arith.constant 0 : index
    %c0_34 = arith.constant 0 : index
    %80 = vector.load %arg9[%c0_33, %c0_34] : memref<32x32xf32, #tpu.memory_space<vmem>>, vector<32x32xf32>
    %cst_35 = arith.constant dense<0.000000e+00> : vector<8x32xf32>
    %81 = tpu.matmul %79, %80, %cst_35 {dimension_numbers = #tpu.dot_dimension_numbers<[1], [0], [0], [1], [0, 0, 1, 1], [], []>} : vector<8x32xf32>, vector<32x32xf32>, vector<8x32xf32> -> vector<8x32xf32>
    %c0_36 = arith.constant 0 : index
    %c0_37 = arith.constant 0 : index
    %82 = vector.load %arg10[%c0_36, %c0_37] : memref<1x32xf32, #tpu.memory_space<vmem>>, vector<1x32xf32>
    %83 = vector.broadcast %82 : vector<1x32xf32> to vector<8x32xf32>
    %84 = arith.addf %81, %83 : vector<8x32xf32>
    %85 = arith.addf %7, %84 : vector<8x32xf32>
    %cst_38 = arith.constant dense<0.000000e+00> : vector<8xf32>
    %86 = vector.multi_reduction <add>, %85, %cst_38 [1] : vector<8x32xf32> to vector<8xf32>
    %87 = vector.shape_cast %86 : vector<8xf32> to vector<8x1xf32>
    %cst_39 = arith.constant 3.200000e+01 : f32
    %88 = vector.broadcast %cst_39 : f32 to vector<8x1xf32>
    %89 = arith.divf %87, %88 : vector<8x1xf32>
    %90 = vector.broadcast %89 : vector<8x1xf32> to vector<8x32xf32>
    %91 = arith.subf %85, %90 : vector<8x32xf32>
    %92 = arith.mulf %91, %91 : vector<8x32xf32>
    %cst_40 = arith.constant dense<0.000000e+00> : vector<8xf32>
    %93 = vector.multi_reduction <add>, %92, %cst_40 [1] : vector<8x32xf32> to vector<8xf32>
    %94 = vector.shape_cast %93 : vector<8xf32> to vector<8x1xf32>
    %cst_41 = arith.constant 3.200000e+01 : f32
    %95 = vector.broadcast %cst_41 : f32 to vector<8x1xf32>
    %96 = arith.divf %94, %95 : vector<8x1xf32>
    %97 = vector.broadcast %89 : vector<8x1xf32> to vector<8x32xf32>
    %98 = arith.subf %85, %97 : vector<8x32xf32>
    %cst_42 = arith.constant 9.99999974E-6 : f32
    %99 = vector.broadcast %cst_42 : f32 to vector<8x1xf32>
    %100 = arith.addf %96, %99 : vector<8x1xf32>
    %101 = math.rsqrt %100 : vector<8x1xf32>
    %102 = vector.broadcast %101 : vector<8x1xf32> to vector<8x32xf32>
    %103 = arith.mulf %98, %102 : vector<8x32xf32>
    %c0_43 = arith.constant 0 : index
    %c0_44 = arith.constant 0 : index
    %104 = vector.load %arg15[%c0_43, %c0_44] : memref<1x32xf32, #tpu.memory_space<vmem>>, vector<1x32xf32>
    %105 = vector.broadcast %104 : vector<1x32xf32> to vector<8x32xf32>
    %106 = arith.mulf %103, %105 : vector<8x32xf32>
    %c0_45 = arith.constant 0 : index
    %c0_46 = arith.constant 0 : index
    %107 = vector.load %arg16[%c0_45, %c0_46] : memref<1x32xf32, #tpu.memory_space<vmem>>, vector<1x32xf32>
    %108 = vector.broadcast %107 : vector<1x32xf32> to vector<8x32xf32>
    %109 = arith.addf %106, %108 : vector<8x32xf32>
    %c0_47 = arith.constant 0 : index
    %c0_48 = arith.constant 0 : index
    %110 = vector.load %arg11[%c0_47, %c0_48] : memref<32x64xf32, #tpu.memory_space<vmem>>, vector<32x64xf32>
    %cst_49 = arith.constant dense<0.000000e+00> : vector<8x64xf32>
    %111 = tpu.matmul %109, %110, %cst_49 {dimension_numbers = #tpu.dot_dimension_numbers<[1], [0], [0], [1], [0, 0, 1, 1], [], []>} : vector<8x32xf32>, vector<32x64xf32>, vector<8x64xf32> -> vector<8x64xf32>
    %c0_50 = arith.constant 0 : index
    %c0_51 = arith.constant 0 : index
    %112 = vector.load %arg12[%c0_50, %c0_51] : memref<1x64xf32, #tpu.memory_space<vmem>>, vector<1x64xf32>
    %113 = vector.broadcast %112 : vector<1x64xf32> to vector<8x64xf32>
    %114 = arith.addf %111, %113 : vector<8x64xf32>
    %cst_52 = arith.constant 0.000000e+00 : f32
    %115 = vector.broadcast %cst_52 : f32 to vector<8x64xf32>
    %116 = arith.maximumf %114, %115 : vector<8x64xf32>
    %c0_53 = arith.constant 0 : index
    %c0_54 = arith.constant 0 : index
    %117 = vector.load %arg13[%c0_53, %c0_54] : memref<64x32xf32, #tpu.memory_space<vmem>>, vector<64x32xf32>
    %cst_55 = arith.constant dense<0.000000e+00> : vector<8x32xf32>
    %118 = tpu.matmul %116, %117, %cst_55 {dimension_numbers = #tpu.dot_dimension_numbers<[1], [0], [0], [1], [0, 0, 1, 1], [], []>} : vector<8x64xf32>, vector<64x32xf32>, vector<8x32xf32> -> vector<8x32xf32>
    %c0_56 = arith.constant 0 : index
    %c0_57 = arith.constant 0 : index
    %119 = vector.load %arg14[%c0_56, %c0_57] : memref<1x32xf32, #tpu.memory_space<vmem>>, vector<1x32xf32>
    %120 = vector.broadcast %119 : vector<1x32xf32> to vector<8x32xf32>
    %121 = arith.addf %118, %120 : vector<8x32xf32>
    %122 = arith.addf %109, %121 : vector<8x32xf32>
    %cst_58 = arith.constant dense<0.000000e+00> : vector<8xf32>
    %123 = vector.multi_reduction <add>, %122, %cst_58 [1] : vector<8x32xf32> to vector<8xf32>
    %124 = vector.shape_cast %123 : vector<8xf32> to vector<8x1xf32>
    %cst_59 = arith.constant 3.200000e+01 : f32
    %125 = vector.broadcast %cst_59 : f32 to vector<8x1xf32>
    %126 = arith.divf %124, %125 : vector<8x1xf32>
    %127 = vector.broadcast %126 : vector<8x1xf32> to vector<8x32xf32>
    %128 = arith.subf %122, %127 : vector<8x32xf32>
    %129 = arith.mulf %128, %128 : vector<8x32xf32>
    %cst_60 = arith.constant dense<0.000000e+00> : vector<8xf32>
    %130 = vector.multi_reduction <add>, %129, %cst_60 [1] : vector<8x32xf32> to vector<8xf32>
    %131 = vector.shape_cast %130 : vector<8xf32> to vector<8x1xf32>
    %cst_61 = arith.constant 3.200000e+01 : f32
    %132 = vector.broadcast %cst_61 : f32 to vector<8x1xf32>
    %133 = arith.divf %131, %132 : vector<8x1xf32>
    %134 = vector.broadcast %126 : vector<8x1xf32> to vector<8x32xf32>
    %135 = arith.subf %122, %134 : vector<8x32xf32>
    %cst_62 = arith.constant 9.99999974E-6 : f32
    %136 = vector.broadcast %cst_62 : f32 to vector<8x1xf32>
    %137 = arith.addf %133, %136 : vector<8x1xf32>
    %138 = math.rsqrt %137 : vector<8x1xf32>
    %139 = vector.broadcast %138 : vector<8x1xf32> to vector<8x32xf32>
    %140 = arith.mulf %135, %139 : vector<8x32xf32>
    %c0_63 = arith.constant 0 : index
    %c0_64 = arith.constant 0 : index
    %141 = vector.load %arg17[%c0_63, %c0_64] : memref<1x32xf32, #tpu.memory_space<vmem>>, vector<1x32xf32>
    %142 = vector.broadcast %141 : vector<1x32xf32> to vector<8x32xf32>
    %143 = arith.mulf %140, %142 : vector<8x32xf32>
    %c0_65 = arith.constant 0 : index
    %c0_66 = arith.constant 0 : index
    %144 = vector.load %arg18[%c0_65, %c0_66] : memref<1x32xf32, #tpu.memory_space<vmem>>, vector<1x32xf32>
    %145 = vector.broadcast %144 : vector<1x32xf32> to vector<8x32xf32>
    %146 = arith.addf %143, %145 : vector<8x32xf32>
    %c0_67 = arith.constant 0 : index
    %c0_68 = arith.constant 0 : index
    %c0_69 = arith.constant 0 : index
    %147 = vector.load %arg19[%c0_67, %c0_68, %c0_69] : memref<1x8x32xf32, #tpu.memory_space<vmem>>, vector<1x8x32xf32>
    %148 = vector.shape_cast %147 : vector<1x8x32xf32> to vector<8x32xf32>
    %149 = vector.shape_cast %146 : vector<8x32xf32> to vector<1x8x32xf32>
    tpu.vector_store %arg19[%c0_67, %c0_68, %c0_69], %149 {strides = array<i32>} : memref<1x8x32xf32, #tpu.memory_space<vmem>>, vector<1x8x32xf32>,
    return
  }
  func.func @transform_0(%arg0: i32, %arg1: i32) -> (i32, i32, i32) {
    %c0_i32 = arith.constant 0 : i32
    %c0_i32_0 = arith.constant 0 : i32
    %c0_i32_1 = arith.constant 0 : i32
    return %arg0, %c0_i32, %c0_i32_0 : i32, i32, i32
  }
  func.func @transform_1(%arg0: i32, %arg1: i32) -> (i32, i32) {
    %c0_i32 = arith.constant 0 : i32
    %c0_i32_0 = arith.constant 0 : i32
    %c0_i32_1 = arith.constant 0 : i32
    return %c0_i32, %c0_i32_0 : i32, i32
  }
  func.func @transform_2(%arg0: i32, %arg1: i32) -> (i32, i32) {
    %c0_i32 = arith.constant 0 : i32
    %c0_i32_0 = arith.constant 0 : i32
    %c0_i32_1 = arith.constant 0 : i32
    return %c0_i32, %c0_i32_0 : i32, i32
  }
  func.func @transform_3(%arg0: i32, %arg1: i32) -> (i32, i32) {
    %c0_i32 = arith.constant 0 : i32
    %c0_i32_0 = arith.constant 0 : i32
    %c0_i32_1 = arith.constant 0 : i32
    return %c0_i32, %c0_i32_0 : i32, i32
  }
  func.func @transform_4(%arg0: i32, %arg1: i32) -> (i32, i32) {
    %c0_i32 = arith.constant 0 : i32
    %c0_i32_0 = arith.constant 0 : i32
    %c0_i32_1 = arith.constant 0 : i32
    return %c0_i32, %c0_i32_0 : i32, i32
  }
  func.func @transform_5(%arg0: i32, %arg1: i32) -> (i32, i32) {
    %c0_i32 = arith.constant 0 : i32
    %c0_i32_0 = arith.constant 0 : i32
    %c0_i32_1 = arith.constant 0 : i32
    return %c0_i32, %c0_i32_0 : i32, i32
  }
  func.func @transform_6(%arg0: i32, %arg1: i32) -> (i32, i32) {
    %c0_i32 = arith.constant 0 : i32
    %c0_i32_0 = arith.constant 0 : i32
    %c0_i32_1 = arith.constant 0 : i32
    return %c0_i32, %c0_i32_0 : i32, i32
  }
  func.func @transform_7(%arg0: i32, %arg1: i32) -> (i32, i32) {
    %c0_i32 = arith.constant 0 : i32
    %c0_i32_0 = arith.constant 0 : i32
    %c0_i32_1 = arith.constant 0 : i32
    return %c0_i32, %c0_i32_0 : i32, i32
  }
  func.func @transform_8(%arg0: i32, %arg1: i32) -> (i32, i32) {
    %c0_i32 = arith.constant 0 : i32
    %c0_i32_0 = arith.constant 0 : i32
    %c0_i32_1 = arith.constant 0 : i32
    return %c0_i32, %c0_i32_0 : i32, i32
  }
  func.func @transform_9(%arg0: i32, %arg1: i32) -> (i32, i32) {
    %c0_i32 = arith.constant 0 : i32
    %c0_i32_0 = arith.constant 0 : i32
    %c0_i32_1 = arith.constant 0 : i32
    return %c0_i32, %c0_i32_0 : i32, i32
  }
  func.func @transform_10(%arg0: i32, %arg1: i32) -> (i32, i32) {
    %c0_i32 = arith.constant 0 : i32
    %c0_i32_0 = arith.constant 0 : i32
    %c0_i32_1 = arith.constant 0 : i32
    return %c0_i32, %c0_i32_0 : i32, i32
  }
  func.func @transform_11(%arg0: i32, %arg1: i32) -> (i32, i32) {
    %c0_i32 = arith.constant 0 : i32
    %c0_i32_0 = arith.constant 0 : i32
    %c0_i32_1 = arith.constant 0 : i32
    return %c0_i32, %c0_i32_0 : i32, i32
  }
  func.func @transform_12(%arg0: i32, %arg1: i32) -> (i32, i32) {
    %c0_i32 = arith.constant 0 : i32
    %c0_i32_0 = arith.constant 0 : i32
    %c0_i32_1 = arith.constant 0 : i32
    return %c0_i32, %c0_i32_0 : i32, i32
  }
  func.func @transform_13(%arg0: i32, %arg1: i32) -> (i32, i32) {
    %c0_i32 = arith.constant 0 : i32
    %c0_i32_0 = arith.constant 0 : i32
    %c0_i32_1 = arith.constant 0 : i32
    return %c0_i32, %c0_i32_0 : i32, i32
  }
  func.func @transform_14(%arg0: i32, %arg1: i32) -> (i32, i32) {
    %c0_i32 = arith.constant 0 : i32
    %c0_i32_0 = arith.constant 0 : i32
    %c0_i32_1 = arith.constant 0 : i32
    return %c0_i32, %c0_i32_0 : i32, i32
  }
  func.func @transform_15(%arg0: i32, %arg1: i32) -> (i32, i32) {
    %c0_i32 = arith.constant 0 : i32
    %c0_i32_0 = arith.constant 0 : i32
    %c0_i32_1 = arith.constant 0 : i32
    return %c0_i32, %c0_i32_0 : i32, i32
  }
  func.func @transform_16(%arg0: i32, %arg1: i32) -> (i32, i32) {
    %c0_i32 = arith.constant 0 : i32
    %c0_i32_0 = arith.constant 0 : i32
    %c0_i32_1 = arith.constant 0 : i32
    return %c0_i32, %c0_i32_0 : i32, i32
  }
  func.func @transform_17(%arg0: i32, %arg1: i32) -> (i32, i32, i32) {
    %c0_i32 = arith.constant 0 : i32
    %c0_i32_0 = arith.constant 0 : i32
    return %arg0, %arg1, %c0_i32 : i32, i32, i32
  }
}

</mosaic_0001>

<llo_original>
// kernel: tpu_custom_call.1
$region0: #{tpu_custom_call.1}
  #allocation0 [shape = 'u32[]', space=smem, size = 0x4, offset = 0x4, fixed_abs, tag = 'smem constant byte address 0x4 - core index']
  #allocation1 [shape = 'u32[144,128]{1,0:T(1,128)}', space=vmem, size = 0x12000, scoped, tag = 'internal scratch']
  #allocation2 [shape = 'f32[16,32]{1,0:T(8,128)}', space=vmem, size = 0x2000, scoped, tag = 'scratch operand']
  #allocation3 [shape = 'f32[16,32]{1,0:T(8,128)}', space=vmem, size = 0x2000, scoped, tag = 'scratch operand']
  #allocation4 [shape = 'f32[8,32]{1,0:T(8,128)}', space=vmem, size = 0x1000, scoped, tag = 'scratch operand']
  %s0 = inlined_call_operand.vmem [shape: f32[2,16,32], index: 0, kind: input, shape index: {}]
  %s1 = inlined_call_operand.vmem [shape: f32[32,32], index: 1, kind: input, shape index: {}]
  %s2 = inlined_call_operand.vmem [shape: f32[1,32], index: 2, kind: input, shape index: {}]
  %s3 = inlined_call_operand.vmem [shape: f32[32,32], index: 3, kind: input, shape index: {}]
  %s4 = inlined_call_operand.vmem [shape: f32[1,32], index: 4, kind: input, shape index: {}]
  %s5 = inlined_call_operand.hbm [shape: f32[32,32], index: 5, kind: input, shape index: {}]
  %s6 = inlined_call_operand.vmem [shape: f32[1,32], index: 6, kind: input, shape index: {}]
  %s7 = inlined_call_operand.hbm [shape: f32[32,32], index: 7, kind: input, shape index: {}]
  %s8 = inlined_call_operand.vmem [shape: f32[1,32], index: 8, kind: input, shape index: {}]
  %s9 = inlined_call_operand.hbm [shape: f32[32,64], index: 9, kind: input, shape index: {}]
  %s10 = inlined_call_operand.vmem [shape: f32[1,64], index: 10, kind: input, shape index: {}]
  %s11 = inlined_call_operand.vmem [shape: f32[64,32], index: 11, kind: input, shape index: {}]
  %s12 = inlined_call_operand.vmem [shape: f32[1,32], index: 12, kind: input, shape index: {}]
  %s13 = inlined_call_operand.vmem [shape: f32[1,32], index: 13, kind: input, shape index: {}]
  %s14 = inlined_call_operand.vmem [shape: f32[1,32], index: 14, kind: input, shape index: {}]
  %s15 = inlined_call_operand.vmem [shape: f32[1,32], index: 15, kind: input, shape index: {}]
  %s16 = inlined_call_operand.vmem [shape: f32[1,32], index: 16, kind: input, shape index: {}]
  %s17 = inlined_call_operand.hbm [shape: f32[2,16,32], index: 17, kind: output, shape index: {}]
  %s18 = sld [smem:[#allocation0]]
  $region117: #{tpu_custom_call.1} parent=0
    _
  %s20 = ssub.s32 1, %s18
  %s21 = scalar_select 0, %s20, %s18
  $region1: #{tpu_custom_call.1} parent=0
    #allocation5 [shape = 'u8[16384]{0}', space=vmem, size = 0x4000, scoped, tag = 'input window, operand 5, single buffered']
    #allocation6 [shape = 's32[2]{0}', space=sflag, size = 0x8, scoped, tag = 'scoped memory for tpu_custom_call.1']
    #allocation7 [shape = 's32[2]{0}', space=sflag, size = 0x8, scoped, tag = 'scoped memory for tpu_custom_call.1']
    #allocation8 [shape = 'u8[16384]{0}', space=vmem, size = 0x4000, scoped, tag = 'input window, operand 7, single buffered']
    #allocation9 [shape = 's32[1]{0}', space=sflag, size = 0x4, scoped, tag = 'scoped memory for tpu_custom_call.1']
    #allocation10 [shape = 'u8[16384]{0}', space=vmem, size = 0x4000, scoped, tag = 'input window, operand 9, single buffered']
    #allocation11 [shape = 'u8[8192]{0}', space=vmem, size = 0x2000, scoped, tag = 'output window, operand 0']
    %22 = vsyncpa [#allocation6], 0
    %23 = vsyncpa [#allocation9], 0
    %24 = vsyncpa [#allocation7], 0
    %s25 = scalar_lea.sflag [#allocation7], 1
    %26 = vsyncpa %s25, 0
    loop: start=0, step=1, limit=6
    $region2: #{tpu_custom_call.1} parent=1 // loop_pre_header
      _
    $region3: #{tpu_custom_call.1} parent=1 // loop_header
      %s28 = sphi 0, %s32
      %p29 = scmp.ge.s32.totalorder %s28, 6
      %s35 = sphi 0, %s47
      %s36 = sphi 0, %s43
      %s37 = sphi 0, %s35
      %s38 = sphi 0, %s36
      %s39 = sphi 0, %s37
      %s40 = sphi 0, %s38
      %s50 = sphi 0, %s52
      %s53 = sphi 0, %s50
      %s54 = sphi 0, %s53
      %s70 = sphi 0, %s54
      %s74 = sphi 0, %s74
      %s76 = sphi 0, %s74
      %s77 = sphi 0, %s76
      %s91 = sphi 0, %s77
      %s95 = sphi 0, %s95
      %s97 = sphi 0, %s95
      %s98 = sphi 0, %s97
      %s112 = sphi 0, %s98
      %s116 = sphi 0, %s116
      %s118 = sphi 0, %s116
      %s119 = sphi 0, %s118
      %s133 = sphi 0, %s119
      %s137 = sphi 0, %s137
      %s139 = sphi 0, %s137
      %s140 = sphi 0, %s139
      %s154 = sphi 0, %s140
      %s158 = sphi 0, %s158
      %s160 = sphi 0, %s158
      %s161 = sphi 0, %s160
      %s175 = sphi 0, %s161
      %s179 = sphi 0, %s179
      %s181 = sphi 0, %s179
      %s182 = sphi 0, %s181
      %s196 = sphi 0, %s182
      %s200 = sphi 0, %s200
      %s202 = sphi 0, %s200
      %s203 = sphi 0, %s202
      %s217 = sphi 0, %s203
      %s221 = sphi 0, %s221
      %s223 = sphi 0, %s221
      %s224 = sphi 0, %s223
      %s238 = sphi 0, %s224
      %s242 = sphi 0, %s242
      %s244 = sphi 0, %s242
      %s245 = sphi 0, %s244
      %s259 = sphi 0, %s245
      %s263 = sphi 0, %s263
      %s265 = sphi 0, %s263
      %s266 = sphi 0, %s265
      %s280 = sphi 0, %s266
      %s284 = sphi 0, %s284
      %s286 = sphi 0, %s284
      %s287 = sphi 0, %s286
      %s301 = sphi 0, %s287
      %s305 = sphi 0, %s305
      %s307 = sphi 0, %s305
      %s308 = sphi 0, %s307
      %s322 = sphi 0, %s308
      %s326 = sphi 0, %s326
      %s328 = sphi 0, %s326
      %s329 = sphi 0, %s328
      %s343 = sphi 0, %s329
      %s347 = sphi 0, %s347
      %s349 = sphi 0, %s347
      %s350 = sphi 0, %s349
      %s364 = sphi 0, %s350
      %s368 = sphi 0, %s368
      %s370 = sphi 0, %s368
      %s371 = sphi 0, %s370
      %s385 = sphi 0, %s371
      %s389 = sphi 0, %s389
      %s391 = sphi 0, %s389
      %s392 = sphi 0, %s391
      %s406 = sphi 0, %s392
      %s414 = sphi 0, %s416
      %s417 = sphi 0, %s414
      %s418 = sphi 0, %s417
      %s434 = sphi 0, %s418
    $region4: #{tpu_custom_call.1} parent=1 // loop_header_branch
      %31 = sbr.rel (%p29) target = $region8
    $region5: #{tpu_custom_call.1} parent=1 // loop_body
      %s33 = ssub.s32 %s28, 1
      %s34 = ssub.s32 %s28, 2
      %s41 = sadd.s32 1, %s36
      %p42 = scmp.ge.s32.totalorder %s41, 2
      %s43 = scalar_select %p42, 0, %s41
      %s44 = sadd.s32 1, %s35
      %s45 = scalar_select %p42, %s44, %s35
      %p46 = scmp.ge.s32.totalorder %s45, 2
      %s47 = scalar_select %p46, 0, %s45
      %s48 = ssub.s32 %s35, %s47
      %p49 = scmp.eq.s32.totalorder %s48, 0
      %s51 = sadd.s32 %s50, 1
      %s52 = scalar_select %p49, %s50, %s51
      %p55 = pneg %p49
      %p56 = scmp.eq.s32.totalorder %s28, 3
      %p57 = por %p55, %p56
      %p58 = scmp.ne.s32.totalorder %s50, %s53
      %p59 = scmp.eq.s32.totalorder %s28, 0
      %p60 = por %p58, %p59
      %p61 = scmp.ne.s32.totalorder %s50, %s53
      %p62 = scmp.eq.s32.totalorder %s33, 3
      %p63 = por %p61, %p62
      %p64 = scmp.ne.s32.totalorder %s53, %s54
      %p65 = scmp.eq.s32.totalorder %s33, 0
      %p66 = por %p64, %p65
      %p67 = scmp.ne.s32.totalorder %s53, %s54
      %p68 = scmp.eq.s32.totalorder %s34, 3
      %p69 = por %p67, %p68
      %p71 = scmp.ne.s32.totalorder %s54, %s70
      %p72 = scmp.eq.s32.totalorder %s34, 0
      %p73 = por %p71, %p72
      %s75 = sadd.s32 %s74, 1
      %p78 = scmp.eq.s32.totalorder %s28, 3
      %p79 = scmp.ne.s32.totalorder %s74, %s76
      %p80 = scmp.eq.s32.totalorder %s28, 0
      %p81 = por %p79, %p80
      %p82 = scmp.ne.s32.totalorder %s74, %s76
      %p83 = scmp.eq.s32.totalorder %s33, 3
      %p84 = por %p82, %p83
      %p85 = scmp.ne.s32.totalorder %s76, %s77
      %p86 = scmp.eq.s32.totalorder %s33, 0
      %p87 = por %p85, %p86
      %p88 = scmp.ne.s32.totalorder %s76, %s77
      %p89 = scmp.eq.s32.totalorder %s34, 3
      %p90 = por %p88, %p89
      %p92 = scmp.ne.s32.totalorder %s77, %s91
      %p93 = scmp.eq.s32.totalorder %s34, 0
      %p94 = por %p92, %p93
      %s96 = sadd.s32 %s95, 1
      %p99 = scmp.eq.s32.totalorder %s28, 3
      %p100 = scmp.ne.s32.totalorder %s95, %s97
      %p101 = scmp.eq.s32.totalorder %s28, 0
      %p102 = por %p100, %p101
      %p103 = scmp.ne.s32.totalorder %s95, %s97
      %p104 = scmp.eq.s32.totalorder %s33, 3
      %p105 = por %p103, %p104
      %p106 = scmp.ne.s32.totalorder %s97, %s98
      %p107 = scmp.eq.s32.totalorder %s33, 0
      %p108 = por %p106, %p107
      %p109 = scmp.ne.s32.totalorder %s97, %s98
      %p110 = scmp.eq.s32.totalorder %s34, 3
      %p111 = por %p109, %p110
      %p113 = scmp.ne.s32.totalorder %s98, %s112
      %p114 = scmp.eq.s32.totalorder %s34, 0
      %p115 = por %p113, %p114
      %s117 = sadd.s32 %s116, 1
      %p120 = scmp.eq.s32.totalorder %s28, 3
      %p121 = scmp.ne.s32.totalorder %s116, %s118
      %p122 = scmp.eq.s32.totalorder %s28, 0
      %p123 = por %p121, %p122
      %p124 = scmp.ne.s32.totalorder %s116, %s118
      %p125 = scmp.eq.s32.totalorder %s33, 3
      %p126 = por %p124, %p125
      %p127 = scmp.ne.s32.totalorder %s118, %s119
      %p128 = scmp.eq.s32.totalorder %s33, 0
      %p129 = por %p127, %p128
      %p130 = scmp.ne.s32.totalorder %s118, %s119
      %p131 = scmp.eq.s32.totalorder %s34, 3
      %p132 = por %p130, %p131
      %p134 = scmp.ne.s32.totalorder %s119, %s133
      %p135 = scmp.eq.s32.totalorder %s34, 0
      %p136 = por %p134, %p135
      %s138 = sadd.s32 %s137, 1
      %p141 = scmp.eq.s32.totalorder %s28, 3
      %p142 = scmp.ne.s32.totalorder %s137, %s139
      %p143 = scmp.eq.s32.totalorder %s28, 0
      %p144 = por %p142, %p143
      %p145 = scmp.ne.s32.totalorder %s137, %s139
      %p146 = scmp.eq.s32.totalorder %s33, 3
      %p147 = por %p145, %p146
      %p148 = scmp.ne.s32.totalorder %s139, %s140
      %p149 = scmp.eq.s32.totalorder %s33, 0
      %p150 = por %p148, %p149
      %p151 = scmp.ne.s32.totalorder %s139, %s140
      %p152 = scmp.eq.s32.totalorder %s34, 3
      %p153 = por %p151, %p152
      %p155 = scmp.ne.s32.totalorder %s140, %s154
      %p156 = scmp.eq.s32.totalorder %s34, 0
      %p157 = por %p155, %p156
      %s159 = sadd.s32 %s158, 1
      %p162 = scmp.eq.s32.totalorder %s28, 3
      %p163 = scmp.ne.s32.totalorder %s158, %s160
      %p164 = scmp.eq.s32.totalorder %s28, 0
      %p165 = por %p163, %p164
      %p166 = scmp.ne.s32.totalorder %s158, %s160
      %p167 = scmp.eq.s32.totalorder %s33, 3
      %p168 = por %p166, %p167
      %p169 = scmp.ne.s32.totalorder %s160, %s161
      %p170 = scmp.eq.s32.totalorder %s33, 0
      %p171 = por %p169, %p170
      %p172 = scmp.ne.s32.totalorder %s160, %s161
      %p173 = scmp.eq.s32.totalorder %s34, 3
      %p174 = por %p172, %p173
      %p176 = scmp.ne.s32.totalorder %s161, %s175
      %p177 = scmp.eq.s32.totalorder %s34, 0
      %p178 = por %p176, %p177
      %s180 = sadd.s32 %s179, 1
      %p183 = scmp.eq.s32.totalorder %s28, 3
      %p184 = scmp.ne.s32.totalorder %s179, %s181
      %p185 = scmp.eq.s32.totalorder %s28, 0
      %p186 = por %p184, %p185
      %p187 = scmp.ne.s32.totalorder %s179, %s181
      %p188 = scmp.eq.s32.totalorder %s33, 3
      %p189 = por %p187, %p188
      %p190 = scmp.ne.s32.totalorder %s181, %s182
      %p191 = scmp.eq.s32.totalorder %s33, 0
      %p192 = por %p190, %p191
      %p193 = scmp.ne.s32.totalorder %s181, %s182
      %p194 = scmp.eq.s32.totalorder %s34, 3
      %p195 = por %p193, %p194
      %p197 = scmp.ne.s32.totalorder %s182, %s196
      %p198 = scmp.eq.s32.totalorder %s34, 0
      %p199 = por %p197, %p198
      %s201 = sadd.s32 %s200, 1
      %p204 = scmp.eq.s32.totalorder %s28, 3
      %p205 = scmp.ne.s32.totalorder %s200, %s202
      %p206 = scmp.eq.s32.totalorder %s28, 0
      %p207 = por %p205, %p206
      %p208 = scmp.ne.s32.totalorder %s200, %s202
      %p209 = scmp.eq.s32.totalorder %s33, 3
      %p210 = por %p208, %p209
      %p211 = scmp.ne.s32.totalorder %s202, %s203
      %p212 = scmp.eq.s32.totalorder %s33, 0
      %p213 = por %p211, %p212
      %p214 = scmp.ne.s32.totalorder %s202, %s203
      %p215 = scmp.eq.s32.totalorder %s34, 3
      %p216 = por %p214, %p215
      %p218 = scmp.ne.s32.totalorder %s203, %s217
      %p219 = scmp.eq.s32.totalorder %s34, 0
      %p220 = por %p218, %p219
      %s222 = sadd.s32 %s221, 1
      %p225 = scmp.eq.s32.totalorder %s28, 3
      %p226 = scmp.ne.s32.totalorder %s221, %s223
      %p227 = scmp.eq.s32.totalorder %s28, 0
      %p228 = por %p226, %p227
      %p229 = scmp.ne.s32.totalorder %s221, %s223
      %p230 = scmp.eq.s32.totalorder %s33, 3
      %p231 = por %p229, %p230
      %p232 = scmp.ne.s32.totalorder %s223, %s224
      %p233 = scmp.eq.s32.totalorder %s33, 0
      %p234 = por %p232, %p233
      %p235 = scmp.ne.s32.totalorder %s223, %s224
      %p236 = scmp.eq.s32.totalorder %s34, 3
      %p237 = por %p235, %p236
      %p239 = scmp.ne.s32.totalorder %s224, %s238
      %p240 = scmp.eq.s32.totalorder %s34, 0
      %p241 = por %p239, %p240
      %s243 = sadd.s32 %s242, 1
      %p246 = scmp.eq.s32.totalorder %s28, 3
      %p247 = scmp.ne.s32.totalorder %s242, %s244
      %p248 = scmp.eq.s32.totalorder %s28, 0
      %p249 = por %p247, %p248
      %p250 = scmp.ne.s32.totalorder %s242, %s244
      %p251 = scmp.eq.s32.totalorder %s33, 3
      %p252 = por %p250, %p251
      %p253 = scmp.ne.s32.totalorder %s244, %s245
      %p254 = scmp.eq.s32.totalorder %s33, 0
      %p255 = por %p253, %p254
      %p256 = scmp.ne.s32.totalorder %s244, %s245
      %p257 = scmp.eq.s32.totalorder %s34, 3
      %p258 = por %p256, %p257
      %p260 = scmp.ne.s32.totalorder %s245, %s259
      %p261 = scmp.eq.s32.totalorder %s34, 0
      %p262 = por %p260, %p261
      %s264 = sadd.s32 %s263, 1
      %p267 = scmp.eq.s32.totalorder %s28, 3
      %p268 = scmp.ne.s32.totalorder %s263, %s265
      %p269 = scmp.eq.s32.totalorder %s28, 0
      %p270 = por %p268, %p269
      %p271 = scmp.ne.s32.totalorder %s263, %s265
      %p272 = scmp.eq.s32.totalorder %s33, 3
      %p273 = por %p271, %p272
      %p274 = scmp.ne.s32.totalorder %s265, %s266
      %p275 = scmp.eq.s32.totalorder %s33, 0
      %p276 = por %p274, %p275
      %p277 = scmp.ne.s32.totalorder %s265, %s266
      %p278 = scmp.eq.s32.totalorder %s34, 3
      %p279 = por %p277, %p278
      %p281 = scmp.ne.s32.totalorder %s266, %s280
      %p282 = scmp.eq.s32.totalorder %s34, 0
      %p283 = por %p281, %p282
      %s285 = sadd.s32 %s284, 1
      %p288 = scmp.eq.s32.totalorder %s28, 3
      %p289 = scmp.ne.s32.totalorder %s284, %s286
      %p290 = scmp.eq.s32.totalorder %s28, 0
      %p291 = por %p289, %p290
      %p292 = scmp.ne.s32.totalorder %s284, %s286
      %p293 = scmp.eq.s32.totalorder %s33, 3
      %p294 = por %p292, %p293
      %p295 = scmp.ne.s32.totalorder %s286, %s287
      %p296 = scmp.eq.s32.totalorder %s33, 0
      %p297 = por %p295, %p296
      %p298 = scmp.ne.s32.totalorder %s286, %s287
      %p299 = scmp.eq.s32.totalorder %s34, 3
      %p300 = por %p298, %p299
      %p302 = scmp.ne.s32.totalorder %s287, %s301
      %p303 = scmp.eq.s32.totalorder %s34, 0
      %p304 = por %p302, %p303
      %s306 = sadd.s32 %s305, 1
      %p309 = scmp.eq.s32.totalorder %s28, 3
      %p310 = scmp.ne.s32.totalorder %s305, %s307
      %p311 = scmp.eq.s32.totalorder %s28, 0
      %p312 = por %p310, %p311
      %p313 = scmp.ne.s32.totalorder %s305, %s307
      %p314 = scmp.eq.s32.totalorder %s33, 3
      %p315 = por %p313, %p314
      %p316 = scmp.ne.s32.totalorder %s307, %s308
      %p317 = scmp.eq.s32.totalorder %s33, 0
      %p318 = por %p316, %p317
      %p319 = scmp.ne.s32.totalorder %s307, %s308
      %p320 = scmp.eq.s32.totalorder %s34, 3
      %p321 = por %p319, %p320
      %p323 = scmp.ne.s32.totalorder %s308, %s322
      %p324 = scmp.eq.s32.totalorder %s34, 0
      %p325 = por %p323, %p324
      %s327 = sadd.s32 %s326, 1
      %p330 = scmp.eq.s32.totalorder %s28, 3
      %p331 = scmp.ne.s32.totalorder %s326, %s328
      %p332 = scmp.eq.s32.totalorder %s28, 0
      %p333 = por %p331, %p332
      %p334 = scmp.ne.s32.totalorder %s326, %s328
      %p335 = scmp.eq.s32.totalorder %s33, 3
      %p336 = por %p334, %p335
      %p337 = scmp.ne.s32.totalorder %s328, %s329
      %p338 = scmp.eq.s32.totalorder %s33, 0
      %p339 = por %p337, %p338
      %p340 = scmp.ne.s32.totalorder %s328, %s329
      %p341 = scmp.eq.s32.totalorder %s34, 3
      %p342 = por %p340, %p341
      %p344 = scmp.ne.s32.totalorder %s329, %s343
      %p345 = scmp.eq.s32.totalorder %s34, 0
      %p346 = por %p344, %p345
      %s348 = sadd.s32 %s347, 1
      %p351 = scmp.eq.s32.totalorder %s28, 3
      %p352 = scmp.ne.s32.totalorder %s347, %s349
      %p353 = scmp.eq.s32.totalorder %s28, 0
      %p354 = por %p352, %p353
      %p355 = scmp.ne.s32.totalorder %s347, %s349
      %p356 = scmp.eq.s32.totalorder %s33, 3
      %p357 = por %p355, %p356
      %p358 = scmp.ne.s32.totalorder %s349, %s350
      %p359 = scmp.eq.s32.totalorder %s33, 0
      %p360 = por %p358, %p359
      %p361 = scmp.ne.s32.totalorder %s349, %s350
      %p362 = scmp.eq.s32.totalorder %s34, 3
      %p363 = por %p361, %p362
      %p365 = scmp.ne.s32.totalorder %s350, %s364
      %p366 = scmp.eq.s32.totalorder %s34, 0
      %p367 = por %p365, %p366
      %s369 = sadd.s32 %s368, 1
      %p372 = scmp.eq.s32.totalorder %s28, 3
      %p373 = scmp.ne.s32.totalorder %s368, %s370
      %p374 = scmp.eq.s32.totalorder %s28, 0
      %p375 = por %p373, %p374
      %p376 = scmp.ne.s32.totalorder %s368, %s370
      %p377 = scmp.eq.s32.totalorder %s33, 3
      %p378 = por %p376, %p377
      %p379 = scmp.ne.s32.totalorder %s370, %s371
      %p380 = scmp.eq.s32.totalorder %s33, 0
      %p381 = por %p379, %p380
      %p382 = scmp.ne.s32.totalorder %s370, %s371
      %p383 = scmp.eq.s32.totalorder %s34, 3
      %p384 = por %p382, %p383
      %p386 = scmp.ne.s32.totalorder %s371, %s385
      %p387 = scmp.eq.s32.totalorder %s34, 0
      %p388 = por %p386, %p387
      %s390 = sadd.s32 %s389, 1
      %p393 = scmp.eq.s32.totalorder %s28, 3
      %p394 = scmp.ne.s32.totalorder %s389, %s391
      %p395 = scmp.eq.s32.totalorder %s28, 0
      %p396 = por %p394, %p395
      %p397 = scmp.ne.s32.totalorder %s389, %s391
      %p398 = scmp.eq.s32.totalorder %s33, 3
      %p399 = por %p397, %p398
      %p400 = scmp.ne.s32.totalorder %s391, %s392
      %p401 = scmp.eq.s32.totalorder %s33, 0
      %p402 = por %p400, %p401
      %p403 = scmp.ne.s32.totalorder %s391, %s392
      %p404 = scmp.eq.s32.totalorder %s34, 3
      %p405 = por %p403, %p404
      %p407 = scmp.ne.s32.totalorder %s392, %s406
      %p408 = scmp.eq.s32.totalorder %s34, 0
      %p409 = por %p407, %p408
      %s410 = ssub.s32 %s35, %s47
      %s411 = ssub.s32 %s36, %s43
      %s412 = sor.u32 %s410, %s411
      %p413 = scmp.eq.s32.totalorder %s412, 0
      %s415 = sadd.s32 %s414, 1
      %s416 = scalar_select %p413, %s414, %s415
      %p419 = pneg %p413
      %p420 = scmp.eq.s32.totalorder %s28, 3
      %p421 = por %p419, %p420
      %p422 = scmp.ne.s32.totalorder %s414, %s417
      %p423 = scmp.eq.s32.totalorder %s28, 0
      %p424 = por %p422, %p423
      %p425 = scmp.ne.s32.totalorder %s414, %s417
      %p426 = scmp.eq.s32.totalorder %s33, 3
      %p427 = por %p425, %p426
      %p428 = scmp.ne.s32.totalorder %s417, %s418
      %p429 = scmp.eq.s32.totalorder %s33, 0
      %p430 = por %p428, %p429
      %p431 = scmp.ne.s32.totalorder %s417, %s418
      %p432 = scmp.eq.s32.totalorder %s34, 3
      %p433 = por %p431, %p432
      %p435 = scmp.ne.s32.totalorder %s418, %s434
      %p436 = scmp.eq.s32.totalorder %s34, 0
      %p437 = por %p435, %p436
      %p438 = scmp.le.s32.totalorder 1, %s28
      %p439 = scmp.lt.s32.totalorder %s28, 5
      %p440 = pnand %p438, %p439
      %p441 = pneg %p440
      // Predicated region
      $region9: #{tpu_custom_call.1} parent=5 // pred_check
        _
      $region10: #{tpu_custom_call.1} parent=5 // pred_check_branch
        %443 = sbr.rel (%p440) target = $region12
      $region11: #{tpu_custom_call.1} parent=5 // pred_region
        %s444 = ssub.s32 %s28, 1
        // Predicated region
        $region13: #{tpu_custom_call.1} parent=11 // pred_check
          %p445 = pneg %p87
        $region14: #{tpu_custom_call.1} parent=11 // pred_check_branch
          %447 = sbr.rel (%p445) target = $region16
        $region15: #{tpu_custom_call.1} parent=11 // pred_region
          _
        $region16: #{tpu_custom_call.1} parent=11 // pred_fallthru
          _
        // Predicated region
        $region17: #{tpu_custom_call.1} parent=11 // pred_check
          %p448 = pneg %p108
        $region18: #{tpu_custom_call.1} parent=11 // pred_check_branch
          %450 = sbr.rel (%p448) target = $region20
        $region19: #{tpu_custom_call.1} parent=11 // pred_region
          _
        $region20: #{tpu_custom_call.1} parent=11 // pred_fallthru
          _
        // Predicated region
        $region21: #{tpu_custom_call.1} parent=11 // pred_check
          %p451 = pneg %p129
        $region22: #{tpu_custom_call.1} parent=11 // pred_check_branch
          %453 = sbr.rel (%p451) target = $region24
        $region23: #{tpu_custom_call.1} parent=11 // pred_region
          _
        $region24: #{tpu_custom_call.1} parent=11 // pred_fallthru
          _
        // Predicated region
        $region25: #{tpu_custom_call.1} parent=11 // pred_check
          %p454 = pneg %p150
        $region26: #{tpu_custom_call.1} parent=11 // pred_check_branch
          %456 = sbr.rel (%p454) target = $region28
        $region27: #{tpu_custom_call.1} parent=11 // pred_region
          _
        $region28: #{tpu_custom_call.1} parent=11 // pred_fallthru
          _
        // Predicated region
        $region29: #{tpu_custom_call.1} parent=11 // pred_check
          %p457 = pneg %p171
        $region30: #{tpu_custom_call.1} parent=11 // pred_check_branch
          %459 = sbr.rel (%p457) target = $region32
        $region31: #{tpu_custom_call.1} parent=11 // pred_region
          %s461 = ssub.s32 512, 512
          %462 = vsyncadd [#allocation6], %s461
          %s463 = sshll.u32 [#allocation5], 4
          %s464 = int_to_ptr.vmem [resolvable:$true] %s463
          %469 = dma.hbm_to_vmem [thread:$0]  %s5, 512, %s464, [#allocation6], 128, 128, 8
        $region32: #{tpu_custom_call.1} parent=11 // pred_fallthru
          _
        // Predicated region
        $region33: #{tpu_custom_call.1} parent=11 // pred_check
          %p470 = pneg %p192
        $region34: #{tpu_custom_call.1} parent=11 // pred_check_branch
          %472 = sbr.rel (%p470) target = $region36
        $region35: #{tpu_custom_call.1} parent=11 // pred_region
          _
        $region36: #{tpu_custom_call.1} parent=11 // pred_fallthru
          _
        // Predicated region
        $region37: #{tpu_custom_call.1} parent=11 // pred_check
          %p473 = pneg %p213
        $region38: #{tpu_custom_call.1} parent=11 // pred_check_branch
          %475 = sbr.rel (%p473) target = $region40
        $region39: #{tpu_custom_call.1} parent=11 // pred_region
          %s477 = ssub.s32 512, 512
          %478 = vsyncadd [#allocation9], %s477
          %s479 = sshll.u32 [#allocation8], 4
          %s480 = int_to_ptr.vmem [resolvable:$true] %s479
          %485 = dma.hbm_to_vmem [thread:$0]  %s7, 512, %s480, [#allocation9], 128, 128, 8
        $region40: #{tpu_custom_call.1} parent=11 // pred_fallthru
          _
        // Predicated region
        $region41: #{tpu_custom_call.1} parent=11 // pred_check
          %p486 = pneg %p234
        $region42: #{tpu_custom_call.1} parent=11 // pred_check_branch
          %488 = sbr.rel (%p486) target = $region44
        $region43: #{tpu_custom_call.1} parent=11 // pred_region
          _
        $region44: #{tpu_custom_call.1} parent=11 // pred_fallthru
          _
        // Predicated region
        $region45: #{tpu_custom_call.1} parent=11 // pred_check
          %p489 = pneg %p255
        $region46: #{tpu_custom_call.1} parent=11 // pred_check_branch
          %491 = sbr.rel (%p489) target = $region48
        $region47: #{tpu_custom_call.1} parent=11 // pred_region
          %s493 = ssub.s32 512, 512
          %494 = vsyncadd [#allocation9], %s493
          %s495 = sshll.u32 [#allocation10], 4
          %s496 = int_to_ptr.vmem [resolvable:$true] %s495
          %501 = dma.hbm_to_vmem [thread:$0]  %s9, 512, %s496, [#allocation9], 128, 128, 8
        $region48: #{tpu_custom_call.1} parent=11 // pred_fallthru
          _
        // Predicated region
        $region49: #{tpu_custom_call.1} parent=11 // pred_check
          %p502 = pneg %p276
        $region50: #{tpu_custom_call.1} parent=11 // pred_check_branch
          %504 = sbr.rel (%p502) target = $region52
        $region51: #{tpu_custom_call.1} parent=11 // pred_region
          _
        $region52: #{tpu_custom_call.1} parent=11 // pred_fallthru
          _
        // Predicated region
        $region53: #{tpu_custom_call.1} parent=11 // pred_check
          %p505 = pneg %p297
        $region54: #{tpu_custom_call.1} parent=11 // pred_check_branch
          %507 = sbr.rel (%p505) target = $region56
        $region55: #{tpu_custom_call.1} parent=11 // pred_region
          _
        $region56: #{tpu_custom_call.1} parent=11 // pred_fallthru
          _
        // Predicated region
        $region57: #{tpu_custom_call.1} parent=11 // pred_check
          %p508 = pneg %p318
        $region58: #{tpu_custom_call.1} parent=11 // pred_check_branch
          %510 = sbr.rel (%p508) target = $region60
        $region59: #{tpu_custom_call.1} parent=11 // pred_region
          _
        $region60: #{tpu_custom_call.1} parent=11 // pred_fallthru
          _
        // Predicated region
        $region61: #{tpu_custom_call.1} parent=11 // pred_check
          %p511 = pneg %p339
        $region62: #{tpu_custom_call.1} parent=11 // pred_check_branch
          %513 = sbr.rel (%p511) target = $region64
        $region63: #{tpu_custom_call.1} parent=11 // pred_region
          _
        $region64: #{tpu_custom_call.1} parent=11 // pred_fallthru
          _
        // Predicated region
        $region65: #{tpu_custom_call.1} parent=11 // pred_check
          %p514 = pneg %p360
        $region66: #{tpu_custom_call.1} parent=11 // pred_check_branch
          %516 = sbr.rel (%p514) target = $region68
        $region67: #{tpu_custom_call.1} parent=11 // pred_region
          _
        $region68: #{tpu_custom_call.1} parent=11 // pred_fallthru
          _
        // Predicated region
        $region69: #{tpu_custom_call.1} parent=11 // pred_check
          %p517 = pneg %p381
        $region70: #{tpu_custom_call.1} parent=11 // pred_check_branch
          %519 = sbr.rel (%p517) target = $region72
        $region71: #{tpu_custom_call.1} parent=11 // pred_region
          _
        $region72: #{tpu_custom_call.1} parent=11 // pred_fallthru
          _
        // Predicated region
        $region73: #{tpu_custom_call.1} parent=11 // pred_check
          %p520 = pneg %p402
        $region74: #{tpu_custom_call.1} parent=11 // pred_check_branch
          %522 = sbr.rel (%p520) target = $region76
        $region75: #{tpu_custom_call.1} parent=11 // pred_region
          _
        $region76: #{tpu_custom_call.1} parent=11 // pred_fallthru
          _
      $region12: #{tpu_custom_call.1} parent=5 // pred_fallthru
        _
      %p523 = scmp.lt.s32.totalorder %s28, 4
      // Predicated region
      $region77: #{tpu_custom_call.1} parent=5 // pred_check
        %p524 = pneg %p523
      $region78: #{tpu_custom_call.1} parent=5 // pred_check_branch
        %526 = sbr.rel (%p524) target = $region80
      $region79: #{tpu_custom_call.1} parent=5 // pred_region
        // Predicated region
        $region81: #{tpu_custom_call.1} parent=79 // pred_check
          %p527 = pneg %p60
        $region82: #{tpu_custom_call.1} parent=79 // pred_check_branch
          %529 = sbr.rel (%p527) target = $region84
        $region83: #{tpu_custom_call.1} parent=79 // pred_region
          %p530 = scmp.lt.s32.totalorder %s35, 1
          %s531 = scalar_select %p530, %s35, 1
          %s532 = smul.addr %s531, 2
          %s533 = smul.addr %s532, 8
          %s534 = scalar_lea.vmem %s0, %s533
        $region84: #{tpu_custom_call.1} parent=79 // pred_fallthru
          _
      $region80: #{tpu_custom_call.1} parent=5 // pred_fallthru
        _
      %p535 = scmp.le.s32.totalorder 1, %s28
      %p536 = scmp.lt.s32.totalorder %s28, 5
      %p537 = pnand %p535, %p536
      %p538 = pneg %p537
      // Predicated region
      $region85: #{tpu_custom_call.1} parent=5 // pred_check
        _
      $region86: #{tpu_custom_call.1} parent=5 // pred_check_branch
        %540 = sbr.rel (%p537) target = $region88
      $region87: #{tpu_custom_call.1} parent=5 // pred_region
        %s541 = ssub.s32 %s28, 1
        // Predicated region
        $region89: #{tpu_custom_call.1} parent=87 // pred_check
          %p542 = pneg %p171
        $region90: #{tpu_custom_call.1} parent=87 // pred_check_branch
          %544 = sbr.rel (%p542) target = $region92
        $region91: #{tpu_custom_call.1} parent=87 // pred_region
          %545 = dma.done [#allocation6], 512
        $region92: #{tpu_custom_call.1} parent=87 // pred_fallthru
          _
        // Predicated region
        $region93: #{tpu_custom_call.1} parent=87 // pred_check
          %p546 = pneg %p213
        $region94: #{tpu_custom_call.1} parent=87 // pred_check_branch
          %548 = sbr.rel (%p546) target = $region96
        $region95: #{tpu_custom_call.1} parent=87 // pred_region
          %549 = dma.done [#allocation9], 512
        $region96: #{tpu_custom_call.1} parent=87 // pred_fallthru
          _
        // Predicated region
        $region97: #{tpu_custom_call.1} parent=87 // pred_check
          %p550 = pneg %p255
        $region98: #{tpu_custom_call.1} parent=87 // pred_check_branch
          %552 = sbr.rel (%p550) target = $region100
        $region99: #{tpu_custom_call.1} parent=87 // pred_region
          %553 = dma.done [#allocation9], 512
        $region100: #{tpu_custom_call.1} parent=87 // pred_fallthru
          _
        %p554 = scmp.lt.s32.totalorder %s37, 1
        %s555 = scalar_select %p554, %s37, 1
        %s556 = smul.addr %s555, 2
        %s557 = smul.addr %s556, 8
        %s558 = scalar_lea.vmem %s0, %s557
        %p559 = pneg %p66
        %p560 = pneg %p63
        %p561 = pneg %p87
        %p562 = pneg %p84
        %p563 = pneg %p108
        %p564 = pneg %p105
        %p565 = pneg %p129
        %p566 = pneg %p126
        %p567 = pneg %p150
        %p568 = pneg %p147
        %p569 = pneg %p171
        %p570 = pneg %p168
        %p571 = pneg %p192
        %p572 = pneg %p189
        %p573 = pneg %p213
        %p574 = pneg %p210
        %p575 = pneg %p234
        %p576 = pneg %p231
        %p577 = pneg %p255
        %p578 = pneg %p252
        %p579 = pneg %p276
        %p580 = pneg %p273
        %p581 = pneg %p297
        %p582 = pneg %p294
        %p583 = pneg %p318
        %p584 = pneg %p315
        %p585 = pneg %p339
        %p586 = pneg %p336
        %p587 = pneg %p360
        %p588 = pneg %p357
        %p589 = pneg %p381
        %p590 = pneg %p378
        %p591 = pneg %p402
        %p592 = pneg %p399
        %p593 = pneg %p430
        %p594 = pneg %p427
        %s595 = sand.u32 %s417, 1
        %s596 = scalar_lea.sflag [#allocation7], %s595
        %s597 = sand.u32 %s417, 1
        %s598 = smul.addr %s597, 8
        %s599 = scalar_lea.vmem [#allocation11], %s598
        %p600 = scmp.lt.s32.totalorder %s37, 1
        %s601 = scalar_select %p600, %s37, 1
        %s602 = smul.addr %s601, 2
        %s603 = smul.addr %s602, 8
        %s604 = scalar_lea.vmem %s0, %s603
        %p605 = scmp.eq.s32.totalorder %s38, 0
        // Predicated region
        $region101: #{tpu_custom_call.1} parent=87 // pred_check
          %p606 = pneg %p605
        $region102: #{tpu_custom_call.1} parent=87 // pred_check_branch
          %608 = sbr.rel (%p606) target = $region104
        $region103: #{tpu_custom_call.1} parent=87 // pred_region
          %v609 = vld [vmem:[%s604] sm:$0xff]
          %v610 = vld [vmem:[%s604 + $0x8] sm:$0xff]
          %v611 = vld [vmem:[%s3] sm:$0xff]
          %v612 = vld [vmem:[%s3 + $0x8] sm:$0xff]
          %v613 = vld [vmem:[%s3 + $0x10] sm:$0xff]
          %v614 = vld [vmem:[%s3 + $0x18] sm:$0xff]
          %v615 = vld [vmem:[%s4] sm:$0x1]
          %v617 = vlaneseq
          %v618 = vshrl.u32 %v617, 7
          %v619 = vsub.s32 0, %v618
          %v620 = vrot.slane %v615, %v619
          %vm622 = vcmask 261120
          %v624 = vsel %vm622, %v609, 0
          %v627 = vsel %vm622, %v610, 0
          %629 = vmatprep.subr.mxu0 0.0
          %630 = vmatpush1.msra.mxu0 %v611
          %631 = vmatprep.subr.mxu0 0.0
          %632 = vmatpush1.msra.mxu0 %v612
          %633 = vmatprep.subr.mxu0 0.0
          %634 = vmatpush1.msra.mxu0 %v613
          %635 = vmatprep.subr.mxu0 0.0
          %636 = vmatpush1.msra.mxu0 %v614
          %637 = vmatprep.subr.mxu0 0.0
          %638 = vmatpush1.msra.mxu0 0.0
          %639 = vmatprep.subr.mxu0 0.0
          %640 = vmatpush1.msra.mxu0 0.0
          %641 = vmatprep.subr.mxu0 0.0
          %642 = vmatpush1.msra.mxu0 0.0
          %643 = vmatprep.subr.mxu0 0.0
          %644 = vmatpush1.msra.mxu0 0.0
          %645 = vmatprep.subr.mxu0 0.0
          %646 = vmatpush1.msra.mxu0 0.0
          %647 = vmatprep.subr.mxu0 0.0
          %648 = vmatpush1.msra.mxu0 0.0
          %649 = vmatprep.subr.mxu0 0.0
          %650 = vmatpush1.msra.mxu0 0.0
          %651 = vmatprep.subr.mxu0 0.0
          %652 = vmatpush1.msra.mxu0 0.0
          %653 = vmatprep.subr.mxu0 0.0
          %654 = vmatpush1.msra.mxu0 0.0
          %655 = vmatprep.subr.mxu0 0.0
          %656 = vmatpush1.msra.mxu0 0.0
          %657 = vmatprep.subr.mxu0 0.0
          %658 = vmatpush1.msra.mxu0 0.0
          %659 = vmatprep.subr.mxu0 0.0
          %660 = vmatpush1.msra.mxu0 0.0
          %661 = vmatprep.subr.mxu0 0.0
          %662 = vmatpush1.msra.mxu0 0.0
          %663 = vmatprep.subr.mxu0 0.0
          %664 = vmatpush1.msra.mxu0 0.0
          %665 = vmatprep.subr.mxu0 0.0
          %666 = vmatpush1.msra.mxu0 0.0
          %667 = vmatprep.subr.mxu0 0.0
          %668 = vmatpush1.msra.mxu0 0.0
          %669 = vmatprep.subr.mxu0 0.0
          %670 = vmatpush1.msra.mxu0 0.0
          %671 = vmatprep.subr.mxu0 0.0
          %672 = vmatpush1.msra.mxu0 0.0
          %673 = vmatprep.subr.mxu0 0.0
          %674 = vmatpush1.msra.mxu0 0.0
          %675 = vmatprep.subr.mxu0 0.0
          %676 = vmatpush1.msra.mxu0 0.0
          %677 = vmatprep.subr.mxu0 0.0
          %678 = vmatpush1.msra.mxu0 0.0
          %679 = vmatprep.subr.mxu0 0.0
          %680 = vmatpush1.msra.mxu0 0.0
          %681 = vmatprep.subr.mxu0 0.0
          %682 = vmatpush1.msra.mxu0 0.0
          %683 = vmatprep.subr.mxu0 0.0
          %684 = vmatpush1.msra.mxu0 0.0
          %685 = vmatprep.subr.mxu0 0.0
          %686 = vmatpush1.msra.mxu0 0.0
          %687 = vmatprep.subr.mxu0 0.0
          %688 = vmatpush1.msra.mxu0 0.0
          %689 = vmatprep.subr.mxu0 0.0
          %690 = vmatpush1.msra.mxu0 0.0
          %691 = vmatprep.subr.mxu0 0.0
          %692 = vmatpush1.msra.mxu0 0.0
          %693 = vmatprep.mubr.f32.mxu0 0.0
          %694 = vmatmul.mubr.f32.gmra.mrb[0].mxu0 %v624
          %v695 = vpop.f32.mrb[0].mxu0
          %v696 = vadd.f32 %v620, %v695
          %v697 = vpop.f32.mrb[0].mxu0
          %698 = vmatprep.mubr.f32.mxu0 0.0
          %699 = vmatmul.mubr.f32.gmra.mrb[0].mxu0 %v627
          %v700 = vpop.f32.mrb[0].mxu0
          %v701 = vadd.f32 %v620, %v700
          %v702 = vpop.f32.mrb[0].mxu0
          %703 = vdwg.mxu0
          %v704 = vld [vmem:[#allocation5] sm:$0xff]
          %v705 = vld [vmem:[#allocation5 + $0x8] sm:$0xff]
          %v706 = vld [vmem:[#allocation5 + $0x10] sm:$0xff]
          %v707 = vld [vmem:[#allocation5 + $0x18] sm:$0xff]
          %v708 = vld [vmem:[%s6] sm:$0x1]
          %v710 = vlaneseq
          %v711 = vshrl.u32 %v710, 7
          %v712 = vsub.s32 0, %v711
          %v713 = vrot.slane %v708, %v712
          %715 = vmatprep.subr.mxu0 0.0
          %716 = vmatpush1.msra.mxu0 %v704
          %717 = vmatprep.subr.mxu0 0.0
          %718 = vmatpush1.msra.mxu0 %v705
          %719 = vmatprep.subr.mxu0 0.0
          %720 = vmatpush1.msra.mxu0 %v706
          %721 = vmatprep.subr.mxu0 0.0
          %722 = vmatpush1.msra.mxu0 %v707
          %723 = vmatprep.subr.mxu0 0.0
          %724 = vmatpush1.msra.mxu0 0.0
          %725 = vmatprep.subr.mxu0 0.0
          %726 = vmatpush1.msra.mxu0 0.0
          %727 = vmatprep.subr.mxu0 0.0
          %728 = vmatpush1.msra.mxu0 0.0
          %729 = vmatprep.subr.mxu0 0.0
          %730 = vmatpush1.msra.mxu0 0.0
          %731 = vmatprep.subr.mxu0 0.0
          %732 = vmatpush1.msra.mxu0 0.0
          %733 = vmatprep.subr.mxu0 0.0
          %734 = vmatpush1.msra.mxu0 0.0
          %735 = vmatprep.subr.mxu0 0.0
          %736 = vmatpush1.msra.mxu0 0.0
          %737 = vmatprep.subr.mxu0 0.0
          %738 = vmatpush1.msra.mxu0 0.0
          %739 = vmatprep.subr.mxu0 0.0
          %740 = vmatpush1.msra.mxu0 0.0
          %741 = vmatprep.subr.mxu0 0.0
          %742 = vmatpush1.msra.mxu0 0.0
          %743 = vmatprep.subr.mxu0 0.0
          %744 = vmatpush1.msra.mxu0 0.0
          %745 = vmatprep.subr.mxu0 0.0
          %746 = vmatpush1.msra.mxu0 0.0
          %747 = vmatprep.subr.mxu0 0.0
          %748 = vmatpush1.msra.mxu0 0.0
          %749 = vmatprep.subr.mxu0 0.0
          %750 = vmatpush1.msra.mxu0 0.0
          %751 = vmatprep.subr.mxu0 0.0
          %752 = vmatpush1.msra.mxu0 0.0
          %753 = vmatprep.subr.mxu0 0.0
          %754 = vmatpush1.msra.mxu0 0.0
          %755 = vmatprep.subr.mxu0 0.0
          %756 = vmatpush1.msra.mxu0 0.0
          %757 = vmatprep.subr.mxu0 0.0
          %758 = vmatpush1.msra.mxu0 0.0
          %759 = vmatprep.subr.mxu0 0.0
          %760 = vmatpush1.msra.mxu0 0.0
          %761 = vmatprep.subr.mxu0 0.0
          %762 = vmatpush1.msra.mxu0 0.0
          %763 = vmatprep.subr.mxu0 0.0
          %764 = vmatpush1.msra.mxu0 0.0
          %765 = vmatprep.subr.mxu0 0.0
          %766 = vmatpush1.msra.mxu0 0.0
          %767 = vmatprep.subr.mxu0 0.0
          %768 = vmatpush1.msra.mxu0 0.0
          %769 = vmatprep.subr.mxu0 0.0
          %770 = vmatpush1.msra.mxu0 0.0
          %771 = vmatprep.subr.mxu0 0.0
          %772 = vmatpush1.msra.mxu0 0.0
          %773 = vmatprep.subr.mxu0 0.0
          %774 = vmatpush1.msra.mxu0 0.0
          %775 = vmatprep.subr.mxu0 0.0
          %776 = vmatpush1.msra.mxu0 0.0
          %777 = vmatprep.subr.mxu0 0.0
          %778 = vmatpush1.msra.mxu0 0.0
          %779 = vmatprep.mubr.f32.mxu0 0.0
          %780 = vmatmul.mubr.f32.gmra.mrb[0].mxu0 %v624
          %v781 = vpop.f32.mrb[0].mxu0
          %v782 = vadd.f32 %v713, %v781
          %v783 = vpop.f32.mrb[0].mxu0
          %784 = vmatprep.mubr.f32.mxu0 0.0
          %785 = vmatmul.mubr.f32.gmra.mrb[0].mxu0 %v627
          %v786 = vpop.f32.mrb[0].mxu0
          %v787 = vadd.f32 %v713, %v786
          %v788 = vpop.f32.mrb[0].mxu0
          %789 = vdwg.mxu0
          %790 = vst.msk [vmem:[#allocation2] sm:$0xff] %vm622, %v696
          %791 = vst.msk [vmem:[#allocation2 + $0x8] sm:$0xff] %vm622, %v701
          %792 = vst.msk [vmem:[#allocation3] sm:$0xff] %vm622, %v782
          %793 = vst.msk [vmem:[#allocation3 + $0x8] sm:$0xff] %vm622, %v787
        $region104: #{tpu_custom_call.1} parent=87 // pred_fallthru
          _
        %s794 = smul.u32 %s38, 8
        %s795 = scalar_lea.vmem %s604, %s794
        %v796 = vld [vmem:[%s795] sm:$0xff]
        %v797 = vld [vmem:[%s1] sm:$0xff]
        %v798 = vld [vmem:[%s1 + $0x8] sm:$0xff]
        %v799 = vld [vmem:[%s1 + $0x10] sm:$0xff]
        %v800 = vld [vmem:[%s1 + $0x18] sm:$0xff]
        %v801 = vld [vmem:[%s2] sm:$0x1]
        %v803 = vlaneseq
        %v804 = vshrl.u32 %v803, 7
        %v805 = vsub.s32 0, %v804
        %v806 = vrot.slane %v801, %v805
        %vm808 = vcmask 261120
        %v810 = vsel %vm808, %v796, 0
        %812 = vmatprep.subr.mxu0 0.0
        %813 = vmatpush1.msra.mxu0 %v797
        %814 = vmatprep.subr.mxu0 0.0
        %815 = vmatpush1.msra.mxu0 %v798
        %816 = vmatprep.subr.mxu0 0.0
        %817 = vmatpush1.msra.mxu0 %v799
        %818 = vmatprep.subr.mxu0 0.0
        %819 = vmatpush1.msra.mxu0 %v800
        %820 = vmatprep.subr.mxu0 0.0
        %821 = vmatpush1.msra.mxu0 0.0
        %822 = vmatprep.subr.mxu0 0.0
        %823 = vmatpush1.msra.mxu0 0.0
        %824 = vmatprep.subr.mxu0 0.0
        %825 = vmatpush1.msra.mxu0 0.0
        %826 = vmatprep.subr.mxu0 0.0
        %827 = vmatpush1.msra.mxu0 0.0
        %828 = vmatprep.subr.mxu0 0.0
        %829 = vmatpush1.msra.mxu0 0.0
        %830 = vmatprep.subr.mxu0 0.0
        %831 = vmatpush1.msra.mxu0 0.0
        %832 = vmatprep.subr.mxu0 0.0
        %833 = vmatpush1.msra.mxu0 0.0
        %834 = vmatprep.subr.mxu0 0.0
        %835 = vmatpush1.msra.mxu0 0.0
        %836 = vmatprep.subr.mxu0 0.0
        %837 = vmatpush1.msra.mxu0 0.0
        %838 = vmatprep.subr.mxu0 0.0
        %839 = vmatpush1.msra.mxu0 0.0
        %840 = vmatprep.subr.mxu0 0.0
        %841 = vmatpush1.msra.mxu0 0.0
        %842 = vmatprep.subr.mxu0 0.0
        %843 = vmatpush1.msra.mxu0 0.0
        %844 = vmatprep.subr.mxu0 0.0
        %845 = vmatpush1.msra.mxu0 0.0
        %846 = vmatprep.subr.mxu0 0.0
        %847 = vmatpush1.msra.mxu0 0.0
        %848 = vmatprep.subr.mxu0 0.0
        %849 = vmatpush1.msra.mxu0 0.0
        %850 = vmatprep.subr.mxu0 0.0
        %851 = vmatpush1.msra.mxu0 0.0
        %852 = vmatprep.subr.mxu0 0.0
        %853 = vmatpush1.msra.mxu0 0.0
        %854 = vmatprep.subr.mxu0 0.0
        %855 = vmatpush1.msra.mxu0 0.0
        %856 = vmatprep.subr.mxu0 0.0
        %857 = vmatpush1.msra.mxu0 0.0
        %858 = vmatprep.subr.mxu0 0.0
        %859 = vmatpush1.msra.mxu0 0.0
        %860 = vmatprep.subr.mxu0 0.0
        %861 = vmatpush1.msra.mxu0 0.0
        %862 = vmatprep.subr.mxu0 0.0
        %863 = vmatpush1.msra.mxu0 0.0
        %864 = vmatprep.subr.mxu0 0.0
        %865 = vmatpush1.msra.mxu0 0.0
        %866 = vmatprep.subr.mxu0 0.0
        %867 = vmatpush1.msra.mxu0 0.0
        %868 = vmatprep.subr.mxu0 0.0
        %869 = vmatpush1.msra.mxu0 0.0
        %870 = vmatprep.subr.mxu0 0.0
        %871 = vmatpush1.msra.mxu0 0.0
        %872 = vmatprep.subr.mxu0 0.0
        %873 = vmatpush1.msra.mxu0 0.0
        %874 = vmatprep.subr.mxu0 0.0
        %875 = vmatpush1.msra.mxu0 0.0
        %876 = vmatprep.mubr.f32.mxu0 0.0
        %877 = vmatmul.mubr.f32.gmra.mrb[0].mxu0 %v810
        %v878 = vpop.f32.mrb[0].mxu0
        %v879 = vadd.f32 %v806, %v878
        %v880 = vpop.f32.mrb[0].mxu0
        %881 = vdwg.mxu0
        %v882 = vld [vmem:[#allocation2] sm:$0xff]
        %v883 = vld [vmem:[#allocation2 + $0x8] sm:$0xff]
        %v884 = vld [vmem:[#allocation3] sm:$0xff]
        %v885 = vld [vmem:[#allocation3 + $0x8] sm:$0xff]
        %vm886 = vcmask 64512
        %v888 = vsel %vm886, %v879, 0
        %v891 = vsel %vm886, %v882, 0
        %v894 = vsel %vm886, %v883, 0
        %896 = vmatprep.subr.mxu0 0.0
        %897 = vmatpush1.xpose.msra.mxu0 %v891
        %898 = vmatprep.subr.mxu0 0.0
        %899 = vmatpush1.xpose.msra.mxu0 %v894
        %900 = vmatprep.subr.mxu0 0.0
        %901 = vmatpush1.xpose.msra.mxu0 0.0
        %902 = vmatprep.subr.mxu0 0.0
        %903 = vmatpush1.xpose.msra.mxu0 0.0
        %904 = vmatprep.subr.mxu0 0.0
        %905 = vmatpush1.xpose.msra.mxu0 0.0
        %906 = vmatprep.subr.mxu0 0.0
        %907 = vmatpush1.xpose.msra.mxu0 0.0
        %908 = vmatprep.subr.mxu0 0.0
        %909 = vmatpush1.xpose.msra.mxu0 0.0
        %910 = vmatprep.subr.mxu0 0.0
        %911 = vmatpush1.xpose.msra.mxu0 0.0
        %912 = vmatprep.subr.mxu0 0.0
        %913 = vmatpush1.xpose.msra.mxu0 0.0
        %914 = vmatprep.subr.mxu0 0.0
        %915 = vmatpush1.xpose.msra.mxu0 0.0
        %916 = vmatprep.subr.mxu0 0.0
        %917 = vmatpush1.xpose.msra.mxu0 0.0
        %918 = vmatprep.subr.mxu0 0.0
        %919 = vmatpush1.xpose.msra.mxu0 0.0
        %920 = vmatprep.subr.mxu0 0.0
        %921 = vmatpush1.xpose.msra.mxu0 0.0
        %922 = vmatprep.subr.mxu0 0.0
        %923 = vmatpush1.xpose.msra.mxu0 0.0
        %924 = vmatprep.subr.mxu0 0.0
        %925 = vmatpush1.xpose.msra.mxu0 0.0
        %926 = vmatprep.subr.mxu0 0.0
        %927 = vmatpush1.xpose.msra.mxu0 0.0
        %928 = vmatprep.subr.mxu0 0.0
        %929 = vmatpush1.xpose.msra.mxu0 0.0
        %930 = vmatprep.subr.mxu0 0.0
        %931 = vmatpush1.xpose.msra.mxu0 0.0
        %932 = vmatprep.subr.mxu0 0.0
        %933 = vmatpush1.xpose.msra.mxu0 0.0
        %934 = vmatprep.subr.mxu0 0.0
        %935 = vmatpush1.xpose.msra.mxu0 0.0
        %936 = vmatprep.subr.mxu0 0.0
        %937 = vmatpush1.xpose.msra.mxu0 0.0
        %938 = vmatprep.subr.mxu0 0.0
        %939 = vmatpush1.xpose.msra.mxu0 0.0
        %940 = vmatprep.subr.mxu0 0.0
        %941 = vmatpush1.xpose.msra.mxu0 0.0
        %942 = vmatprep.subr.mxu0 0.0
        %943 = vmatpush1.xpose.msra.mxu0 0.0
        %944 = vmatprep.subr.mxu0 0.0
        %945 = vmatpush1.xpose.msra.mxu0 0.0
        %946 = vmatprep.subr.mxu0 0.0
        %947 = vmatpush1.xpose.msra.mxu0 0.0
        %948 = vmatprep.subr.mxu0 0.0
        %949 = vmatpush1.xpose.msra.mxu0 0.0
        %950 = vmatprep.subr.mxu0 0.0
        %951 = vmatpush1.xpose.msra.mxu0 0.0
        %952 = vmatprep.subr.mxu0 0.0
        %953 = vmatpush1.xpose.msra.mxu0 0.0
        %954 = vmatprep.subr.mxu0 0.0
        %955 = vmatpush1.xpose.msra.mxu0 0.0
        %956 = vmatprep.subr.mxu0 0.0
        %957 = vmatpush1.xpose.msra.mxu0 0.0
        %958 = vmatprep.subr.mxu0 0.0
        %959 = vmatpush1.xpose.msra.mxu0 0.0
        %960 = vmatprep.mubr.f32.mxu0 0.0
        %961 = vmatmul.mubr.f32.gmra.mrb[0].mxu0 %v888
        %v962 = vpop.f32.mrb[0].mxu0
        %v963 = vadd.f32 0.0, %v962
        %v964 = vpop.f32.mrb[0].mxu0
        %965 = vdwg.mxu0
        %vm966 = vcmask 130048
        %v967 = vsel %vm966, %v963, -inf
        %968 = vmax.xlane.f32.xlu0 %v967
        %v969 = vpop.xlane.xlu0 %968
        %v970 = vsub.f32 %v963, %v969
        %v971 = vmul.f32 %v970, 1.442695
        %v972 = vpow.pop %v971
        %v973 = vsel %vm966, %v972, 0.0
        %974 = vadd.xlane.f32.xlu0 %v973
        %v975 = vpop.xlane.xlu0 %974
        %v976 = vrcp.pop %v975
        %v977 = vmul.f32 %v972, %v976
        %v979 = vsel %vm966, %v977, 0
        %981 = vmatprep.subr.mxu0 0.0
        %982 = vmatpush1.msra.mxu0 %v884
        %983 = vmatprep.subr.mxu0 0.0
        %984 = vmatpush1.msra.mxu0 %v885
        %985 = vmatprep.subr.mxu0 0.0
        %986 = vmatpush1.msra.mxu0 0.0
        %987 = vmatprep.subr.mxu0 0.0
        %988 = vmatpush1.msra.mxu0 0.0
        %989 = vmatprep.subr.mxu0 0.0
        %990 = vmatpush1.msra.mxu0 0.0
        %991 = vmatprep.subr.mxu0 0.0
        %992 = vmatpush1.msra.mxu0 0.0
        %993 = vmatprep.subr.mxu0 0.0
        %994 = vmatpush1.msra.mxu0 0.0
        %995 = vmatprep.subr.mxu0 0.0
        %996 = vmatpush1.msra.mxu0 0.0
        %997 = vmatprep.subr.mxu0 0.0
        %998 = vmatpush1.msra.mxu0 0.0
        %999 = vmatprep.subr.mxu0 0.0
        %1000 = vmatpush1.msra.mxu0 0.0
        %1001 = vmatprep.subr.mxu0 0.0
        %1002 = vmatpush1.msra.mxu0 0.0
        %1003 = vmatprep.subr.mxu0 0.0
        %1004 = vmatpush1.msra.mxu0 0.0
        %1005 = vmatprep.subr.mxu0 0.0
        %1006 = vmatpush1.msra.mxu0 0.0
        %1007 = vmatprep.subr.mxu0 0.0
        %1008 = vmatpush1.msra.mxu0 0.0
        %1009 = vmatprep.subr.mxu0 0.0
        %1010 = vmatpush1.msra.mxu0 0.0
        %1011 = vmatprep.subr.mxu0 0.0
        %1012 = vmatpush1.msra.mxu0 0.0
        %1013 = vmatprep.subr.mxu0 0.0
        %1014 = vmatpush1.msra.mxu0 0.0
        %1015 = vmatprep.subr.mxu0 0.0
        %1016 = vmatpush1.msra.mxu0 0.0
        %1017 = vmatprep.subr.mxu0 0.0
        %1018 = vmatpush1.msra.mxu0 0.0
        %1019 = vmatprep.subr.mxu0 0.0
        %1020 = vmatpush1.msra.mxu0 0.0
        %1021 = vmatprep.subr.mxu0 0.0
        %1022 = vmatpush1.msra.mxu0 0.0
        %1023 = vmatprep.subr.mxu0 0.0
        %1024 = vmatpush1.msra.mxu0 0.0
        %1025 = vmatprep.subr.mxu0 0.0
        %1026 = vmatpush1.msra.mxu0 0.0
        %1027 = vmatprep.subr.mxu0 0.0
        %1028 = vmatpush1.msra.mxu0 0.0
        %1029 = vmatprep.subr.mxu0 0.0
        %1030 = vmatpush1.msra.mxu0 0.0
        %1031 = vmatprep.subr.mxu0 0.0
        %1032 = vmatpush1.msra.mxu0 0.0
        %1033 = vmatprep.subr.mxu0 0.0
        %1034 = vmatpush1.msra.mxu0 0.0
        %1035 = vmatprep.subr.mxu0 0.0
        %1036 = vmatpush1.msra.mxu0 0.0
        %1037 = vmatprep.subr.mxu0 0.0
        %1038 = vmatpush1.msra.mxu0 0.0
        %1039 = vmatprep.subr.mxu0 0.0
        %1040 = vmatpush1.msra.mxu0 0.0
        %1041 = vmatprep.subr.mxu0 0.0
        %1042 = vmatpush1.msra.mxu0 0.0
        %1043 = vmatprep.subr.mxu0 0.0
        %1044 = vmatpush1.msra.mxu0 0.0
        %1045 = vmatprep.mubr.f32.mxu0 0.0
        %1046 = vmatmul.mubr.f32.gmra.mrb[0].mxu0 %v979
        %v1047 = vpop.f32.mrb[0].mxu0
        %v1048 = vadd.f32 0.0, %v1047
        %v1049 = vpop.f32.mrb[0].mxu0
        %1050 = vdwg.mxu0
        %1051 = vst.msk [vmem:[#allocation4] sm:$0xff] %vm886, %v1048
        %1052 = vrot.lane.b32.xlu0 %v879, 120
        %v1053 = vpop.permute.xlu0 %1052
        %1054 = vrot.lane.b32.xlu0 %v882, 120
        %v1055 = vpop.permute.xlu0 %1054
        %1056 = vrot.lane.b32.xlu0 %v883, 120
        %v1057 = vpop.permute.xlu0 %1056
        %v1058 = vsel %vm886, %v1053, 0
        %v1060 = vsel %vm886, %v1055, 0
        %v1062 = vsel %vm886, %v1057, 0
        %1064 = vmatprep.subr.mxu0 0.0
        %1065 = vmatpush1.xpose.msra.mxu0 %v1060
        %1066 = vmatprep.subr.mxu0 0.0
        %1067 = vmatpush1.xpose.msra.mxu0 %v1062
        %1068 = vmatprep.subr.mxu0 0.0
        %1069 = vmatpush1.xpose.msra.mxu0 0.0
        %1070 = vmatprep.subr.mxu0 0.0
        %1071 = vmatpush1.xpose.msra.mxu0 0.0
        %1072 = vmatprep.subr.mxu0 0.0
        %1073 = vmatpush1.xpose.msra.mxu0 0.0
        %1074 = vmatprep.subr.mxu0 0.0
        %1075 = vmatpush1.xpose.msra.mxu0 0.0
        %1076 = vmatprep.subr.mxu0 0.0
        %1077 = vmatpush1.xpose.msra.mxu0 0.0
        %1078 = vmatprep.subr.mxu0 0.0
        %1079 = vmatpush1.xpose.msra.mxu0 0.0
        %1080 = vmatprep.subr.mxu0 0.0
        %1081 = vmatpush1.xpose.msra.mxu0 0.0
        %1082 = vmatprep.subr.mxu0 0.0
        %1083 = vmatpush1.xpose.msra.mxu0 0.0
        %1084 = vmatprep.subr.mxu0 0.0
        %1085 = vmatpush1.xpose.msra.mxu0 0.0
        %1086 = vmatprep.subr.mxu0 0.0
        %1087 = vmatpush1.xpose.msra.mxu0 0.0
        %1088 = vmatprep.subr.mxu0 0.0
        %1089 = vmatpush1.xpose.msra.mxu0 0.0
        %1090 = vmatprep.subr.mxu0 0.0
        %1091 = vmatpush1.xpose.msra.mxu0 0.0
        %1092 = vmatprep.subr.mxu0 0.0
        %1093 = vmatpush1.xpose.msra.mxu0 0.0
        %1094 = vmatprep.subr.mxu0 0.0
        %1095 = vmatpush1.xpose.msra.mxu0 0.0
        %1096 = vmatprep.subr.mxu0 0.0
        %1097 = vmatpush1.xpose.msra.mxu0 0.0
        %1098 = vmatprep.subr.mxu0 0.0
        %1099 = vmatpush1.xpose.msra.mxu0 0.0
        %1100 = vmatprep.subr.mxu0 0.0
        %1101 = vmatpush1.xpose.msra.mxu0 0.0
        %1102 = vmatprep.subr.mxu0 0.0
        %1103 = vmatpush1.xpose.msra.mxu0 0.0
        %1104 = vmatprep.subr.mxu0 0.0
        %1105 = vmatpush1.xpose.msra.mxu0 0.0
        %1106 = vmatprep.subr.mxu0 0.0
        %1107 = vmatpush1.xpose.msra.mxu0 0.0
        %1108 = vmatprep.subr.mxu0 0.0
        %1109 = vmatpush1.xpose.msra.mxu0 0.0
        %1110 = vmatprep.subr.mxu0 0.0
        %1111 = vmatpush1.xpose.msra.mxu0 0.0
        %1112 = vmatprep.subr.mxu0 0.0
        %1113 = vmatpush1.xpose.msra.mxu0 0.0
        %1114 = vmatprep.subr.mxu0 0.0
        %1115 = vmatpush1.xpose.msra.mxu0 0.0
        %1116 = vmatprep.subr.mxu0 0.0
        %1117 = vmatpush1.xpose.msra.mxu0 0.0
        %1118 = vmatprep.subr.mxu0 0.0
        %1119 = vmatpush1.xpose.msra.mxu0 0.0
        %1120 = vmatprep.subr.mxu0 0.0
        %1121 = vmatpush1.xpose.msra.mxu0 0.0
        %1122 = vmatprep.subr.mxu0 0.0
        %1123 = vmatpush1.xpose.msra.mxu0 0.0
        %1124 = vmatprep.subr.mxu0 0.0
        %1125 = vmatpush1.xpose.msra.mxu0 0.0
        %1126 = vmatprep.subr.mxu0 0.0
        %1127 = vmatpush1.xpose.msra.mxu0 0.0
        %1128 = vmatprep.mubr.f32.mxu0 0.0
        %1129 = vmatmul.mubr.f32.gmra.mrb[0].mxu0 %v1058
        %v1130 = vpop.f32.mrb[0].mxu0
        %v1131 = vadd.f32 0.0, %v1130
        %v1132 = vpop.f32.mrb[0].mxu0
        %1133 = vdwg.mxu0
        %v1134 = vsel %vm966, %v1131, -inf
        %1135 = vmax.xlane.f32.xlu0 %v1134
        %v1136 = vpop.xlane.xlu0 %1135
        %v1137 = vsub.f32 %v1131, %v1136
        %v1138 = vmul.f32 %v1137, 1.442695
        %v1139 = vpow.pop %v1138
        %v1140 = vsel %vm966, %v1139, 0.0
        %1141 = vadd.xlane.f32.xlu0 %v1140
        %v1142 = vpop.xlane.xlu0 %1141
        %v1143 = vrcp.pop %v1142
        %v1144 = vmul.f32 %v1139, %v1143
        %1147 = vrot.lane.b32.xlu0 %v884, 120
        %v1148 = vpop.permute.xlu0 %1147
        %1149 = vrot.lane.b32.xlu0 %v885, 120
        %v1150 = vpop.permute.xlu0 %1149
        %v1154 = vsel %vm966, %v1144, 0
        %1156 = vmatprep.subr.mxu0 0.0
        %1157 = vmatpush1.msra.mxu0 %v1148
        %1158 = vmatprep.subr.mxu0 0.0
        %1159 = vmatpush1.msra.mxu0 %v1150
        %1160 = vmatprep.subr.mxu0 0.0
        %1161 = vmatpush1.msra.mxu0 0.0
        %1162 = vmatprep.subr.mxu0 0.0
        %1163 = vmatpush1.msra.mxu0 0.0
        %1164 = vmatprep.subr.mxu0 0.0
        %1165 = vmatpush1.msra.mxu0 0.0
        %1166 = vmatprep.subr.mxu0 0.0
        %1167 = vmatpush1.msra.mxu0 0.0
        %1168 = vmatprep.subr.mxu0 0.0
        %1169 = vmatpush1.msra.mxu0 0.0
        %1170 = vmatprep.subr.mxu0 0.0
        %1171 = vmatpush1.msra.mxu0 0.0
        %1172 = vmatprep.subr.mxu0 0.0
        %1173 = vmatpush1.msra.mxu0 0.0
        %1174 = vmatprep.subr.mxu0 0.0
        %1175 = vmatpush1.msra.mxu0 0.0
        %1176 = vmatprep.subr.mxu0 0.0
        %1177 = vmatpush1.msra.mxu0 0.0
        %1178 = vmatprep.subr.mxu0 0.0
        %1179 = vmatpush1.msra.mxu0 0.0
        %1180 = vmatprep.subr.mxu0 0.0
        %1181 = vmatpush1.msra.mxu0 0.0
        %1182 = vmatprep.subr.mxu0 0.0
        %1183 = vmatpush1.msra.mxu0 0.0
        %1184 = vmatprep.subr.mxu0 0.0
        %1185 = vmatpush1.msra.mxu0 0.0
        %1186 = vmatprep.subr.mxu0 0.0
        %1187 = vmatpush1.msra.mxu0 0.0
        %1188 = vmatprep.subr.mxu0 0.0
        %1189 = vmatpush1.msra.mxu0 0.0
        %1190 = vmatprep.subr.mxu0 0.0
        %1191 = vmatpush1.msra.mxu0 0.0
        %1192 = vmatprep.subr.mxu0 0.0
        %1193 = vmatpush1.msra.mxu0 0.0
        %1194 = vmatprep.subr.mxu0 0.0
        %1195 = vmatpush1.msra.mxu0 0.0
        %1196 = vmatprep.subr.mxu0 0.0
        %1197 = vmatpush1.msra.mxu0 0.0
        %1198 = vmatprep.subr.mxu0 0.0
        %1199 = vmatpush1.msra.mxu0 0.0
        %1200 = vmatprep.subr.mxu0 0.0
        %1201 = vmatpush1.msra.mxu0 0.0
        %1202 = vmatprep.subr.mxu0 0.0
        %1203 = vmatpush1.msra.mxu0 0.0
        %1204 = vmatprep.subr.mxu0 0.0
        %1205 = vmatpush1.msra.mxu0 0.0
        %1206 = vmatprep.subr.mxu0 0.0
        %1207 = vmatpush1.msra.mxu0 0.0
        %1208 = vmatprep.subr.mxu0 0.0
        %1209 = vmatpush1.msra.mxu0 0.0
        %1210 = vmatprep.subr.mxu0 0.0
        %1211 = vmatpush1.msra.mxu0 0.0
        %1212 = vmatprep.subr.mxu0 0.0
        %1213 = vmatpush1.msra.mxu0 0.0
        %1214 = vmatprep.subr.mxu0 0.0
        %1215 = vmatpush1.msra.mxu0 0.0
        %1216 = vmatprep.subr.mxu0 0.0
        %1217 = vmatpush1.msra.mxu0 0.0
        %1218 = vmatprep.subr.mxu0 0.0
        %1219 = vmatpush1.msra.mxu0 0.0
        %1220 = vmatprep.mubr.f32.mxu0 0.0
        %1221 = vmatmul.mubr.f32.gmra.mrb[0].mxu0 %v1154
        %v1222 = vpop.f32.mrb[0].mxu0
        %v1223 = vadd.f32 0.0, %v1222
        %v1224 = vpop.f32.mrb[0].mxu0
        %1225 = vdwg.mxu0
        %1227 = vrot.lane.b32.xlu0 %v1223, 8
        %v1228 = vpop.permute.xlu0 %1227
        %vm1230 = vcmask 130112
        %1231 = vst.msk [vmem:[#allocation4] sm:$0xff] %vm1230, %v1228
        %1232 = vrot.lane.b32.xlu0 %v879, 112
        %v1233 = vpop.permute.xlu0 %1232
        %1234 = vrot.lane.b32.xlu0 %v882, 112
        %v1235 = vpop.permute.xlu0 %1234
        %1236 = vrot.lane.b32.xlu0 %v883, 112
        %v1237 = vpop.permute.xlu0 %1236
        %v1238 = vsel %vm886, %v1233, 0
        %v1240 = vsel %vm886, %v1235, 0
        %v1242 = vsel %vm886, %v1237, 0
        %1244 = vmatprep.subr.mxu0 0.0
        %1245 = vmatpush1.xpose.msra.mxu0 %v1240
        %1246 = vmatprep.subr.mxu0 0.0
        %1247 = vmatpush1.xpose.msra.mxu0 %v1242
        %1248 = vmatprep.subr.mxu0 0.0
        %1249 = vmatpush1.xpose.msra.mxu0 0.0
        %1250 = vmatprep.subr.mxu0 0.0
        %1251 = vmatpush1.xpose.msra.mxu0 0.0
        %1252 = vmatprep.subr.mxu0 0.0
        %1253 = vmatpush1.xpose.msra.mxu0 0.0
        %1254 = vmatprep.subr.mxu0 0.0
        %1255 = vmatpush1.xpose.msra.mxu0 0.0
        %1256 = vmatprep.subr.mxu0 0.0
        %1257 = vmatpush1.xpose.msra.mxu0 0.0
        %1258 = vmatprep.subr.mxu0 0.0
        %1259 = vmatpush1.xpose.msra.mxu0 0.0
        %1260 = vmatprep.subr.mxu0 0.0
        %1261 = vmatpush1.xpose.msra.mxu0 0.0
        %1262 = vmatprep.subr.mxu0 0.0
        %1263 = vmatpush1.xpose.msra.mxu0 0.0
        %1264 = vmatprep.subr.mxu0 0.0
        %1265 = vmatpush1.xpose.msra.mxu0 0.0
        %1266 = vmatprep.subr.mxu0 0.0
        %1267 = vmatpush1.xpose.msra.mxu0 0.0
        %1268 = vmatprep.subr.mxu0 0.0
        %1269 = vmatpush1.xpose.msra.mxu0 0.0
        %1270 = vmatprep.subr.mxu0 0.0
        %1271 = vmatpush1.xpose.msra.mxu0 0.0
        %1272 = vmatprep.subr.mxu0 0.0
        %1273 = vmatpush1.xpose.msra.mxu0 0.0
        %1274 = vmatprep.subr.mxu0 0.0
        %1275 = vmatpush1.xpose.msra.mxu0 0.0
        %1276 = vmatprep.subr.mxu0 0.0
        %1277 = vmatpush1.xpose.msra.mxu0 0.0
        %1278 = vmatprep.subr.mxu0 0.0
        %1279 = vmatpush1.xpose.msra.mxu0 0.0
        %1280 = vmatprep.subr.mxu0 0.0
        %1281 = vmatpush1.xpose.msra.mxu0 0.0
        %1282 = vmatprep.subr.mxu0 0.0
        %1283 = vmatpush1.xpose.msra.mxu0 0.0
        %1284 = vmatprep.subr.mxu0 0.0
        %1285 = vmatpush1.xpose.msra.mxu0 0.0
        %1286 = vmatprep.subr.mxu0 0.0
        %1287 = vmatpush1.xpose.msra.mxu0 0.0
        %1288 = vmatprep.subr.mxu0 0.0
        %1289 = vmatpush1.xpose.msra.mxu0 0.0
        %1290 = vmatprep.subr.mxu0 0.0
        %1291 = vmatpush1.xpose.msra.mxu0 0.0
        %1292 = vmatprep.subr.mxu0 0.0
        %1293 = vmatpush1.xpose.msra.mxu0 0.0
        %1294 = vmatprep.subr.mxu0 0.0
        %1295 = vmatpush1.xpose.msra.mxu0 0.0
        %1296 = vmatprep.subr.mxu0 0.0
        %1297 = vmatpush1.xpose.msra.mxu0 0.0
        %1298 = vmatprep.subr.mxu0 0.0
        %1299 = vmatpush1.xpose.msra.mxu0 0.0
        %1300 = vmatprep.subr.mxu0 0.0
        %1301 = vmatpush1.xpose.msra.mxu0 0.0
        %1302 = vmatprep.subr.mxu0 0.0
        %1303 = vmatpush1.xpose.msra.mxu0 0.0
        %1304 = vmatprep.subr.mxu0 0.0
        %1305 = vmatpush1.xpose.msra.mxu0 0.0
        %1306 = vmatprep.subr.mxu0 0.0
        %1307 = vmatpush1.xpose.msra.mxu0 0.0
        %1308 = vmatprep.mubr.f32.mxu0 0.0
        %1309 = vmatmul.mubr.f32.gmra.mrb[0].mxu0 %v1238
        %v1310 = vpop.f32.mrb[0].mxu0
        %v1311 = vadd.f32 0.0, %v1310
        %v1312 = vpop.f32.mrb[0].mxu0
        %1313 = vdwg.mxu0
        %v1314 = vsel %vm966, %v1311, -inf
        %1315 = vmax.xlane.f32.xlu0 %v1314
        %v1316 = vpop.xlane.xlu0 %1315
        %v1317 = vsub.f32 %v1311, %v1316
        %v1318 = vmul.f32 %v1317, 1.442695
        %v1319 = vpow.pop %v1318
        %v1320 = vsel %vm966, %v1319, 0.0
        %1321 = vadd.xlane.f32.xlu0 %v1320
        %v1322 = vpop.xlane.xlu0 %1321
        %v1323 = vrcp.pop %v1322
        %v1324 = vmul.f32 %v1319, %v1323
        %1325 = vrot.lane.b32.xlu0 %v884, 112
        %v1326 = vpop.permute.xlu0 %1325
        %1327 = vrot.lane.b32.xlu0 %v885, 112
        %v1328 = vpop.permute.xlu0 %1327
        %v1332 = vsel %vm966, %v1324, 0
        %1334 = vmatprep.subr.mxu0 0.0
        %1335 = vmatpush1.msra.mxu0 %v1326
        %1336 = vmatprep.subr.mxu0 0.0
        %1337 = vmatpush1.msra.mxu0 %v1328
        %1338 = vmatprep.subr.mxu0 0.0
        %1339 = vmatpush1.msra.mxu0 0.0
        %1340 = vmatprep.subr.mxu0 0.0
        %1341 = vmatpush1.msra.mxu0 0.0
        %1342 = vmatprep.subr.mxu0 0.0
        %1343 = vmatpush1.msra.mxu0 0.0
        %1344 = vmatprep.subr.mxu0 0.0
        %1345 = vmatpush1.msra.mxu0 0.0
        %1346 = vmatprep.subr.mxu0 0.0
        %1347 = vmatpush1.msra.mxu0 0.0
        %1348 = vmatprep.subr.mxu0 0.0
        %1349 = vmatpush1.msra.mxu0 0.0
        %1350 = vmatprep.subr.mxu0 0.0
        %1351 = vmatpush1.msra.mxu0 0.0
        %1352 = vmatprep.subr.mxu0 0.0
        %1353 = vmatpush1.msra.mxu0 0.0
        %1354 = vmatprep.subr.mxu0 0.0
        %1355 = vmatpush1.msra.mxu0 0.0
        %1356 = vmatprep.subr.mxu0 0.0
        %1357 = vmatpush1.msra.mxu0 0.0
        %1358 = vmatprep.subr.mxu0 0.0
        %1359 = vmatpush1.msra.mxu0 0.0
        %1360 = vmatprep.subr.mxu0 0.0
        %1361 = vmatpush1.msra.mxu0 0.0
        %1362 = vmatprep.subr.mxu0 0.0
        %1363 = vmatpush1.msra.mxu0 0.0
        %1364 = vmatprep.subr.mxu0 0.0
        %1365 = vmatpush1.msra.mxu0 0.0
        %1366 = vmatprep.subr.mxu0 0.0
        %1367 = vmatpush1.msra.mxu0 0.0
        %1368 = vmatprep.subr.mxu0 0.0
        %1369 = vmatpush1.msra.mxu0 0.0
        %1370 = vmatprep.subr.mxu0 0.0
        %1371 = vmatpush1.msra.mxu0 0.0
        %1372 = vmatprep.subr.mxu0 0.0
        %1373 = vmatpush1.msra.mxu0 0.0
        %1374 = vmatprep.subr.mxu0 0.0
        %1375 = vmatpush1.msra.mxu0 0.0
        %1376 = vmatprep.subr.mxu0 0.0
        %1377 = vmatpush1.msra.mxu0 0.0
        %1378 = vmatprep.subr.mxu0 0.0
        %1379 = vmatpush1.msra.mxu0 0.0
        %1380 = vmatprep.subr.mxu0 0.0
        %1381 = vmatpush1.msra.mxu0 0.0
        %1382 = vmatprep.subr.mxu0 0.0
        %1383 = vmatpush1.msra.mxu0 0.0
        %1384 = vmatprep.subr.mxu0 0.0
        %1385 = vmatpush1.msra.mxu0 0.0
        %1386 = vmatprep.subr.mxu0 0.0
        %1387 = vmatpush1.msra.mxu0 0.0
        %1388 = vmatprep.subr.mxu0 0.0
        %1389 = vmatpush1.msra.mxu0 0.0
        %1390 = vmatprep.subr.mxu0 0.0
        %1391 = vmatpush1.msra.mxu0 0.0
        %1392 = vmatprep.subr.mxu0 0.0
        %1393 = vmatpush1.msra.mxu0 0.0
        %1394 = vmatprep.subr.mxu0 0.0
        %1395 = vmatpush1.msra.mxu0 0.0
        %1396 = vmatprep.subr.mxu0 0.0
        %1397 = vmatpush1.msra.mxu0 0.0
        %1398 = vmatprep.mubr.f32.mxu0 0.0
        %1399 = vmatmul.mubr.f32.gmra.mrb[0].mxu0 %v1332
        %v1400 = vpop.f32.mrb[0].mxu0
        %v1401 = vadd.f32 0.0, %v1400
        %v1402 = vpop.f32.mrb[0].mxu0
        %1403 = vdwg.mxu0
        %1405 = vrot.lane.b32.xlu0 %v1401, 16
        %v1406 = vpop.permute.xlu0 %1405
        %vm1408 = vcmask 195712
        %1409 = vst.msk [vmem:[#allocation4] sm:$0xff] %vm1408, %v1406
        %1410 = vrot.lane.b32.xlu0 %v879, 104
        %v1411 = vpop.permute.xlu0 %1410
        %1412 = vrot.lane.b32.xlu0 %v882, 104
        %v1413 = vpop.permute.xlu0 %1412
        %1414 = vrot.lane.b32.xlu0 %v883, 104
        %v1415 = vpop.permute.xlu0 %1414
        %v1416 = vsel %vm886, %v1411, 0
        %v1418 = vsel %vm886, %v1413, 0
        %v1420 = vsel %vm886, %v1415, 0
        %1422 = vmatprep.subr.mxu0 0.0
        %1423 = vmatpush1.xpose.msra.mxu0 %v1418
        %1424 = vmatprep.subr.mxu0 0.0
        %1425 = vmatpush1.xpose.msra.mxu0 %v1420
        %1426 = vmatprep.subr.mxu0 0.0
        %1427 = vmatpush1.xpose.msra.mxu0 0.0
        %1428 = vmatprep.subr.mxu0 0.0
        %1429 = vmatpush1.xpose.msra.mxu0 0.0
        %1430 = vmatprep.subr.mxu0 0.0
        %1431 = vmatpush1.xpose.msra.mxu0 0.0
        %1432 = vmatprep.subr.mxu0 0.0
        %1433 = vmatpush1.xpose.msra.mxu0 0.0
        %1434 = vmatprep.subr.mxu0 0.0
        %1435 = vmatpush1.xpose.msra.mxu0 0.0
        %1436 = vmatprep.subr.mxu0 0.0
        %1437 = vmatpush1.xpose.msra.mxu0 0.0
        %1438 = vmatprep.subr.mxu0 0.0
        %1439 = vmatpush1.xpose.msra.mxu0 0.0
        %1440 = vmatprep.subr.mxu0 0.0
        %1441 = vmatpush1.xpose.msra.mxu0 0.0
        %1442 = vmatprep.subr.mxu0 0.0
        %1443 = vmatpush1.xpose.msra.mxu0 0.0
        %1444 = vmatprep.subr.mxu0 0.0
        %1445 = vmatpush1.xpose.msra.mxu0 0.0
        %1446 = vmatprep.subr.mxu0 0.0
        %1447 = vmatpush1.xpose.msra.mxu0 0.0
        %1448 = vmatprep.subr.mxu0 0.0
        %1449 = vmatpush1.xpose.msra.mxu0 0.0
        %1450 = vmatprep.subr.mxu0 0.0
        %1451 = vmatpush1.xpose.msra.mxu0 0.0
        %1452 = vmatprep.subr.mxu0 0.0
        %1453 = vmatpush1.xpose.msra.mxu0 0.0
        %1454 = vmatprep.subr.mxu0 0.0
        %1455 = vmatpush1.xpose.msra.mxu0 0.0
        %1456 = vmatprep.subr.mxu0 0.0
        %1457 = vmatpush1.xpose.msra.mxu0 0.0
        %1458 = vmatprep.subr.mxu0 0.0
        %1459 = vmatpush1.xpose.msra.mxu0 0.0
        %1460 = vmatprep.subr.mxu0 0.0
        %1461 = vmatpush1.xpose.msra.mxu0 0.0
        %1462 = vmatprep.subr.mxu0 0.0
        %1463 = vmatpush1.xpose.msra.mxu0 0.0
        %1464 = vmatprep.subr.mxu0 0.0
        %1465 = vmatpush1.xpose.msra.mxu0 0.0
        %1466 = vmatprep.subr.mxu0 0.0
        %1467 = vmatpush1.xpose.msra.mxu0 0.0
        %1468 = vmatprep.subr.mxu0 0.0
        %1469 = vmatpush1.xpose.msra.mxu0 0.0
        %1470 = vmatprep.subr.mxu0 0.0
        %1471 = vmatpush1.xpose.msra.mxu0 0.0
        %1472 = vmatprep.subr.mxu0 0.0
        %1473 = vmatpush1.xpose.msra.mxu0 0.0
        %1474 = vmatprep.subr.mxu0 0.0
        %1475 = vmatpush1.xpose.msra.mxu0 0.0
        %1476 = vmatprep.subr.mxu0 0.0
        %1477 = vmatpush1.xpose.msra.mxu0 0.0
        %1478 = vmatprep.subr.mxu0 0.0
        %1479 = vmatpush1.xpose.msra.mxu0 0.0
        %1480 = vmatprep.subr.mxu0 0.0
        %1481 = vmatpush1.xpose.msra.mxu0 0.0
        %1482 = vmatprep.subr.mxu0 0.0
        %1483 = vmatpush1.xpose.msra.mxu0 0.0
        %1484 = vmatprep.subr.mxu0 0.0
        %1485 = vmatpush1.xpose.msra.mxu0 0.0
        %1486 = vmatprep.mubr.f32.mxu0 0.0
        %1487 = vmatmul.mubr.f32.gmra.mrb[0].mxu0 %v1416
        %v1488 = vpop.f32.mrb[0].mxu0
        %v1489 = vadd.f32 0.0, %v1488
        %v1490 = vpop.f32.mrb[0].mxu0
        %1491 = vdwg.mxu0
        %v1492 = vsel %vm966, %v1489, -inf
        %1493 = vmax.xlane.f32.xlu0 %v1492
        %v1494 = vpop.xlane.xlu0 %1493
        %v1495 = vsub.f32 %v1489, %v1494
        %v1496 = vmul.f32 %v1495, 1.442695
        %v1497 = vpow.pop %v1496
        %v1498 = vsel %vm966, %v1497, 0.0
        %1499 = vadd.xlane.f32.xlu0 %v1498
        %v1500 = vpop.xlane.xlu0 %1499
        %v1501 = vrcp.pop %v1500
        %v1502 = vmul.f32 %v1497, %v1501
        %1503 = vrot.lane.b32.xlu0 %v884, 104
        %v1504 = vpop.permute.xlu0 %1503
        %1505 = vrot.lane.b32.xlu0 %v885, 104
        %v1506 = vpop.permute.xlu0 %1505
        %v1510 = vsel %vm966, %v1502, 0
        %1512 = vmatprep.subr.mxu0 0.0
        %1513 = vmatpush1.msra.mxu0 %v1504
        %1514 = vmatprep.subr.mxu0 0.0
        %1515 = vmatpush1.msra.mxu0 %v1506
        %1516 = vmatprep.subr.mxu0 0.0
        %1517 = vmatpush1.msra.mxu0 0.0
        %1518 = vmatprep.subr.mxu0 0.0
        %1519 = vmatpush1.msra.mxu0 0.0
        %1520 = vmatprep.subr.mxu0 0.0
        %1521 = vmatpush1.msra.mxu0 0.0
        %1522 = vmatprep.subr.mxu0 0.0
        %1523 = vmatpush1.msra.mxu0 0.0
        %1524 = vmatprep.subr.mxu0 0.0
        %1525 = vmatpush1.msra.mxu0 0.0
        %1526 = vmatprep.subr.mxu0 0.0
        %1527 = vmatpush1.msra.mxu0 0.0
        %1528 = vmatprep.subr.mxu0 0.0
        %1529 = vmatpush1.msra.mxu0 0.0
        %1530 = vmatprep.subr.mxu0 0.0
        %1531 = vmatpush1.msra.mxu0 0.0
        %1532 = vmatprep.subr.mxu0 0.0
        %1533 = vmatpush1.msra.mxu0 0.0
        %1534 = vmatprep.subr.mxu0 0.0
        %1535 = vmatpush1.msra.mxu0 0.0
        %1536 = vmatprep.subr.mxu0 0.0
        %1537 = vmatpush1.msra.mxu0 0.0
        %1538 = vmatprep.subr.mxu0 0.0
        %1539 = vmatpush1.msra.mxu0 0.0
        %1540 = vmatprep.subr.mxu0 0.0
        %1541 = vmatpush1.msra.mxu0 0.0
        %1542 = vmatprep.subr.mxu0 0.0
        %1543 = vmatpush1.msra.mxu0 0.0
        %1544 = vmatprep.subr.mxu0 0.0
        %1545 = vmatpush1.msra.mxu0 0.0
        %1546 = vmatprep.subr.mxu0 0.0
        %1547 = vmatpush1.msra.mxu0 0.0
        %1548 = vmatprep.subr.mxu0 0.0
        %1549 = vmatpush1.msra.mxu0 0.0
        %1550 = vmatprep.subr.mxu0 0.0
        %1551 = vmatpush1.msra.mxu0 0.0
        %1552 = vmatprep.subr.mxu0 0.0
        %1553 = vmatpush1.msra.mxu0 0.0
        %1554 = vmatprep.subr.mxu0 0.0
        %1555 = vmatpush1.msra.mxu0 0.0
        %1556 = vmatprep.subr.mxu0 0.0
        %1557 = vmatpush1.msra.mxu0 0.0
        %1558 = vmatprep.subr.mxu0 0.0
        %1559 = vmatpush1.msra.mxu0 0.0
        %1560 = vmatprep.subr.mxu0 0.0
        %1561 = vmatpush1.msra.mxu0 0.0
        %1562 = vmatprep.subr.mxu0 0.0
        %1563 = vmatpush1.msra.mxu0 0.0
        %1564 = vmatprep.subr.mxu0 0.0
        %1565 = vmatpush1.msra.mxu0 0.0
        %1566 = vmatprep.subr.mxu0 0.0
        %1567 = vmatpush1.msra.mxu0 0.0
        %1568 = vmatprep.subr.mxu0 0.0
        %1569 = vmatpush1.msra.mxu0 0.0
        %1570 = vmatprep.subr.mxu0 0.0
        %1571 = vmatpush1.msra.mxu0 0.0
        %1572 = vmatprep.subr.mxu0 0.0
        %1573 = vmatpush1.msra.mxu0 0.0
        %1574 = vmatprep.subr.mxu0 0.0
        %1575 = vmatpush1.msra.mxu0 0.0
        %1576 = vmatprep.mubr.f32.mxu0 0.0
        %1577 = vmatmul.mubr.f32.gmra.mrb[0].mxu0 %v1510
        %v1578 = vpop.f32.mrb[0].mxu0
        %v1579 = vadd.f32 0.0, %v1578
        %v1580 = vpop.f32.mrb[0].mxu0
        %1581 = vdwg.mxu0
        %1583 = vrot.lane.b32.xlu0 %v1579, 24
        %v1584 = vpop.permute.xlu0 %1583
        %vm1586 = vcmask 261312
        %1587 = vst.msk [vmem:[#allocation4] sm:$0xff] %vm1586, %v1584
        %v1588 = vld [vmem:[#allocation4] sm:$0xff]
        %v1589 = vld [vmem:[#allocation8] sm:$0xff]
        %v1590 = vld [vmem:[#allocation8 + $0x8] sm:$0xff]
        %v1591 = vld [vmem:[#allocation8 + $0x10] sm:$0xff]
        %v1592 = vld [vmem:[#allocation8 + $0x18] sm:$0xff]
        %v1593 = vld [vmem:[%s8] sm:$0x1]
        %v1595 = vlaneseq
        %v1596 = vshrl.u32 %v1595, 7
        %v1597 = vsub.s32 0, %v1596
        %v1598 = vrot.slane %v1593, %v1597
        %v1601 = vsel %vm808, %v1588, 0
        %1603 = vmatprep.subr.mxu0 0.0
        %1604 = vmatpush1.msra.mxu0 %v1589
        %1605 = vmatprep.subr.mxu0 0.0
        %1606 = vmatpush1.msra.mxu0 %v1590
        %1607 = vmatprep.subr.mxu0 0.0
        %1608 = vmatpush1.msra.mxu0 %v1591
        %1609 = vmatprep.subr.mxu0 0.0
        %1610 = vmatpush1.msra.mxu0 %v1592
        %1611 = vmatprep.subr.mxu0 0.0
        %1612 = vmatpush1.msra.mxu0 0.0
        %1613 = vmatprep.subr.mxu0 0.0
        %1614 = vmatpush1.msra.mxu0 0.0
        %1615 = vmatprep.subr.mxu0 0.0
        %1616 = vmatpush1.msra.mxu0 0.0
        %1617 = vmatprep.subr.mxu0 0.0
        %1618 = vmatpush1.msra.mxu0 0.0
        %1619 = vmatprep.subr.mxu0 0.0
        %1620 = vmatpush1.msra.mxu0 0.0
        %1621 = vmatprep.subr.mxu0 0.0
        %1622 = vmatpush1.msra.mxu0 0.0
        %1623 = vmatprep.subr.mxu0 0.0
        %1624 = vmatpush1.msra.mxu0 0.0
        %1625 = vmatprep.subr.mxu0 0.0
        %1626 = vmatpush1.msra.mxu0 0.0
        %1627 = vmatprep.subr.mxu0 0.0
        %1628 = vmatpush1.msra.mxu0 0.0
        %1629 = vmatprep.subr.mxu0 0.0
        %1630 = vmatpush1.msra.mxu0 0.0
        %1631 = vmatprep.subr.mxu0 0.0
        %1632 = vmatpush1.msra.mxu0 0.0
        %1633 = vmatprep.subr.mxu0 0.0
        %1634 = vmatpush1.msra.mxu0 0.0
        %1635 = vmatprep.subr.mxu0 0.0
        %1636 = vmatpush1.msra.mxu0 0.0
        %1637 = vmatprep.subr.mxu0 0.0
        %1638 = vmatpush1.msra.mxu0 0.0
        %1639 = vmatprep.subr.mxu0 0.0
        %1640 = vmatpush1.msra.mxu0 0.0
        %1641 = vmatprep.subr.mxu0 0.0
        %1642 = vmatpush1.msra.mxu0 0.0
        %1643 = vmatprep.subr.mxu0 0.0
        %1644 = vmatpush1.msra.mxu0 0.0
        %1645 = vmatprep.subr.mxu0 0.0
        %1646 = vmatpush1.msra.mxu0 0.0
        %1647 = vmatprep.subr.mxu0 0.0
        %1648 = vmatpush1.msra.mxu0 0.0
        %1649 = vmatprep.subr.mxu0 0.0
        %1650 = vmatpush1.msra.mxu0 0.0
        %1651 = vmatprep.subr.mxu0 0.0
        %1652 = vmatpush1.msra.mxu0 0.0
        %1653 = vmatprep.subr.mxu0 0.0
        %1654 = vmatpush1.msra.mxu0 0.0
        %1655 = vmatprep.subr.mxu0 0.0
        %1656 = vmatpush1.msra.mxu0 0.0
        %1657 = vmatprep.subr.mxu0 0.0
        %1658 = vmatpush1.msra.mxu0 0.0
        %1659 = vmatprep.subr.mxu0 0.0
        %1660 = vmatpush1.msra.mxu0 0.0
        %1661 = vmatprep.subr.mxu0 0.0
        %1662 = vmatpush1.msra.mxu0 0.0
        %1663 = vmatprep.subr.mxu0 0.0
        %1664 = vmatpush1.msra.mxu0 0.0
        %1665 = vmatprep.subr.mxu0 0.0
        %1666 = vmatpush1.msra.mxu0 0.0
        %1667 = vmatprep.mubr.f32.mxu0 0.0
        %1668 = vmatmul.mubr.f32.gmra.mrb[0].mxu0 %v1601
        %v1669 = vpop.f32.mrb[0].mxu0
        %v1670 = vadd.f32 %v1598, %v1669
        %v1671 = vpop.f32.mrb[0].mxu0
        %1672 = vdwg.mxu0
        %v1673 = vadd.f32 %v796, %v1670
        %v1674 = vsel %vm808, %v1673, 0.0
        %1675 = vadd.xlane.f32.xlu0 %v1674
        %v1676 = vpop.xlane.xlu0 %1675
        %v1677 = vrcp.pop 32.0
        %v1678 = vmul.f32 %v1676, %v1677
        %v1679 = vsub.f32 %v1673, %v1678
        %v1680 = vmul.f32 %v1679, %v1679
        %v1681 = vsel %vm808, %v1680, 0.0
        %1682 = vadd.xlane.f32.xlu0 %v1681
        %v1683 = vpop.xlane.xlu0 %1682
        %v1684 = vmul.f32 %v1683, %v1677
        %v1685 = vadd.f32 %v1684, 1e-05
        %v1686 = vrsqrt.pop %v1685
        %v1687 = vmul.f32 %v1679, %v1686
        %v1688 = vld [vmem:[%s13] sm:$0x1]
        %v1690 = vlaneseq
        %v1691 = vshrl.u32 %v1690, 7
        %v1692 = vsub.s32 0, %v1691
        %v1693 = vrot.slane %v1688, %v1692
        %v1695 = vmul.f32 %v1687, %v1693
        %v1696 = vld [vmem:[%s14] sm:$0x1]
        %v1698 = vlaneseq
        %v1699 = vshrl.u32 %v1698, 7
        %v1700 = vsub.s32 0, %v1699
        %v1701 = vrot.slane %v1696, %v1700
        %v1703 = vadd.f32 %v1695, %v1701
        %v1704 = vld [vmem:[#allocation10] sm:$0xff]
        %v1705 = vld [vmem:[#allocation10 + $0x8] sm:$0xff]
        %v1706 = vld [vmem:[#allocation10 + $0x10] sm:$0xff]
        %v1707 = vld [vmem:[#allocation10 + $0x18] sm:$0xff]
        %v1708 = vld [vmem:[%s10] sm:$0x1]
        %v1710 = vlaneseq
        %v1711 = vshrl.u32 %v1710, 7
        %v1712 = vsub.s32 0, %v1711
        %v1713 = vrot.slane %v1708, %v1712
        %v1716 = vsel %vm808, %v1703, 0
        %1718 = vmatprep.subr.mxu0 0.0
        %1719 = vmatpush1.msra.mxu0 %v1704
        %1720 = vmatprep.subr.mxu0 0.0
        %1721 = vmatpush1.msra.mxu0 %v1705
        %1722 = vmatprep.subr.mxu0 0.0
        %1723 = vmatpush1.msra.mxu0 %v1706
        %1724 = vmatprep.subr.mxu0 0.0
        %1725 = vmatpush1.msra.mxu0 %v1707
        %1726 = vmatprep.subr.mxu0 0.0
        %1727 = vmatpush1.msra.mxu0 0.0
        %1728 = vmatprep.subr.mxu0 0.0
        %1729 = vmatpush1.msra.mxu0 0.0
        %1730 = vmatprep.subr.mxu0 0.0
        %1731 = vmatpush1.msra.mxu0 0.0
        %1732 = vmatprep.subr.mxu0 0.0
        %1733 = vmatpush1.msra.mxu0 0.0
        %1734 = vmatprep.subr.mxu0 0.0
        %1735 = vmatpush1.msra.mxu0 0.0
        %1736 = vmatprep.subr.mxu0 0.0
        %1737 = vmatpush1.msra.mxu0 0.0
        %1738 = vmatprep.subr.mxu0 0.0
        %1739 = vmatpush1.msra.mxu0 0.0
        %1740 = vmatprep.subr.mxu0 0.0
        %1741 = vmatpush1.msra.mxu0 0.0
        %1742 = vmatprep.subr.mxu0 0.0
        %1743 = vmatpush1.msra.mxu0 0.0
        %1744 = vmatprep.subr.mxu0 0.0
        %1745 = vmatpush1.msra.mxu0 0.0
        %1746 = vmatprep.subr.mxu0 0.0
        %1747 = vmatpush1.msra.mxu0 0.0
        %1748 = vmatprep.subr.mxu0 0.0
        %1749 = vmatpush1.msra.mxu0 0.0
        %1750 = vmatprep.subr.mxu0 0.0
        %1751 = vmatpush1.msra.mxu0 0.0
        %1752 = vmatprep.subr.mxu0 0.0
        %1753 = vmatpush1.msra.mxu0 0.0
        %1754 = vmatprep.subr.mxu0 0.0
        %1755 = vmatpush1.msra.mxu0 0.0
        %1756 = vmatprep.subr.mxu0 0.0
        %1757 = vmatpush1.msra.mxu0 0.0
        %1758 = vmatprep.subr.mxu0 0.0
        %1759 = vmatpush1.msra.mxu0 0.0
        %1760 = vmatprep.subr.mxu0 0.0
        %1761 = vmatpush1.msra.mxu0 0.0
        %1762 = vmatprep.subr.mxu0 0.0
        %1763 = vmatpush1.msra.mxu0 0.0
        %1764 = vmatprep.subr.mxu0 0.0
        %1765 = vmatpush1.msra.mxu0 0.0
        %1766 = vmatprep.subr.mxu0 0.0
        %1767 = vmatpush1.msra.mxu0 0.0
        %1768 = vmatprep.subr.mxu0 0.0
        %1769 = vmatpush1.msra.mxu0 0.0
        %1770 = vmatprep.subr.mxu0 0.0
        %1771 = vmatpush1.msra.mxu0 0.0
        %1772 = vmatprep.subr.mxu0 0.0
        %1773 = vmatpush1.msra.mxu0 0.0
        %1774 = vmatprep.subr.mxu0 0.0
        %1775 = vmatpush1.msra.mxu0 0.0
        %1776 = vmatprep.subr.mxu0 0.0
        %1777 = vmatpush1.msra.mxu0 0.0
        %1778 = vmatprep.subr.mxu0 0.0
        %1779 = vmatpush1.msra.mxu0 0.0
        %1780 = vmatprep.subr.mxu0 0.0
        %1781 = vmatpush1.msra.mxu0 0.0
        %1782 = vmatprep.mubr.f32.mxu0 0.0
        %1783 = vmatmul.mubr.f32.gmra.mrb[0].mxu0 %v1716
        %v1784 = vpop.f32.mrb[0].mxu0
        %v1785 = vadd.f32 %v1713, %v1784
        %v1786 = vpop.f32.mrb[0].mxu0
        %1787 = vdwg.mxu0
        %v1788 = vmax.f32 %v1785, 0.0
        %v1789 = vld [vmem:[%s11] sm:$0xff]
        %v1790 = vld [vmem:[%s11 + $0x8] sm:$0xff]
        %v1791 = vld [vmem:[%s11 + $0x10] sm:$0xff]
        %v1792 = vld [vmem:[%s11 + $0x18] sm:$0xff]
        %v1793 = vld [vmem:[%s11 + $0x20] sm:$0xff]
        %v1794 = vld [vmem:[%s11 + $0x28] sm:$0xff]
        %v1795 = vld [vmem:[%s11 + $0x30] sm:$0xff]
        %v1796 = vld [vmem:[%s11 + $0x38] sm:$0xff]
        %v1797 = vld [vmem:[%s12] sm:$0x1]
        %v1799 = vlaneseq
        %v1800 = vshrl.u32 %v1799, 7
        %v1801 = vsub.s32 0, %v1800
        %v1802 = vrot.slane %v1797, %v1801
        %vm1804 = vcmask 523264
        %v1806 = vsel %vm1804, %v1788, 0
        %1808 = vmatprep.subr.mxu0 0.0
        %1809 = vmatpush1.msra.mxu0 %v1789
        %1810 = vmatprep.subr.mxu0 0.0
        %1811 = vmatpush1.msra.mxu0 %v1790
        %1812 = vmatprep.subr.mxu0 0.0
        %1813 = vmatpush1.msra.mxu0 %v1791
        %1814 = vmatprep.subr.mxu0 0.0
        %1815 = vmatpush1.msra.mxu0 %v1792
        %1816 = vmatprep.subr.mxu0 0.0
        %1817 = vmatpush1.msra.mxu0 %v1793
        %1818 = vmatprep.subr.mxu0 0.0
        %1819 = vmatpush1.msra.mxu0 %v1794
        %1820 = vmatprep.subr.mxu0 0.0
        %1821 = vmatpush1.msra.mxu0 %v1795
        %1822 = vmatprep.subr.mxu0 0.0
        %1823 = vmatpush1.msra.mxu0 %v1796
        %1824 = vmatprep.subr.mxu0 0.0
        %1825 = vmatpush1.msra.mxu0 0.0
        %1826 = vmatprep.subr.mxu0 0.0
        %1827 = vmatpush1.msra.mxu0 0.0
        %1828 = vmatprep.subr.mxu0 0.0
        %1829 = vmatpush1.msra.mxu0 0.0
        %1830 = vmatprep.subr.mxu0 0.0
        %1831 = vmatpush1.msra.mxu0 0.0
        %1832 = vmatprep.subr.mxu0 0.0
        %1833 = vmatpush1.msra.mxu0 0.0
        %1834 = vmatprep.subr.mxu0 0.0
        %1835 = vmatpush1.msra.mxu0 0.0
        %1836 = vmatprep.subr.mxu0 0.0
        %1837 = vmatpush1.msra.mxu0 0.0
        %1838 = vmatprep.subr.mxu0 0.0
        %1839 = vmatpush1.msra.mxu0 0.0
        %1840 = vmatprep.subr.mxu0 0.0
        %1841 = vmatpush1.msra.mxu0 0.0
        %1842 = vmatprep.subr.mxu0 0.0
        %1843 = vmatpush1.msra.mxu0 0.0
        %1844 = vmatprep.subr.mxu0 0.0
        %1845 = vmatpush1.msra.mxu0 0.0
        %1846 = vmatprep.subr.mxu0 0.0
        %1847 = vmatpush1.msra.mxu0 0.0
        %1848 = vmatprep.subr.mxu0 0.0
        %1849 = vmatpush1.msra.mxu0 0.0
        %1850 = vmatprep.subr.mxu0 0.0
        %1851 = vmatpush1.msra.mxu0 0.0
        %1852 = vmatprep.subr.mxu0 0.0
        %1853 = vmatpush1.msra.mxu0 0.0
        %1854 = vmatprep.subr.mxu0 0.0
        %1855 = vmatpush1.msra.mxu0 0.0
        %1856 = vmatprep.subr.mxu0 0.0
        %1857 = vmatpush1.msra.mxu0 0.0
        %1858 = vmatprep.subr.mxu0 0.0
        %1859 = vmatpush1.msra.mxu0 0.0
        %1860 = vmatprep.subr.mxu0 0.0
        %1861 = vmatpush1.msra.mxu0 0.0
        %1862 = vmatprep.subr.mxu0 0.0
        %1863 = vmatpush1.msra.mxu0 0.0
        %1864 = vmatprep.subr.mxu0 0.0
        %1865 = vmatpush1.msra.mxu0 0.0
        %1866 = vmatprep.subr.mxu0 0.0
        %1867 = vmatpush1.msra.mxu0 0.0
        %1868 = vmatprep.subr.mxu0 0.0
        %1869 = vmatpush1.msra.mxu0 0.0
        %1870 = vmatprep.subr.mxu0 0.0
        %1871 = vmatpush1.msra.mxu0 0.0
        %1872 = vmatprep.mubr.f32.mxu0 0.0
        %1873 = vmatmul.mubr.f32.gmra.mrb[0].mxu0 %v1806
        %v1874 = vpop.f32.mrb[0].mxu0
        %v1875 = vadd.f32 %v1802, %v1874
        %v1876 = vpop.f32.mrb[0].mxu0
        %1877 = vdwg.mxu0
        %v1878 = vadd.f32 %v1703, %v1875
        %v1879 = vsel %vm808, %v1878, 0.0
        %1880 = vadd.xlane.f32.xlu0 %v1879
        %v1881 = vpop.xlane.xlu0 %1880
        %v1882 = vmul.f32 %v1881, %v1677
        %v1883 = vsub.f32 %v1878, %v1882
        %v1884 = vmul.f32 %v1883, %v1883
        %v1885 = vsel %vm808, %v1884, 0.0
        %1886 = vadd.xlane.f32.xlu0 %v1885
        %v1887 = vpop.xlane.xlu0 %1886
        %v1888 = vmul.f32 %v1887, %v1677
        %v1889 = vadd.f32 %v1888, 1e-05
        %v1890 = vrsqrt.pop %v1889
        %v1891 = vmul.f32 %v1883, %v1890
        %v1892 = vld [vmem:[%s15] sm:$0x1]
        %v1894 = vlaneseq
        %v1895 = vshrl.u32 %v1894, 7
        %v1896 = vsub.s32 0, %v1895
        %v1897 = vrot.slane %v1892, %v1896
        %v1899 = vmul.f32 %v1891, %v1897
        %v1900 = vld [vmem:[%s16] sm:$0x1]
        %v1902 = vlaneseq
        %v1903 = vshrl.u32 %v1902, 7
        %v1904 = vsub.s32 0, %v1903
        %v1905 = vrot.slane %v1900, %v1904
        %v1907 = vadd.f32 %v1899, %v1905
        %1908 = vst.msk [vmem:[%s599] sm:$0xff] %vm808, %v1907
        %s1909 = sand.u32 %s417, 1
        %s1910 = scalar_lea.sflag [#allocation7], %s1909
        %s1911 = sand.u32 %s417, 1
        %s1912 = smul.addr %s1911, 8
        %s1913 = scalar_lea.vmem [#allocation11], %s1912
        // Predicated region
        $region105: #{tpu_custom_call.1} parent=87 // pred_check
          %p1914 = pneg %p427
        $region106: #{tpu_custom_call.1} parent=87 // pred_check_branch
          %1916 = sbr.rel (%p1914) target = $region108
        $region107: #{tpu_custom_call.1} parent=87 // pred_region
          %s1918 = ssub.s32 128, 128
          %1919 = vsyncadd %s1910, %s1918
          %s1920 = smul.addr %s37, 2
          %s1921 = sadd.s32 %s38, %s1920
          %s1922 = smul.addr %s1921, 128
          %s1923 = scalar_lea.hbm %s17, %s1922
          %s1925 = sshll.u32 %s1913, 4
          %s1926 = int_to_ptr.vmem [resolvable:$true] %s1925
          %1928 = dma.vmem_to_hbm [thread:$0]  %s1926, 128, %s1923, %s1910
        $region108: #{tpu_custom_call.1} parent=87 // pred_fallthru
          _
      $region88: #{tpu_custom_call.1} parent=5 // pred_fallthru
        _
      %p1929 = scmp.le.s32.totalorder 2, %s28
      // Predicated region
      $region109: #{tpu_custom_call.1} parent=5 // pred_check
        %p1930 = pneg %p1929
      $region110: #{tpu_custom_call.1} parent=5 // pred_check_branch
        %1932 = sbr.rel (%p1930) target = $region112
      $region111: #{tpu_custom_call.1} parent=5 // pred_region
        %s1933 = ssub.s32 %s28, 2
        // Predicated region
        $region113: #{tpu_custom_call.1} parent=111 // pred_check
          %p1934 = pneg %p433
        $region114: #{tpu_custom_call.1} parent=111 // pred_check_branch
          %1936 = sbr.rel (%p1934) target = $region116
        $region115: #{tpu_custom_call.1} parent=111 // pred_region
          %s1937 = sand.u32 %s418, 1
          %s1938 = scalar_lea.sflag [#allocation7], %s1937
          %s1939 = sand.u32 %s418, 1
          %s1940 = smul.addr %s1939, 8
          %s1941 = scalar_lea.vmem [#allocation11], %s1940
          %1942 = dma.done %s1938, 128
        $region116: #{tpu_custom_call.1} parent=111 // pred_fallthru
          _
      $region112: #{tpu_custom_call.1} parent=5 // pred_fallthru
        _
    $region6: #{tpu_custom_call.1} parent=1 // loop_footer
      %s32 = sadd.s32 1, %s28
    $region7: #{tpu_custom_call.1} parent=1 // loop_footer_branch
      %27 = sbr.rel target = $region3
    $region8: #{tpu_custom_call.1} parent=1 // loop_exit
      _
    %1943 = vsyncpa [#allocation6], 1
    %s1944 = scalar_lea.sflag [#allocation6], 1
    %1945 = vsyncpa %s1944, 1
    %1946 = vsyncpa [#allocation9], 1
    %1947 = vsyncpa [#allocation7], 1
    %s1948 = scalar_lea.sflag [#allocation7], 1
    %1949 = vsyncpa %s1948, 1

// kernel: tpu_custom_call.1
$region0: #{tpu_custom_call.1}
  #allocation0 [shape = 'u32[]', space=smem, size = 0x4, offset = 0x4, fixed_abs, tag = 'smem constant byte address 0x4 - core index']
  #allocation1 [shape = 'u32[144,128]{1,0:T(1,128)}', space=vmem, size = 0x12000, scoped, tag = 'internal scratch']
  #allocation2 [shape = 'f32[16,32]{1,0:T(8,128)}', space=vmem, size = 0x2000, scoped, tag = 'scratch operand']
  #allocation3 [shape = 'f32[16,32]{1,0:T(8,128)}', space=vmem, size = 0x2000, scoped, tag = 'scratch operand']
  #allocation4 [shape = 'f32[8,32]{1,0:T(8,128)}', space=vmem, size = 0x1000, scoped, tag = 'scratch operand']
  %s0 = inlined_call_operand.vmem [shape: f32[2,16,32], index: 0, kind: input, shape index: {}]
  %s1 = inlined_call_operand.vmem [shape: f32[32,32], index: 1, kind: input, shape index: {}]
  %s2 = inlined_call_operand.vmem [shape: f32[1,32], index: 2, kind: input, shape index: {}]
  %s3 = inlined_call_operand.vmem [shape: f32[32,32], index: 3, kind: input, shape index: {}]
  %s4 = inlined_call_operand.vmem [shape: f32[1,32], index: 4, kind: input, shape index: {}]
  %s5 = inlined_call_operand.hbm [shape: f32[32,32], index: 5, kind: input, shape index: {}]
  %s6 = inlined_call_operand.vmem [shape: f32[1,32], index: 6, kind: input, shape index: {}]
  %s7 = inlined_call_operand.hbm [shape: f32[32,32], index: 7, kind: input, shape index: {}]
  %s8 = inlined_call_operand.vmem [shape: f32[1,32], index: 8, kind: input, shape index: {}]
  %s9 = inlined_call_operand.hbm [shape: f32[32,64], index: 9, kind: input, shape index: {}]
  %s10 = inlined_call_operand.vmem [shape: f32[1,64], index: 10, kind: input, shape index: {}]
  %s11 = inlined_call_operand.vmem [shape: f32[64,32], index: 11, kind: input, shape index: {}]
  %s12 = inlined_call_operand.vmem [shape: f32[1,32], index: 12, kind: input, shape index: {}]
  %s13 = inlined_call_operand.vmem [shape: f32[1,32], index: 13, kind: input, shape index: {}]
  %s14 = inlined_call_operand.vmem [shape: f32[1,32], index: 14, kind: input, shape index: {}]
  %s15 = inlined_call_operand.vmem [shape: f32[1,32], index: 15, kind: input, shape index: {}]
  %s16 = inlined_call_operand.vmem [shape: f32[1,32], index: 16, kind: input, shape index: {}]
  %s17 = inlined_call_operand.hbm [shape: f32[2,16,32], index: 17, kind: output, shape index: {}]
  %s18 = sld [smem:[#allocation0]]
  $region117: #{tpu_custom_call.1} parent=0
    _
  %s20 = ssub.s32 1, %s18
  %s21 = scalar_select 0, %s20, %s18
  $region1: #{tpu_custom_call.1} parent=0
    #allocation5 [shape = 'u8[16384]{0}', space=vmem, size = 0x4000, scoped, tag = 'input window, operand 5, single buffered']
    #allocation6 [shape = 's32[2]{0}', space=sflag, size = 0x8, scoped, tag = 'scoped memory for tpu_custom_call.1']
    #allocation7 [shape = 's32[2]{0}', space=sflag, size = 0x8, scoped, tag = 'scoped memory for tpu_custom_call.1']
    #allocation8 [shape = 'u8[16384]{0}', space=vmem, size = 0x4000, scoped, tag = 'input window, operand 7, single buffered']
    #allocation9 [shape = 's32[1]{0}', space=sflag, size = 0x4, scoped, tag = 'scoped memory for tpu_custom_call.1']
    #allocation10 [shape = 'u8[16384]{0}', space=vmem, size = 0x4000, scoped, tag = 'input window, operand 9, single buffered']
    #allocation11 [shape = 'u8[8192]{0}', space=vmem, size = 0x2000, scoped, tag = 'output window, operand 0']
    %22 = vsyncpa [#allocation6], 0
    %23 = vsyncpa [#allocation9], 0
    %24 = vsyncpa [#allocation7], 0
    %s25 = scalar_lea.sflag [#allocation7], 1
    %26 = vsyncpa %s25, 0
    loop: start=0, step=1, limit=6
    $region2: #{tpu_custom_call.1} parent=1 // loop_pre_header
      _
    $region3: #{tpu_custom_call.1} parent=1 // loop_header
      %s28 = sphi 0, %s32
      %p29 = scmp.ge.s32.totalorder %s28, 6
      %s35 = sphi 0, %s47
      %s36 = sphi 0, %s43
      %s37 = sphi 0, %s35
      %s38 = sphi 0, %s36
      %s39 = sphi 0, %s37
      %s40 = sphi 0, %s38
      %s50 = sphi 0, %s52
      %s53 = sphi 0, %s50
      %s54 = sphi 0, %s53
      %s70 = sphi 0, %s54
      %s74 = sphi 0, %s74
      %s76 = sphi 0, %s74
      %s77 = sphi 0, %s76
      %s91 = sphi 0, %s77
      %s95 = sphi 0, %s95
      %s97 = sphi 0, %s95
      %s98 = sphi 0, %s97
      %s112 = sphi 0, %s98
      %s116 = sphi 0, %s116
      %s118 = sphi 0, %s116
      %s119 = sphi 0, %s118
      %s133 = sphi 0, %s119
      %s137 = sphi 0, %s137
      %s139 = sphi 0, %s137
      %s140 = sphi 0, %s139
      %s154 = sphi 0, %s140
      %s158 = sphi 0, %s158
      %s160 = sphi 0, %s158
      %s161 = sphi 0, %s160
      %s175 = sphi 0, %s161
      %s179 = sphi 0, %s179
      %s181 = sphi 0, %s179
      %s182 = sphi 0, %s181
      %s196 = sphi 0, %s182
      %s200 = sphi 0, %s200
      %s202 = sphi 0, %s200
      %s203 = sphi 0, %s202
      %s217 = sphi 0, %s203
      %s221 = sphi 0, %s221
      %s223 = sphi 0, %s221
      %s224 = sphi 0, %s223
      %s238 = sphi 0, %s224
      %s242 = sphi 0, %s242
      %s244 = sphi 0, %s242
      %s245 = sphi 0, %s244
      %s259 = sphi 0, %s245
      %s263 = sphi 0, %s263
      %s265 = sphi 0, %s263
      %s266 = sphi 0, %s265
      %s280 = sphi 0, %s266
      %s284 = sphi 0, %s284
      %s286 = sphi 0, %s284
      %s287 = sphi 0, %s286
      %s301 = sphi 0, %s287
      %s305 = sphi 0, %s305
      %s307 = sphi 0, %s305
      %s308 = sphi 0, %s307
      %s322 = sphi 0, %s308
      %s326 = sphi 0, %s326
      %s328 = sphi 0, %s326
      %s329 = sphi 0, %s328
      %s343 = sphi 0, %s329
      %s347 = sphi 0, %s347
      %s349 = sphi 0, %s347
      %s350 = sphi 0, %s349
      %s364 = sphi 0, %s350
      %s368 = sphi 0, %s368
      %s370 = sphi 0, %s368
      %s371 = sphi 0, %s370
      %s385 = sphi 0, %s371
      %s389 = sphi 0, %s389
      %s391 = sphi 0, %s389
      %s392 = sphi 0, %s391
      %s406 = sphi 0, %s392
      %s414 = sphi 0, %s416
      %s417 = sphi 0, %s414
      %s418 = sphi 0, %s417
      %s434 = sphi 0, %s418
    $region4: #{tpu_custom_call.1} parent=1 // loop_header_branch
      %31 = sbr.rel (%p29) target = $region8
    $region5: #{tpu_custom_call.1} parent=1 // loop_body
      %s33 = ssub.s32 %s28, 1
      %s34 = ssub.s32 %s28, 2
      %s41 = sadd.s32 1, %s36
      %p42 = scmp.ge.s32.totalorder %s41, 2
      %s43 = scalar_select %p42, 0, %s41
      %s44 = sadd.s32 1, %s35
      %s45 = scalar_select %p42, %s44, %s35
      %p46 = scmp.ge.s32.totalorder %s45, 2
      %s47 = scalar_select %p46, 0, %s45
      %s48 = ssub.s32 %s35, %s47
      %p49 = scmp.eq.s32.totalorder %s48, 0
      %s51 = sadd.s32 %s50, 1
      %s52 = scalar_select %p49, %s50, %s51
      %p55 = pneg %p49
      %p56 = scmp.eq.s32.totalorder %s28, 3
      %p57 = por %p55, %p56
      %p58 = scmp.ne.s32.totalorder %s50, %s53
      %p59 = scmp.eq.s32.totalorder %s28, 0
      %p60 = por %p58, %p59
      %p61 = scmp.ne.s32.totalorder %s50, %s53
      %p62 = scmp.eq.s32.totalorder %s33, 3
      %p63 = por %p61, %p62
      %p64 = scmp.ne.s32.totalorder %s53, %s54
      %p65 = scmp.eq.s32.totalorder %s33, 0
      %p66 = por %p64, %p65
      %p67 = scmp.ne.s32.totalorder %s53, %s54
      %p68 = scmp.eq.s32.totalorder %s34, 3
      %p69 = por %p67, %p68
      %p71 = scmp.ne.s32.totalorder %s54, %s70
      %p72 = scmp.eq.s32.totalorder %s34, 0
      %p73 = por %p71, %p72
      %s75 = sadd.s32 %s74, 1
      %p78 = scmp.eq.s32.totalorder %s28, 3
      %p79 = scmp.ne.s32.totalorder %s74, %s76
      %p80 = scmp.eq.s32.totalorder %s28, 0
      %p81 = por %p79, %p80
      %p82 = scmp.ne.s32.totalorder %s74, %s76
      %p83 = scmp.eq.s32.totalorder %s33, 3
      %p84 = por %p82, %p83
      %p85 = scmp.ne.s32.totalorder %s76, %s77
      %p86 = scmp.eq.s32.totalorder %s33, 0
      %p87 = por %p85, %p86
      %p88 = scmp.ne.s32.totalorder %s76, %s77
      %p89 = scmp.eq.s32.totalorder %s34, 3
      %p90 = por %p88, %p89
      %p92 = scmp.ne.s32.totalorder %s77, %s91
      %p93 = scmp.eq.s32.totalorder %s34, 0
      %p94 = por %p92, %p93
      %s96 = sadd.s32 %s95, 1
      %p99 = scmp.eq.s32.totalorder %s28, 3
      %p100 = scmp.ne.s32.totalorder %s95, %s97
      %p101 = scmp.eq.s32.totalorder %s28, 0
      %p102 = por %p100, %p101
      %p103 = scmp.ne.s32.totalorder %s95, %s97
      %p104 = scmp.eq.s32.totalorder %s33, 3
      %p105 = por %p103, %p104
      %p106 = scmp.ne.s32.totalorder %s97, %s98
      %p107 = scmp.eq.s32.totalorder %s33, 0
      %p108 = por %p106, %p107
      %p109 = scmp.ne.s32.totalorder %s97, %s98
      %p110 = scmp.eq.s32.totalorder %s34, 3
      %p111 = por %p109, %p110
      %p113 = scmp.ne.s32.totalorder %s98, %s112
      %p114 = scmp.eq.s32.totalorder %s34, 0
      %p115 = por %p113, %p114
      %s117 = sadd.s32 %s116, 1
      %p120 = scmp.eq.s32.totalorder %s28, 3
      %p121 = scmp.ne.s32.totalorder %s116, %s118
      %p122 = scmp.eq.s32.totalorder %s28, 0
      %p123 = por %p121, %p122
      %p124 = scmp.ne.s32.totalorder %s116, %s118
      %p125 = scmp.eq.s32.totalorder %s33, 3
      %p126 = por %p124, %p125
      %p127 = scmp.ne.s32.totalorder %s118, %s119
      %p128 = scmp.eq.s32.totalorder %s33, 0
      %p129 = por %p127, %p128
      %p130 = scmp.ne.s32.totalorder %s118, %s119
      %p131 = scmp.eq.s32.totalorder %s34, 3
      %p132 = por %p130, %p131
      %p134 = scmp.ne.s32.totalorder %s119, %s133
      %p135 = scmp.eq.s32.totalorder %s34, 0
      %p136 = por %p134, %p135
      %s138 = sadd.s32 %s137, 1
      %p141 = scmp.eq.s32.totalorder %s28, 3
      %p142 = scmp.ne.s32.totalorder %s137, %s139
      %p143 = scmp.eq.s32.totalorder %s28, 0
      %p144 = por %p142, %p143
      %p145 = scmp.ne.s32.totalorder %s137, %s139
      %p146 = scmp.eq.s32.totalorder %s33, 3
      %p147 = por %p145, %p146
      %p148 = scmp.ne.s32.totalorder %s139, %s140
      %p149 = scmp.eq.s32.totalorder %s33, 0
      %p150 = por %p148, %p149
      %p151 = scmp.ne.s32.totalorder %s139, %s140
      %p152 = scmp.eq.s32.totalorder %s34, 3
      %p153 = por %p151, %p152
      %p155 = scmp.ne.s32.totalorder %s140, %s154
      %p156 = scmp.eq.s32.totalorder %s34, 0
      %p157 = por %p155, %p156
      %s159 = sadd.s32 %s158, 1
      %p162 = scmp.eq.s32.totalorder %s28, 3
      %p163 = scmp.ne.s32.totalorder %s158, %s160
      %p164 = scmp.eq.s32.totalorder %s28, 0
      %p165 = por %p163, %p164
      %p166 = scmp.ne.s32.totalorder %s158, %s160
      %p167 = scmp.eq.s32.totalorder %s33, 3
      %p168 = por %p166, %p167
      %p169 = scmp.ne.s32.totalorder %s160, %s161
      %p170 = scmp.eq.s32.totalorder %s33, 0
      %p171 = por %p169, %p170
      %p172 = scmp.ne.s32.totalorder %s160, %s161
      %p173 = scmp.eq.s32.totalorder %s34, 3
      %p174 = por %p172, %p173
      %p176 = scmp.ne.s32.totalorder %s161, %s175
      %p177 = scmp.eq.s32.totalorder %s34, 0
      %p178 = por %p176, %p177
      %s180 = sadd.s32 %s179, 1
      %p183 = scmp.eq.s32.totalorder %s28, 3
      %p184 = scmp.ne.s32.totalorder %s179, %s181
      %p185 = scmp.eq.s32.totalorder %s28, 0
      %p186 = por %p184, %p185
      %p187 = scmp.ne.s32.totalorder %s179, %s181
      %p188 = scmp.eq.s32.totalorder %s33, 3
      %p189 = por %p187, %p188
      %p190 = scmp.ne.s32.totalorder %s181, %s182
      %p191 = scmp.eq.s32.totalorder %s33, 0
      %p192 = por %p190, %p191
      %p193 = scmp.ne.s32.totalorder %s181, %s182
      %p194 = scmp.eq.s32.totalorder %s34, 3
      %p195 = por %p193, %p194
      %p197 = scmp.ne.s32.totalorder %s182, %s196
      %p198 = scmp.eq.s32.totalorder %s34, 0
      %p199 = por %p197, %p198
      %s201 = sadd.s32 %s200, 1
      %p204 = scmp.eq.s32.totalorder %s28, 3
      %p205 = scmp.ne.s32.totalorder %s200, %s202
      %p206 = scmp.eq.s32.totalorder %s28, 0
      %p207 = por %p205, %p206
      %p208 = scmp.ne.s32.totalorder %s200, %s202
      %p209 = scmp.eq.s32.totalorder %s33, 3
      %p210 = por %p208, %p209
      %p211 = scmp.ne.s32.totalorder %s202, %s203
      %p212 = scmp.eq.s32.totalorder %s33, 0
      %p213 = por %p211, %p212
      %p214 = scmp.ne.s32.totalorder %s202, %s203
      %p215 = scmp.eq.s32.totalorder %s34, 3
      %p216 = por %p214, %p215
      %p218 = scmp.ne.s32.totalorder %s203, %s217
      %p219 = scmp.eq.s32.totalorder %s34, 0
      %p220 = por %p218, %p219
      %s222 = sadd.s32 %s221, 1
      %p225 = scmp.eq.s32.totalorder %s28, 3
      %p226 = scmp.ne.s32.totalorder %s221, %s223
      %p227 = scmp.eq.s32.totalorder %s28, 0
      %p228 = por %p226, %p227
      %p229 = scmp.ne.s32.totalorder %s221, %s223
      %p230 = scmp.eq.s32.totalorder %s33, 3
      %p231 = por %p229, %p230
      %p232 = scmp.ne.s32.totalorder %s223, %s224
      %p233 = scmp.eq.s32.totalorder %s33, 0
      %p234 = por %p232, %p233
      %p235 = scmp.ne.s32.totalorder %s223, %s224
      %p236 = scmp.eq.s32.totalorder %s34, 3
      %p237 = por %p235, %p236
      %p239 = scmp.ne.s32.totalorder %s224, %s238
      %p240 = scmp.eq.s32.totalorder %s34, 0
      %p241 = por %p239, %p240
      %s243 = sadd.s32 %s242, 1
      %p246 = scmp.eq.s32.totalorder %s28, 3
      %p247 = scmp.ne.s32.totalorder %s242, %s244
      %p248 = scmp.eq.s32.totalorder %s28, 0
      %p249 = por %p247, %p248
      %p250 = scmp.ne.s32.totalorder %s242, %s244
      %p251 = scmp.eq.s32.totalorder %s33, 3
      %p252 = por %p250, %p251
      %p253 = scmp.ne.s32.totalorder %s244, %s245
      %p254 = scmp.eq.s32.totalorder %s33, 0
      %p255 = por %p253, %p254
      %p256 = scmp.ne.s32.totalorder %s244, %s245
      %p257 = scmp.eq.s32.totalorder %s34, 3
      %p258 = por %p256, %p257
      %p260 = scmp.ne.s32.totalorder %s245, %s259
      %p261 = scmp.eq.s32.totalorder %s34, 0
      %p262 = por %p260, %p261
      %s264 = sadd.s32 %s263, 1
      %p267 = scmp.eq.s32.totalorder %s28, 3
      %p268 = scmp.ne.s32.totalorder %s263, %s265
      %p269 = scmp.eq.s32.totalorder %s28, 0
      %p270 = por %p268, %p269
      %p271 = scmp.ne.s32.totalorder %s263, %s265
      %p272 = scmp.eq.s32.totalorder %s33, 3
      %p273 = por %p271, %p272
      %p274 = scmp.ne.s32.totalorder %s265, %s266
      %p275 = scmp.eq.s32.totalorder %s33, 0
      %p276 = por %p274, %p275
      %p277 = scmp.ne.s32.totalorder %s265, %s266
      %p278 = scmp.eq.s32.totalorder %s34, 3
      %p279 = por %p277, %p278
      %p281 = scmp.ne.s32.totalorder %s266, %s280
      %p282 = scmp.eq.s32.totalorder %s34, 0
      %p283 = por %p281, %p282
      %s285 = sadd.s32 %s284, 1
      %p288 = scmp.eq.s32.totalorder %s28, 3
      %p289 = scmp.ne.s32.totalorder %s284, %s286
      %p290 = scmp.eq.s32.totalorder %s28, 0
      %p291 = por %p289, %p290
      %p292 = scmp.ne.s32.totalorder %s284, %s286
      %p293 = scmp.eq.s32.totalorder %s33, 3
      %p294 = por %p292, %p293
      %p295 = scmp.ne.s32.totalorder %s286, %s287
      %p296 = scmp.eq.s32.totalorder %s33, 0
      %p297 = por %p295, %p296
      %p298 = scmp.ne.s32.totalorder %s286, %s287
      %p299 = scmp.eq.s32.totalorder %s34, 3
      %p300 = por %p298, %p299
      %p302 = scmp.ne.s32.totalorder %s287, %s301
      %p303 = scmp.eq.s32.totalorder %s34, 0
      %p304 = por %p302, %p303
      %s306 = sadd.s32 %s305, 1
      %p309 = scmp.eq.s32.totalorder %s28, 3
      %p310 = scmp.ne.s32.totalorder %s305, %s307
      %p311 = scmp.eq.s32.totalorder %s28, 0
      %p312 = por %p310, %p311
      %p313 = scmp.ne.s32.totalorder %s305, %s307
      %p314 = scmp.eq.s32.totalorder %s33, 3
      %p315 = por %p313, %p314
      %p316 = scmp.ne.s32.totalorder %s307, %s308
      %p317 = scmp.eq.s32.totalorder %s33, 0
      %p318 = por %p316, %p317
      %p319 = scmp.ne.s32.totalorder %s307, %s308
      %p320 = scmp.eq.s32.totalorder %s34, 3
      %p321 = por %p319, %p320
      %p323 = scmp.ne.s32.totalorder %s308, %s322
      %p324 = scmp.eq.s32.totalorder %s34, 0
      %p325 = por %p323, %p324
      %s327 = sadd.s32 %s326, 1
      %p330 = scmp.eq.s32.totalorder %s28, 3
      %p331 = scmp.ne.s32.totalorder %s326, %s328
      %p332 = scmp.eq.s32.totalorder %s28, 0
      %p333 = por %p331, %p332
      %p334 = scmp.ne.s32.totalorder %s326, %s328
      %p335 = scmp.eq.s32.totalorder %s33, 3
      %p336 = por %p334, %p335
      %p337 = scmp.ne.s32.totalorder %s328, %s329
      %p338 = scmp.eq.s32.totalorder %s33, 0
      %p339 = por %p337, %p338
      %p340 = scmp.ne.s32.totalorder %s328, %s329
      %p341 = scmp.eq.s32.totalorder %s34, 3
      %p342 = por %p340, %p341
      %p344 = scmp.ne.s32.totalorder %s329, %s343
      %p345 = scmp.eq.s32.totalorder %s34, 0
      %p346 = por %p344, %p345
      %s348 = sadd.s32 %s347, 1
      %p351 = scmp.eq.s32.totalorder %s28, 3
      %p352 = scmp.ne.s32.totalorder %s347, %s349
      %p353 = scmp.eq.s32.totalorder %s28, 0
      %p354 = por %p352, %p353
      %p355 = scmp.ne.s32.totalorder %s347, %s349
      %p356 = scmp.eq.s32.totalorder %s33, 3
      %p357 = por %p355, %p356
      %p358 = scmp.ne.s32.totalorder %s349, %s350
      %p359 = scmp.eq.s32.totalorder %s33, 0
      %p360 = por %p358, %p359
      %p361 = scmp.ne.s32.totalorder %s349, %s350
      %p362 = scmp.eq.s32.totalorder %s34, 3
      %p363 = por %p361, %p362
      %p365 = scmp.ne.s32.totalorder %s350, %s364
      %p366 = scmp.eq.s32.totalorder %s34, 0
      %p367 = por %p365, %p366
      %s369 = sadd.s32 %s368, 1
      %p372 = scmp.eq.s32.totalorder %s28, 3
      %p373 = scmp.ne.s32.totalorder %s368, %s370
      %p374 = scmp.eq.s32.totalorder %s28, 0
      %p375 = por %p373, %p374
      %p376 = scmp.ne.s32.totalorder %s368, %s370
      %p377 = scmp.eq.s32.totalorder %s33, 3
      %p378 = por %p376, %p377
      %p379 = scmp.ne.s32.totalorder %s370, %s371
      %p380 = scmp.eq.s32.totalorder %s33, 0
      %p381 = por %p379, %p380
      %p382 = scmp.ne.s32.totalorder %s370, %s371
      %p383 = scmp.eq.s32.totalorder %s34, 3
      %p384 = por %p382, %p383
      %p386 = scmp.ne.s32.totalorder %s371, %s385
      %p387 = scmp.eq.s32.totalorder %s34, 0
      %p388 = por %p386, %p387
      %s390 = sadd.s32 %s389, 1
      %p393 = scmp.eq.s32.totalorder %s28, 3
      %p394 = scmp.ne.s32.totalorder %s389, %s391
      %p395 = scmp.eq.s32.totalorder %s28, 0
      %p396 = por %p394, %p395
      %p397 = scmp.ne.s32.totalorder %s389, %s391
      %p398 = scmp.eq.s32.totalorder %s33, 3
      %p399 = por %p397, %p398
      %p400 = scmp.ne.s32.totalorder %s391, %s392
      %p401 = scmp.eq.s32.totalorder %s33, 0
      %p402 = por %p400, %p401
      %p403 = scmp.ne.s32.totalorder %s391, %s392
      %p404 = scmp.eq.s32.totalorder %s34, 3
      %p405 = por %p403, %p404
      %p407 = scmp.ne.s32.totalorder %s392, %s406
      %p408 = scmp.eq.s32.totalorder %s34, 0
      %p409 = por %p407, %p408
      %s410 = ssub.s32 %s35, %s47
      %s411 = ssub.s32 %s36, %s43
      %s412 = sor.u32 %s410, %s411
      %p413 = scmp.eq.s32.totalorder %s412, 0
      %s415 = sadd.s32 %s414, 1
      %s416 = scalar_select %p413, %s414, %s415
      %p419 = pneg %p413
      %p420 = scmp.eq.s32.totalorder %s28, 3
      %p421 = por %p419, %p420
      %p422 = scmp.ne.s32.totalorder %s414, %s417
      %p423 = scmp.eq.s32.totalorder %s28, 0
      %p424 = por %p422, %p423
      %p425 = scmp.ne.s32.totalorder %s414, %s417
      %p426 = scmp.eq.s32.totalorder %s33, 3
      %p427 = por %p425, %p426
      %p428 = scmp.ne.s32.totalorder %s417, %s418
      %p429 = scmp.eq.s32.totalorder %s33, 0
      %p430 = por %p428, %p429
      %p431 = scmp.ne.s32.totalorder %s417, %s418
      %p432 = scmp.eq.s32.totalorder %s34, 3
      %p433 = por %p431, %p432
      %p435 = scmp.ne.s32.totalorder %s418, %s434
      %p436 = scmp.eq.s32.totalorder %s34, 0
      %p437 = por %p435, %p436
      %p438 = scmp.le.s32.totalorder 1, %s28
      %p439 = scmp.lt.s32.totalorder %s28, 5
      %p440 = pnand %p438, %p439
      %p441 = pneg %p440
      // Predicated region
      $region9: #{tpu_custom_call.1} parent=5 // pred_check
        _
      $region10: #{tpu_custom_call.1} parent=5 // pred_check_branch
        %443 = sbr.rel (%p440) target = $region12
      $region11: #{tpu_custom_call.1} parent=5 // pred_region
        %s444 = ssub.s32 %s28, 1
        // Predicated region
        $region13: #{tpu_custom_call.1} parent=11 // pred_check
          %p445 = pneg %p87
        $region14: #{tpu_custom_call.1} parent=11 // pred_check_branch
          %447 = sbr.rel (%p445) target = $region16
        $region15: #{tpu_custom_call.1} parent=11 // pred_region
          _
        $region16: #{tpu_custom_call.1} parent=11 // pred_fallthru
          _
        // Predicated region
        $region17: #{tpu_custom_call.1} parent=11 // pred_check
          %p448 = pneg %p108
        $region18: #{tpu_custom_call.1} parent=11 // pred_check_branch
          %450 = sbr.rel (%p448) target = $region20
        $region19: #{tpu_custom_call.1} parent=11 // pred_region
          _
        $region20: #{tpu_custom_call.1} parent=11 // pred_fallthru
          _
        // Predicated region
        $region21: #{tpu_custom_call.1} parent=11 // pred_check
          %p451 = pneg %p129
        $region22: #{tpu_custom_call.1} parent=11 // pred_check_branch
          %453 = sbr.rel (%p451) target = $region24
        $region23: #{tpu_custom_call.1} parent=11 // pred_region
          _
        $region24: #{tpu_custom_call.1} parent=11 // pred_fallthru
          _
        // Predicated region
        $region25: #{tpu_custom_call.1} parent=11 // pred_check
          %p454 = pneg %p150
        $region26: #{tpu_custom_call.1} parent=11 // pred_check_branch
          %456 = sbr.rel (%p454) target = $region28
        $region27: #{tpu_custom_call.1} parent=11 // pred_region
          _
        $region28: #{tpu_custom_call.1} parent=11 // pred_fallthru
          _
        // Predicated region
        $region29: #{tpu_custom_call.1} parent=11 // pred_check
          %p457 = pneg %p171
        $region30: #{tpu_custom_call.1} parent=11 // pred_check_branch
          %459 = sbr.rel (%p457) target = $region32
        $region31: #{tpu_custom_call.1} parent=11 // pred_region
          %s461 = ssub.s32 512, 512
          %462 = vsyncadd [#allocation6], %s461
          %s463 = sshll.u32 [#allocation5], 4
          %s464 = int_to_ptr.vmem [resolvable:$true] %s463
          %469 = dma.hbm_to_vmem [thread:$0]  %s5, 512, %s464, [#allocation6], 128, 128, 8
        $region32: #{tpu_custom_call.1} parent=11 // pred_fallthru
          _
        // Predicated region
        $region33: #{tpu_custom_call.1} parent=11 // pred_check
          %p470 = pneg %p192
        $region34: #{tpu_custom_call.1} parent=11 // pred_check_branch
          %472 = sbr.rel (%p470) target = $region36
        $region35: #{tpu_custom_call.1} parent=11 // pred_region
          _
        $region36: #{tpu_custom_call.1} parent=11 // pred_fallthru
          _
        // Predicated region
        $region37: #{tpu_custom_call.1} parent=11 // pred_check
          %p473 = pneg %p213
        $region38: #{tpu_custom_call.1} parent=11 // pred_check_branch
          %475 = sbr.rel (%p473) target = $region40
        $region39: #{tpu_custom_call.1} parent=11 // pred_region
          %s477 = ssub.s32 512, 512
          %478 = vsyncadd [#allocation9], %s477
          %s479 = sshll.u32 [#allocation8], 4
          %s480 = int_to_ptr.vmem [resolvable:$true] %s479
          %485 = dma.hbm_to_vmem [thread:$0]  %s7, 512, %s480, [#allocation9], 128, 128, 8
        $region40: #{tpu_custom_call.1} parent=11 // pred_fallthru
          _
        // Predicated region
        $region41: #{tpu_custom_call.1} parent=11 // pred_check
          %p486 = pneg %p234
        $region42: #{tpu_custom_call.1} parent=11 // pred_check_branch
          %488 = sbr.rel (%p486) target = $region44
        $region43: #{tpu_custom_call.1} parent=11 // pred_region
          _
        $region44: #{tpu_custom_call.1} parent=11 // pred_fallthru
          _
        // Predicated region
        $region45: #{tpu_custom_call.1} parent=11 // pred_check
          %p489 = pneg %p255
        $region46: #{tpu_custom_call.1} parent=11 // pred_check_branch
          %491 = sbr.rel (%p489) target = $region48
        $region47: #{tpu_custom_call.1} parent=11 // pred_region
          %s493 = ssub.s32 512, 512
          %494 = vsyncadd [#allocation9], %s493
          %s495 = sshll.u32 [#allocation10], 4
          %s496 = int_to_ptr.vmem [resolvable:$true] %s495
          %501 = dma.hbm_to_vmem [thread:$0]  %s9, 512, %s496, [#allocation9], 128, 128, 8
        $region48: #{tpu_custom_call.1} parent=11 // pred_fallthru
          _
        // Predicated region
        $region49: #{tpu_custom_call.1} parent=11 // pred_check
          %p502 = pneg %p276
        $region50: #{tpu_custom_call.1} parent=11 // pred_check_branch
          %504 = sbr.rel (%p502) target = $region52
        $region51: #{tpu_custom_call.1} parent=11 // pred_region
          _
        $region52: #{tpu_custom_call.1} parent=11 // pred_fallthru
          _
        // Predicated region
        $region53: #{tpu_custom_call.1} parent=11 // pred_check
          %p505 = pneg %p297
        $region54: #{tpu_custom_call.1} parent=11 // pred_check_branch
          %507 = sbr.rel (%p505) target = $region56
        $region55: #{tpu_custom_call.1} parent=11 // pred_region
          _
        $region56: #{tpu_custom_call.1} parent=11 // pred_fallthru
          _
        // Predicated region
        $region57: #{tpu_custom_call.1} parent=11 // pred_check
          %p508 = pneg %p318
        $region58: #{tpu_custom_call.1} parent=11 // pred_check_branch
          %510 = sbr.rel (%p508) target = $region60
        $region59: #{tpu_custom_call.1} parent=11 // pred_region
          _
        $region60: #{tpu_custom_call.1} parent=11 // pred_fallthru
          _
        // Predicated region
        $region61: #{tpu_custom_call.1} parent=11 // pred_check
          %p511 = pneg %p339
        $region62: #{tpu_custom_call.1} parent=11 // pred_check_branch
          %513 = sbr.rel (%p511) target = $region64
        $region63: #{tpu_custom_call.1} parent=11 // pred_region
          _
        $region64: #{tpu_custom_call.1} parent=11 // pred_fallthru
          _
        // Predicated region
        $region65: #{tpu_custom_call.1} parent=11 // pred_check
          %p514 = pneg %p360
        $region66: #{tpu_custom_call.1} parent=11 // pred_check_branch
          %516 = sbr.rel (%p514) target = $region68
        $region67: #{tpu_custom_call.1} parent=11 // pred_region
          _
        $region68: #{tpu_custom_call.1} parent=11 // pred_fallthru
          _
        // Predicated region
        $region69: #{tpu_custom_call.1} parent=11 // pred_check
          %p517 = pneg %p381
        $region70: #{tpu_custom_call.1} parent=11 // pred_check_branch
          %519 = sbr.rel (%p517) target = $region72
        $region71: #{tpu_custom_call.1} parent=11 // pred_region
          _
        $region72: #{tpu_custom_call.1} parent=11 // pred_fallthru
          _
        // Predicated region
        $region73: #{tpu_custom_call.1} parent=11 // pred_check
          %p520 = pneg %p402
        $region74: #{tpu_custom_call.1} parent=11 // pred_check_branch
          %522 = sbr.rel (%p520) target = $region76
        $region75: #{tpu_custom_call.1} parent=11 // pred_region
          _
        $region76: #{tpu_custom_call.1} parent=11 // pred_fallthru
          _
      $region12: #{tpu_custom_call.1} parent=5 // pred_fallthru
        _
      %p523 = scmp.lt.s32.totalorder %s28, 4
      // Predicated region
      $region77: #{tpu_custom_call.1} parent=5 // pred_check
        %p524 = pneg %p523
      $region78: #{tpu_custom_call.1} parent=5 // pred_check_branch
        %526 = sbr.rel (%p524) target = $region80
      $region79: #{tpu_custom_call.1} parent=5 // pred_region
        // Predicated region
        $region81: #{tpu_custom_call.1} parent=79 // pred_check
          %p527 = pneg %p60
        $region82: #{tpu_custom_call.1} parent=79 // pred_check_branch
          %529 = sbr.rel (%p527) target = $region84
        $region83: #{tpu_custom_call.1} parent=79 // pred_region
          %p530 = scmp.lt.s32.totalorder %s35, 1
          %s531 = scalar_select %p530, %s35, 1
          %s532 = smul.addr %s531, 2
          %s533 = smul.addr %s532, 8
          %s534 = scalar_lea.vmem %s0, %s533
        $region84: #{tpu_custom_call.1} parent=79 // pred_fallthru
          _
      $region80: #{tpu_custom_call.1} parent=5 // pred_fallthru
        _
      %p535 = scmp.le.s32.totalorder 1, %s28
      %p536 = scmp.lt.s32.totalorder %s28, 5
      %p537 = pnand %p535, %p536
      %p538 = pneg %p537
      // Predicated region
      $region85: #{tpu_custom_call.1} parent=5 // pred_check
        _
      $region86: #{tpu_custom_call.1} parent=5 // pred_check_branch
        %540 = sbr.rel (%p537) target = $region88
      $region87: #{tpu_custom_call.1} parent=5 // pred_region
        %s541 = ssub.s32 %s28, 1
        // Predicated region
        $region89: #{tpu_custom_call.1} parent=87 // pred_check
          %p542 = pneg %p171
        $region90: #{tpu_custom_call.1} parent=87 // pred_check_branch
          %544 = sbr.rel (%p542) target = $region92
        $region91: #{tpu_custom_call.1} parent=87 // pred_region
          %545 = dma.done [#allocation6], 512
        $region92: #{tpu_custom_call.1} parent=87 // pred_fallthru
          _
        // Predicated region
        $region93: #{tpu_custom_call.1} parent=87 // pred_check
          %p546 = pneg %p213
        $region94: #{tpu_custom_call.1} parent=87 // pred_check_branch
          %548 = sbr.rel (%p546) target = $region96
        $region95: #{tpu_custom_call.1} parent=87 // pred_region
          %549 = dma.done [#allocation9], 512
        $region96: #{tpu_custom_call.1} parent=87 // pred_fallthru
          _
        // Predicated region
        $region97: #{tpu_custom_call.1} parent=87 // pred_check
          %p550 = pneg %p255
        $region98: #{tpu_custom_call.1} parent=87 // pred_check_branch
          %552 = sbr.rel (%p550) target = $region100
        $region99: #{tpu_custom_call.1} parent=87 // pred_region
          %553 = dma.done [#allocation9], 512
        $region100: #{tpu_custom_call.1} parent=87 // pred_fallthru
          _
        %p554 = scmp.lt.s32.totalorder %s37, 1
        %s555 = scalar_select %p554, %s37, 1
        %s556 = smul.addr %s555, 2
        %s557 = smul.addr %s556, 8
        %s558 = scalar_lea.vmem %s0, %s557
        %p559 = pneg %p66
        %p560 = pneg %p63
        %p561 = pneg %p87
        %p562 = pneg %p84
        %p563 = pneg %p108
        %p564 = pneg %p105
        %p565 = pneg %p129
        %p566 = pneg %p126
        %p567 = pneg %p150
        %p568 = pneg %p147
        %p569 = pneg %p171
        %p570 = pneg %p168
        %p571 = pneg %p192
        %p572 = pneg %p189
        %p573 = pneg %p213
        %p574 = pneg %p210
        %p575 = pneg %p234
        %p576 = pneg %p231
        %p577 = pneg %p255
        %p578 = pneg %p252
        %p579 = pneg %p276
        %p580 = pneg %p273
        %p581 = pneg %p297
        %p582 = pneg %p294
        %p583 = pneg %p318
        %p584 = pneg %p315
        %p585 = pneg %p339
        %p586 = pneg %p336
        %p587 = pneg %p360
        %p588 = pneg %p357
        %p589 = pneg %p381
        %p590 = pneg %p378
        %p591 = pneg %p402
        %p592 = pneg %p399
        %p593 = pneg %p430
        %p594 = pneg %p427
        %s595 = sand.u32 %s417, 1
        %s596 = scalar_lea.sflag [#allocation7], %s595
        %s597 = sand.u32 %s417, 1
        %s598 = smul.addr %s597, 8
        %s599 = scalar_lea.vmem [#allocation11], %s598
        %p600 = scmp.lt.s32.totalorder %s37, 1
        %s601 = scalar_select %p600, %s37, 1
        %s602 = smul.addr %s601, 2
        %s603 = smul.addr %s602, 8
        %s604 = scalar_lea.vmem %s0, %s603
        %p605 = scmp.eq.s32.totalorder %s38, 0
        // Predicated region
        $region101: #{tpu_custom_call.1} parent=87 // pred_check
          %p606 = pneg %p605
        $region102: #{tpu_custom_call.1} parent=87 // pred_check_branch
          %608 = sbr.rel (%p606) target = $region104
        $region103: #{tpu_custom_call.1} parent=87 // pred_region
          %v609 = vld [vmem:[%s604] sm:$0xff]
          %v610 = vld [vmem:[%s604 + $0x8] sm:$0xff]
          %v611 = vld [vmem:[%s3] sm:$0xff]
          %v612 = vld [vmem:[%s3 + $0x8] sm:$0xff]
          %v613 = vld [vmem:[%s3 + $0x10] sm:$0xff]
          %v614 = vld [vmem:[%s3 + $0x18] sm:$0xff]
          %v615 = vld [vmem:[%s4] sm:$0x1]
          %v617 = vlaneseq
          %v618 = vshrl.u32 %v617, 7
          %v619 = vsub.s32 0, %v618
          %v620 = vrot.slane %v615, %v619
          %vm622 = vcmask 261120
          %v624 = vsel %vm622, %v609, 0
          %v627 = vsel %vm622, %v610, 0
          %629 = vmatprep.subr.mxu0 0.0
          %630 = vmatpush1.msra.mxu0 %v611
          %631 = vmatprep.subr.mxu0 0.0
          %632 = vmatpush1.msra.mxu0 %v612
          %633 = vmatprep.subr.mxu0 0.0
          %634 = vmatpush1.msra.mxu0 %v613
          %635 = vmatprep.subr.mxu0 0.0
          %636 = vmatpush1.msra.mxu0 %v614
          %637 = vmatprep.subr.mxu0 0.0
          %638 = vmatpush1.msra.mxu0 0.0
          %639 = vmatprep.subr.mxu0 0.0
          %640 = vmatpush1.msra.mxu0 0.0
          %641 = vmatprep.subr.mxu0 0.0
          %642 = vmatpush1.msra.mxu0 0.0
          %643 = vmatprep.subr.mxu0 0.0
          %644 = vmatpush1.msra.mxu0 0.0
          %645 = vmatprep.subr.mxu0 0.0
          %646 = vmatpush1.msra.mxu0 0.0
          %647 = vmatprep.subr.mxu0 0.0
          %648 = vmatpush1.msra.mxu0 0.0
          %649 = vmatprep.subr.mxu0 0.0
          %650 = vmatpush1.msra.mxu0 0.0
          %651 = vmatprep.subr.mxu0 0.0
          %652 = vmatpush1.msra.mxu0 0.0
          %653 = vmatprep.subr.mxu0 0.0
          %654 = vmatpush1.msra.mxu0 0.0
          %655 = vmatprep.subr.mxu0 0.0
          %656 = vmatpush1.msra.mxu0 0.0
          %657 = vmatprep.subr.mxu0 0.0
          %658 = vmatpush1.msra.mxu0 0.0
          %659 = vmatprep.subr.mxu0 0.0
          %660 = vmatpush1.msra.mxu0 0.0
          %661 = vmatprep.subr.mxu0 0.0
          %662 = vmatpush1.msra.mxu0 0.0
          %663 = vmatprep.subr.mxu0 0.0
          %664 = vmatpush1.msra.mxu0 0.0
          %665 = vmatprep.subr.mxu0 0.0
          %666 = vmatpush1.msra.mxu0 0.0
          %667 = vmatprep.subr.mxu0 0.0
          %668 = vmatpush1.msra.mxu0 0.0
          %669 = vmatprep.subr.mxu0 0.0
          %670 = vmatpush1.msra.mxu0 0.0
          %671 = vmatprep.subr.mxu0 0.0
          %672 = vmatpush1.msra.mxu0 0.0
          %673 = vmatprep.subr.mxu0 0.0
          %674 = vmatpush1.msra.mxu0 0.0
          %675 = vmatprep.subr.mxu0 0.0
          %676 = vmatpush1.msra.mxu0 0.0
          %677 = vmatprep.subr.mxu0 0.0
          %678 = vmatpush1.msra.mxu0 0.0
          %679 = vmatprep.subr.mxu0 0.0
          %680 = vmatpush1.msra.mxu0 0.0
          %681 = vmatprep.subr.mxu0 0.0
          %682 = vmatpush1.msra.mxu0 0.0
          %683 = vmatprep.subr.mxu0 0.0
          %684 = vmatpush1.msra.mxu0 0.0
          %685 = vmatprep.subr.mxu0 0.0
          %686 = vmatpush1.msra.mxu0 0.0
          %687 = vmatprep.subr.mxu0 0.0
          %688 = vmatpush1.msra.mxu0 0.0
          %689 = vmatprep.subr.mxu0 0.0
          %690 = vmatpush1.msra.mxu0 0.0
          %691 = vmatprep.subr.mxu0 0.0
          %692 = vmatpush1.msra.mxu0 0.0
          %693 = vmatprep.mubr.f32.mxu0 0.0
          %694 = vmatmul.mubr.f32.gmra.mrb[0].mxu0 %v624
          %v695 = vpop.f32.mrb[0].mxu0
          %v696 = vadd.f32 %v620, %v695
          %v697 = vpop.f32.mrb[0].mxu0
          %698 = vmatprep.mubr.f32.mxu0 0.0
          %699 = vmatmul.mubr.f32.gmra.mrb[0].mxu0 %v627
          %v700 = vpop.f32.mrb[0].mxu0
          %v701 = vadd.f32 %v620, %v700
          %v702 = vpop.f32.mrb[0].mxu0
          %703 = vdwg.mxu0
          %v704 = vld [vmem:[#allocation5] sm:$0xff]
          %v705 = vld [vmem:[#allocation5 + $0x8] sm:$0xff]
          %v706 = vld [vmem:[#allocation5 + $0x10] sm:$0xff]
          %v707 = vld [vmem:[#allocation5 + $0x18] sm:$0xff]
          %v708 = vld [vmem:[%s6] sm:$0x1]
          %v710 = vlaneseq
          %v711 = vshrl.u32 %v710, 7
          %v712 = vsub.s32 0, %v711
          %v713 = vrot.slane %v708, %v712
          %715 = vmatprep.subr.mxu0 0.0
          %716 = vmatpush1.msra.mxu0 %v704
          %717 = vmatprep.subr.mxu0 0.0
          %718 = vmatpush1.msra.mxu0 %v705
          %719 = vmatprep.subr.mxu0 0.0
          %720 = vmatpush1.msra.mxu0 %v706
          %721 = vmatprep.subr.mxu0 0.0
          %722 = vmatpush1.msra.mxu0 %v707
          %723 = vmatprep.subr.mxu0 0.0
          %724 = vmatpush1.msra.mxu0 0.0
          %725 = vmatprep.subr.mxu0 0.0
          %726 = vmatpush1.msra.mxu0 0.0
          %727 = vmatprep.subr.mxu0 0.0
          %728 = vmatpush1.msra.mxu0 0.0
          %729 = vmatprep.subr.mxu0 0.0
          %730 = vmatpush1.msra.mxu0 0.0
          %731 = vmatprep.subr.mxu0 0.0
          %732 = vmatpush1.msra.mxu0 0.0
          %733 = vmatprep.subr.mxu0 0.0
          %734 = vmatpush1.msra.mxu0 0.0
          %735 = vmatprep.subr.mxu0 0.0
          %736 = vmatpush1.msra.mxu0 0.0
          %737 = vmatprep.subr.mxu0 0.0
          %738 = vmatpush1.msra.mxu0 0.0
          %739 = vmatprep.subr.mxu0 0.0
          %740 = vmatpush1.msra.mxu0 0.0
          %741 = vmatprep.subr.mxu0 0.0
          %742 = vmatpush1.msra.mxu0 0.0
          %743 = vmatprep.subr.mxu0 0.0
          %744 = vmatpush1.msra.mxu0 0.0
          %745 = vmatprep.subr.mxu0 0.0
          %746 = vmatpush1.msra.mxu0 0.0
          %747 = vmatprep.subr.mxu0 0.0
          %748 = vmatpush1.msra.mxu0 0.0
          %749 = vmatprep.subr.mxu0 0.0
          %750 = vmatpush1.msra.mxu0 0.0
          %751 = vmatprep.subr.mxu0 0.0
          %752 = vmatpush1.msra.mxu0 0.0
          %753 = vmatprep.subr.mxu0 0.0
          %754 = vmatpush1.msra.mxu0 0.0
          %755 = vmatprep.subr.mxu0 0.0
          %756 = vmatpush1.msra.mxu0 0.0
          %757 = vmatprep.subr.mxu0 0.0
          %758 = vmatpush1.msra.mxu0 0.0
          %759 = vmatprep.subr.mxu0 0.0
          %760 = vmatpush1.msra.mxu0 0.0
          %761 = vmatprep.subr.mxu0 0.0
          %762 = vmatpush1.msra.mxu0 0.0
          %763 = vmatprep.subr.mxu0 0.0
          %764 = vmatpush1.msra.mxu0 0.0
          %765 = vmatprep.subr.mxu0 0.0
          %766 = vmatpush1.msra.mxu0 0.0
          %767 = vmatprep.subr.mxu0 0.0
          %768 = vmatpush1.msra.mxu0 0.0
          %769 = vmatprep.subr.mxu0 0.0
          %770 = vmatpush1.msra.mxu0 0.0
          %771 = vmatprep.subr.mxu0 0.0
          %772 = vmatpush1.msra.mxu0 0.0
          %773 = vmatprep.subr.mxu0 0.0
          %774 = vmatpush1.msra.mxu0 0.0
          %775 = vmatprep.subr.mxu0 0.0
          %776 = vmatpush1.msra.mxu0 0.0
          %777 = vmatprep.subr.mxu0 0.0
          %778 = vmatpush1.msra.mxu0 0.0
          %779 = vmatprep.mubr.f32.mxu0 0.0
          %780 = vmatmul.mubr.f32.gmra.mrb[0].mxu0 %v624
          %v781 = vpop.f32.mrb[0].mxu0
          %v782 = vadd.f32 %v713, %v781
          %v783 = vpop.f32.mrb[0].mxu0
          %784 = vmatprep.mubr.f32.mxu0 0.0
          %785 = vmatmul.mubr.f32.gmra.mrb[0].mxu0 %v627
          %v786 = vpop.f32.mrb[0].mxu0
          %v787 = vadd.f32 %v713, %v786
          %v788 = vpop.f32.mrb[0].mxu0
          %789 = vdwg.mxu0
          %790 = vst.msk [vmem:[#allocation2] sm:$0xff] %vm622, %v696
          %791 = vst.msk [vmem:[#allocation2 + $0x8] sm:$0xff] %vm622, %v701
          %792 = vst.msk [vmem:[#allocation3] sm:$0xff] %vm622, %v782
          %793 = vst.msk [vmem:[#allocation3 + $0x8] sm:$0xff] %vm622, %v787
        $region104: #{tpu_custom_call.1} parent=87 // pred_fallthru
          _
        %s794 = smul.u32 %s38, 8
        %s795 = scalar_lea.vmem %s604, %s794
        %v796 = vld [vmem:[%s795] sm:$0xff]
        %v797 = vld [vmem:[%s1] sm:$0xff]
        %v798 = vld [vmem:[%s1 + $0x8] sm:$0xff]
        %v799 = vld [vmem:[%s1 + $0x10] sm:$0xff]
        %v800 = vld [vmem:[%s1 + $0x18] sm:$0xff]
        %v801 = vld [vmem:[%s2] sm:$0x1]
        %v803 = vlaneseq
        %v804 = vshrl.u32 %v803, 7
        %v805 = vsub.s32 0, %v804
        %v806 = vrot.slane %v801, %v805
        %vm808 = vcmask 261120
        %v810 = vsel %vm808, %v796, 0
        %812 = vmatprep.subr.mxu0 0.0
        %813 = vmatpush1.msra.mxu0 %v797
        %814 = vmatprep.subr.mxu0 0.0
        %815 = vmatpush1.msra.mxu0 %v798
        %816 = vmatprep.subr.mxu0 0.0
        %817 = vmatpush1.msra.mxu0 %v799
        %818 = vmatprep.subr.mxu0 0.0
        %819 = vmatpush1.msra.mxu0 %v800
        %820 = vmatprep.subr.mxu0 0.0
        %821 = vmatpush1.msra.mxu0 0.0
        %822 = vmatprep.subr.mxu0 0.0
        %823 = vmatpush1.msra.mxu0 0.0
        %824 = vmatprep.subr.mxu0 0.0
        %825 = vmatpush1.msra.mxu0 0.0
        %826 = vmatprep.subr.mxu0 0.0
        %827 = vmatpush1.msra.mxu0 0.0
        %828 = vmatprep.subr.mxu0 0.0
        %829 = vmatpush1.msra.mxu0 0.0
        %830 = vmatprep.subr.mxu0 0.0
        %831 = vmatpush1.msra.mxu0 0.0
        %832 = vmatprep.subr.mxu0 0.0
        %833 = vmatpush1.msra.mxu0 0.0
        %834 = vmatprep.subr.mxu0 0.0
        %835 = vmatpush1.msra.mxu0 0.0
        %836 = vmatprep.subr.mxu0 0.0
        %837 = vmatpush1.msra.mxu0 0.0
        %838 = vmatprep.subr.mxu0 0.0
        %839 = vmatpush1.msra.mxu0 0.0
        %840 = vmatprep.subr.mxu0 0.0
        %841 = vmatpush1.msra.mxu0 0.0
        %842 = vmatprep.subr.mxu0 0.0
        %843 = vmatpush1.msra.mxu0 0.0
        %844 = vmatprep.subr.mxu0 0.0
        %845 = vmatpush1.msra.mxu0 0.0
        %846 = vmatprep.subr.mxu0 0.0
        %847 = vmatpush1.msra.mxu0 0.0
        %848 = vmatprep.subr.mxu0 0.0
        %849 = vmatpush1.msra.mxu0 0.0
        %850 = vmatprep.subr.mxu0 0.0
        %851 = vmatpush1.msra.mxu0 0.0
        %852 = vmatprep.subr.mxu0 0.0
        %853 = vmatpush1.msra.mxu0 0.0
        %854 = vmatprep.subr.mxu0 0.0
        %855 = vmatpush1.msra.mxu0 0.0
        %856 = vmatprep.subr.mxu0 0.0
        %857 = vmatpush1.msra.mxu0 0.0
        %858 = vmatprep.subr.mxu0 0.0
        %859 = vmatpush1.msra.mxu0 0.0
        %860 = vmatprep.subr.mxu0 0.0
        %861 = vmatpush1.msra.mxu0 0.0
        %862 = vmatprep.subr.mxu0 0.0
        %863 = vmatpush1.msra.mxu0 0.0
        %864 = vmatprep.subr.mxu0 0.0
        %865 = vmatpush1.msra.mxu0 0.0
        %866 = vmatprep.subr.mxu0 0.0
        %867 = vmatpush1.msra.mxu0 0.0
        %868 = vmatprep.subr.mxu0 0.0
        %869 = vmatpush1.msra.mxu0 0.0
        %870 = vmatprep.subr.mxu0 0.0
        %871 = vmatpush1.msra.mxu0 0.0
        %872 = vmatprep.subr.mxu0 0.0
        %873 = vmatpush1.msra.mxu0 0.0
        %874 = vmatprep.subr.mxu0 0.0
        %875 = vmatpush1.msra.mxu0 0.0
        %876 = vmatprep.mubr.f32.mxu0 0.0
        %877 = vmatmul.mubr.f32.gmra.mrb[0].mxu0 %v810
        %v878 = vpop.f32.mrb[0].mxu0
        %v879 = vadd.f32 %v806, %v878
        %v880 = vpop.f32.mrb[0].mxu0
        %881 = vdwg.mxu0
        %v882 = vld [vmem:[#allocation2] sm:$0xff]
        %v883 = vld [vmem:[#allocation2 + $0x8] sm:$0xff]
        %v884 = vld [vmem:[#allocation3] sm:$0xff]
        %v885 = vld [vmem:[#allocation3 + $0x8] sm:$0xff]
        %vm886 = vcmask 64512
        %v888 = vsel %vm886, %v879, 0
        %v891 = vsel %vm886, %v882, 0
        %v894 = vsel %vm886, %v883, 0
        %896 = vmatprep.subr.mxu0 0.0
        %897 = vmatpush1.xpose.msra.mxu0 %v891
        %898 = vmatprep.subr.mxu0 0.0
        %899 = vmatpush1.xpose.msra.mxu0 %v894
        %900 = vmatprep.subr.mxu0 0.0
        %901 = vmatpush1.xpose.msra.mxu0 0.0
        %902 = vmatprep.subr.mxu0 0.0
        %903 = vmatpush1.xpose.msra.mxu0 0.0
        %904 = vmatprep.subr.mxu0 0.0
        %905 = vmatpush1.xpose.msra.mxu0 0.0
        %906 = vmatprep.subr.mxu0 0.0
        %907 = vmatpush1.xpose.msra.mxu0 0.0
        %908 = vmatprep.subr.mxu0 0.0
        %909 = vmatpush1.xpose.msra.mxu0 0.0
        %910 = vmatprep.subr.mxu0 0.0
        %911 = vmatpush1.xpose.msra.mxu0 0.0
        %912 = vmatprep.subr.mxu0 0.0
        %913 = vmatpush1.xpose.msra.mxu0 0.0
        %914 = vmatprep.subr.mxu0 0.0
        %915 = vmatpush1.xpose.msra.mxu0 0.0
        %916 = vmatprep.subr.mxu0 0.0
        %917 = vmatpush1.xpose.msra.mxu0 0.0
        %918 = vmatprep.subr.mxu0 0.0
        %919 = vmatpush1.xpose.msra.mxu0 0.0
        %920 = vmatprep.subr.mxu0 0.0
        %921 = vmatpush1.xpose.msra.mxu0 0.0
        %922 = vmatprep.subr.mxu0 0.0
        %923 = vmatpush1.xpose.msra.mxu0 0.0
        %924 = vmatprep.subr.mxu0 0.0
        %925 = vmatpush1.xpose.msra.mxu0 0.0
        %926 = vmatprep.subr.mxu0 0.0
        %927 = vmatpush1.xpose.msra.mxu0 0.0
        %928 = vmatprep.subr.mxu0 0.0
        %929 = vmatpush1.xpose.msra.mxu0 0.0
        %930 = vmatprep.subr.mxu0 0.0
        %931 = vmatpush1.xpose.msra.mxu0 0.0
        %932 = vmatprep.subr.mxu0 0.0
        %933 = vmatpush1.xpose.msra.mxu0 0.0
        %934 = vmatprep.subr.mxu0 0.0
        %935 = vmatpush1.xpose.msra.mxu0 0.0
        %936 = vmatprep.subr.mxu0 0.0
        %937 = vmatpush1.xpose.msra.mxu0 0.0
        %938 = vmatprep.subr.mxu0 0.0
        %939 = vmatpush1.xpose.msra.mxu0 0.0
        %940 = vmatprep.subr.mxu0 0.0
        %941 = vmatpush1.xpose.msra.mxu0 0.0
        %942 = vmatprep.subr.mxu0 0.0
        %943 = vmatpush1.xpose.msra.mxu0 0.0
        %944 = vmatprep.subr.mxu0 0.0
        %945 = vmatpush1.xpose.msra.mxu0 0.0
        %946 = vmatprep.subr.mxu0 0.0
        %947 = vmatpush1.xpose.msra.mxu0 0.0
        %948 = vmatprep.subr.mxu0 0.0
        %949 = vmatpush1.xpose.msra.mxu0 0.0
        %950 = vmatprep.subr.mxu0 0.0
        %951 = vmatpush1.xpose.msra.mxu0 0.0
        %952 = vmatprep.subr.mxu0 0.0
        %953 = vmatpush1.xpose.msra.mxu0 0.0
        %954 = vmatprep.subr.mxu0 0.0
        %955 = vmatpush1.xpose.msra.mxu0 0.0
        %956 = vmatprep.subr.mxu0 0.0
        %957 = vmatpush1.xpose.msra.mxu0 0.0
        %958 = vmatprep.subr.mxu0 0.0
        %959 = vmatpush1.xpose.msra.mxu0 0.0
        %960 = vmatprep.mubr.f32.mxu0 0.0
        %961 = vmatmul.mubr.f32.gmra.mrb[0].mxu0 %v888
        %v962 = vpop.f32.mrb[0].mxu0
        %v963 = vadd.f32 0.0, %v962
        %v964 = vpop.f32.mrb[0].mxu0
        %965 = vdwg.mxu0
        %vm966 = vcmask 130048
        %v967 = vsel %vm966, %v963, -inf
        %968 = vmax.xlane.f32.xlu0 %v967
        %v969 = vpop.xlane.xlu0 %968
        %v970 = vsub.f32 %v963, %v969
        %v971 = vmul.f32 %v970, 1.442695
        %v972 = vpow.pop %v971
        %v973 = vsel %vm966, %v972, 0.0
        %974 = vadd.xlane.f32.xlu0 %v973
        %v975 = vpop.xlane.xlu0 %974
        %v976 = vrcp.pop %v975
        %v977 = vmul.f32 %v972, %v976
        %v979 = vsel %vm966, %v977, 0
        %981 = vmatprep.subr.mxu0 0.0
        %982 = vmatpush1.msra.mxu0 %v884
        %983 = vmatprep.subr.mxu0 0.0
        %984 = vmatpush1.msra.mxu0 %v885
        %985 = vmatprep.subr.mxu0 0.0
        %986 = vmatpush1.msra.mxu0 0.0
        %987 = vmatprep.subr.mxu0 0.0
        %988 = vmatpush1.msra.mxu0 0.0
        %989 = vmatprep.subr.mxu0 0.0
        %990 = vmatpush1.msra.mxu0 0.0
        %991 = vmatprep.subr.mxu0 0.0
        %992 = vmatpush1.msra.mxu0 0.0
        %993 = vmatprep.subr.mxu0 0.0
        %994 = vmatpush1.msra.mxu0 0.0
        %995 = vmatprep.subr.mxu0 0.0
        %996 = vmatpush1.msra.mxu0 0.0
        %997 = vmatprep.subr.mxu0 0.0
        %998 = vmatpush1.msra.mxu0 0.0
        %999 = vmatprep.subr.mxu0 0.0
        %1000 = vmatpush1.msra.mxu0 0.0
        %1001 = vmatprep.subr.mxu0 0.0
        %1002 = vmatpush1.msra.mxu0 0.0
        %1003 = vmatprep.subr.mxu0 0.0
        %1004 = vmatpush1.msra.mxu0 0.0
        %1005 = vmatprep.subr.mxu0 0.0
        %1006 = vmatpush1.msra.mxu0 0.0
        %1007 = vmatprep.subr.mxu0 0.0
        %1008 = vmatpush1.msra.mxu0 0.0
        %1009 = vmatprep.subr.mxu0 0.0
        %1010 = vmatpush1.msra.mxu0 0.0
        %1011 = vmatprep.subr.mxu0 0.0
        %1012 = vmatpush1.msra.mxu0 0.0
        %1013 = vmatprep.subr.mxu0 0.0
        %1014 = vmatpush1.msra.mxu0 0.0
        %1015 = vmatprep.subr.mxu0 0.0
        %1016 = vmatpush1.msra.mxu0 0.0
        %1017 = vmatprep.subr.mxu0 0.0
        %1018 = vmatpush1.msra.mxu0 0.0
        %1019 = vmatprep.subr.mxu0 0.0
        %1020 = vmatpush1.msra.mxu0 0.0
        %1021 = vmatprep.subr.mxu0 0.0
        %1022 = vmatpush1.msra.mxu0 0.0
        %1023 = vmatprep.subr.mxu0 0.0
        %1024 = vmatpush1.msra.mxu0 0.0
        %1025 = vmatprep.subr.mxu0 0.0
        %1026 = vmatpush1.msra.mxu0 0.0
        %1027 = vmatprep.subr.mxu0 0.0
        %1028 = vmatpush1.msra.mxu0 0.0
        %1029 = vmatprep.subr.mxu0 0.0
        %1030 = vmatpush1.msra.mxu0 0.0
        %1031 = vmatprep.subr.mxu0 0.0
        %1032 = vmatpush1.msra.mxu0 0.0
        %1033 = vmatprep.subr.mxu0 0.0
        %1034 = vmatpush1.msra.mxu0 0.0
        %1035 = vmatprep.subr.mxu0 0.0
        %1036 = vmatpush1.msra.mxu0 0.0
        %1037 = vmatprep.subr.mxu0 0.0
        %1038 = vmatpush1.msra.mxu0 0.0
        %1039 = vmatprep.subr.mxu0 0.0
        %1040 = vmatpush1.msra.mxu0 0.0
        %1041 = vmatprep.subr.mxu0 0.0
        %1042 = vmatpush1.msra.mxu0 0.0
        %1043 = vmatprep.subr.mxu0 0.0
        %1044 = vmatpush1.msra.mxu0 0.0
        %1045 = vmatprep.mubr.f32.mxu0 0.0
        %1046 = vmatmul.mubr.f32.gmra.mrb[0].mxu0 %v979
        %v1047 = vpop.f32.mrb[0].mxu0
        %v1048 = vadd.f32 0.0, %v1047
        %v1049 = vpop.f32.mrb[0].mxu0
        %1050 = vdwg.mxu0
        %1051 = vst.msk [vmem:[#allocation4] sm:$0xff] %vm886, %v1048
        %1052 = vrot.lane.b32.xlu0 %v879, 120
        %v1053 = vpop.permute.xlu0 %1052
        %1054 = vrot.lane.b32.xlu0 %v882, 120
        %v1055 = vpop.permute.xlu0 %1054
        %1056 = vrot.lane.b32.xlu0 %v883, 120
        %v1057 = vpop.permute.xlu0 %1056
        %v1058 = vsel %vm886, %v1053, 0
        %v1060 = vsel %vm886, %v1055, 0
        %v1062 = vsel %vm886, %v1057, 0
        %1064 = vmatprep.subr.mxu0 0.0
        %1065 = vmatpush1.xpose.msra.mxu0 %v1060
        %1066 = vmatprep.subr.mxu0 0.0
        %1067 = vmatpush1.xpose.msra.mxu0 %v1062
        %1068 = vmatprep.subr.mxu0 0.0
        %1069 = vmatpush1.xpose.msra.mxu0 0.0
        %1070 = vmatprep.subr.mxu0 0.0
        %1071 = vmatpush1.xpose.msra.mxu0 0.0
        %1072 = vmatprep.subr.mxu0 0.0
        %1073 = vmatpush1.xpose.msra.mxu0 0.0
        %1074 = vmatprep.subr.mxu0 0.0
        %1075 = vmatpush1.xpose.msra.mxu0 0.0
        %1076 = vmatprep.subr.mxu0 0.0
        %1077 = vmatpush1.xpose.msra.mxu0 0.0
        %1078 = vmatprep.subr.mxu0 0.0
        %1079 = vmatpush1.xpose.msra.mxu0 0.0
        %1080 = vmatprep.subr.mxu0 0.0
        %1081 = vmatpush1.xpose.msra.mxu0 0.0
        %1082 = vmatprep.subr.mxu0 0.0
        %1083 = vmatpush1.xpose.msra.mxu0 0.0
        %1084 = vmatprep.subr.mxu0 0.0
        %1085 = vmatpush1.xpose.msra.mxu0 0.0
        %1086 = vmatprep.subr.mxu0 0.0
        %1087 = vmatpush1.xpose.msra.mxu0 0.0
        %1088 = vmatprep.subr.mxu0 0.0
        %1089 = vmatpush1.xpose.msra.mxu0 0.0
        %1090 = vmatprep.subr.mxu0 0.0
        %1091 = vmatpush1.xpose.msra.mxu0 0.0
        %1092 = vmatprep.subr.mxu0 0.0
        %1093 = vmatpush1.xpose.msra.mxu0 0.0
        %1094 = vmatprep.subr.mxu0 0.0
        %1095 = vmatpush1.xpose.msra.mxu0 0.0
        %1096 = vmatprep.subr.mxu0 0.0
        %1097 = vmatpush1.xpose.msra.mxu0 0.0
        %1098 = vmatprep.subr.mxu0 0.0
        %1099 = vmatpush1.xpose.msra.mxu0 0.0
        %1100 = vmatprep.subr.mxu0 0.0
        %1101 = vmatpush1.xpose.msra.mxu0 0.0
        %1102 = vmatprep.subr.mxu0 0.0
        %1103 = vmatpush1.xpose.msra.mxu0 0.0
        %1104 = vmatprep.subr.mxu0 0.0
        %1105 = vmatpush1.xpose.msra.mxu0 0.0
        %1106 = vmatprep.subr.mxu0 0.0
        %1107 = vmatpush1.xpose.msra.mxu0 0.0
        %1108 = vmatprep.subr.mxu0 0.0
        %1109 = vmatpush1.xpose.msra.mxu0 0.0
        %1110 = vmatprep.subr.mxu0 0.0
        %1111 = vmatpush1.xpose.msra.mxu0 0.0
        %1112 = vmatprep.subr.mxu0 0.0
        %1113 = vmatpush1.xpose.msra.mxu0 0.0
        %1114 = vmatprep.subr.mxu0 0.0
        %1115 = vmatpush1.xpose.msra.mxu0 0.0
        %1116 = vmatprep.subr.mxu0 0.0
        %1117 = vmatpush1.xpose.msra.mxu0 0.0
        %1118 = vmatprep.subr.mxu0 0.0
        %1119 = vmatpush1.xpose.msra.mxu0 0.0
        %1120 = vmatprep.subr.mxu0 0.0
        %1121 = vmatpush1.xpose.msra.mxu0 0.0
        %1122 = vmatprep.subr.mxu0 0.0
        %1123 = vmatpush1.xpose.msra.mxu0 0.0
        %1124 = vmatprep.subr.mxu0 0.0
        %1125 = vmatpush1.xpose.msra.mxu0 0.0
        %1126 = vmatprep.subr.mxu0 0.0
        %1127 = vmatpush1.xpose.msra.mxu0 0.0
        %1128 = vmatprep.mubr.f32.mxu0 0.0
        %1129 = vmatmul.mubr.f32.gmra.mrb[0].mxu0 %v1058
        %v1130 = vpop.f32.mrb[0].mxu0
        %v1131 = vadd.f32 0.0, %v1130
        %v1132 = vpop.f32.mrb[0].mxu0
        %1133 = vdwg.mxu0
        %v1134 = vsel %vm966, %v1131, -inf
        %1135 = vmax.xlane.f32.xlu0 %v1134
        %v1136 = vpop.xlane.xlu0 %1135
        %v1137 = vsub.f32 %v1131, %v1136
        %v1138 = vmul.f32 %v1137, 1.442695
        %v1139 = vpow.pop %v1138
        %v1140 = vsel %vm966, %v1139, 0.0
        %1141 = vadd.xlane.f32.xlu0 %v1140
        %v1142 = vpop.xlane.xlu0 %1141
        %v1143 = vrcp.pop %v1142
        %v1144 = vmul.f32 %v1139, %v1143
        %1147 = vrot.lane.b32.xlu0 %v884, 120
        %v1148 = vpop.permute.xlu0 %1147
        %1149 = vrot.lane.b32.xlu0 %v885, 120
        %v1150 = vpop.permute.xlu0 %1149
        %v1154 = vsel %vm966, %v1144, 0
        %1156 = vmatprep.subr.mxu0 0.0
        %1157 = vmatpush1.msra.mxu0 %v1148
        %1158 = vmatprep.subr.mxu0 0.0
        %1159 = vmatpush1.msra.mxu0 %v1150
        %1160 = vmatprep.subr.mxu0 0.0
        %1161 = vmatpush1.msra.mxu0 0.0
        %1162 = vmatprep.subr.mxu0 0.0
        %1163 = vmatpush1.msra.mxu0 0.0
        %1164 = vmatprep.subr.mxu0 0.0
        %1165 = vmatpush1.msra.mxu0 0.0
        %1166 = vmatprep.subr.mxu0 0.0
        %1167 = vmatpush1.msra.mxu0 0.0
        %1168 = vmatprep.subr.mxu0 0.0
        %1169 = vmatpush1.msra.mxu0 0.0
        %1170 = vmatprep.subr.mxu0 0.0
        %1171 = vmatpush1.msra.mxu0 0.0
        %1172 = vmatprep.subr.mxu0 0.0
        %1173 = vmatpush1.msra.mxu0 0.0
        %1174 = vmatprep.subr.mxu0 0.0
        %1175 = vmatpush1.msra.mxu0 0.0
        %1176 = vmatprep.subr.mxu0 0.0
        %1177 = vmatpush1.msra.mxu0 0.0
        %1178 = vmatprep.subr.mxu0 0.0
        %1179 = vmatpush1.msra.mxu0 0.0
        %1180 = vmatprep.subr.mxu0 0.0
        %1181 = vmatpush1.msra.mxu0 0.0
        %1182 = vmatprep.subr.mxu0 0.0
        %1183 = vmatpush1.msra.mxu0 0.0
        %1184 = vmatprep.subr.mxu0 0.0
        %1185 = vmatpush1.msra.mxu0 0.0
        %1186 = vmatprep.subr.mxu0 0.0
        %1187 = vmatpush1.msra.mxu0 0.0
        %1188 = vmatprep.subr.mxu0 0.0
        %1189 = vmatpush1.msra.mxu0 0.0
        %1190 = vmatprep.subr.mxu0 0.0
        %1191 = vmatpush1.msra.mxu0 0.0
        %1192 = vmatprep.subr.mxu0 0.0
        %1193 = vmatpush1.msra.mxu0 0.0
        %1194 = vmatprep.subr.mxu0 0.0
        %1195 = vmatpush1.msra.mxu0 0.0
        %1196 = vmatprep.subr.mxu0 0.0
        %1197 = vmatpush1.msra.mxu0 0.0
        %1198 = vmatprep.subr.mxu0 0.0
        %1199 = vmatpush1.msra.mxu0 0.0
        %1200 = vmatprep.subr.mxu0 0.0
        %1201 = vmatpush1.msra.mxu0 0.0
        %1202 = vmatprep.subr.mxu0 0.0
        %1203 = vmatpush1.msra.mxu0 0.0
        %1204 = vmatprep.subr.mxu0 0.0
        %1205 = vmatpush1.msra.mxu0 0.0
        %1206 = vmatprep.subr.mxu0 0.0
        %1207 = vmatpush1.msra.mxu0 0.0
        %1208 = vmatprep.subr.mxu0 0.0
        %1209 = vmatpush1.msra.mxu0 0.0
        %1210 = vmatprep.subr.mxu0 0.0
        %1211 = vmatpush1.msra.mxu0 0.0
        %1212 = vmatprep.subr.mxu0 0.0
        %1213 = vmatpush1.msra.mxu0 0.0
        %1214 = vmatprep.subr.mxu0 0.0
        %1215 = vmatpush1.msra.mxu0 0.0
        %1216 = vmatprep.subr.mxu0 0.0
        %1217 = vmatpush1.msra.mxu0 0.0
        %1218 = vmatprep.subr.mxu0 0.0
        %1219 = vmatpush1.msra.mxu0 0.0
        %1220 = vmatprep.mubr.f32.mxu0 0.0
        %1221 = vmatmul.mubr.f32.gmra.mrb[0].mxu0 %v1154
        %v1222 = vpop.f32.mrb[0].mxu0
        %v1223 = vadd.f32 0.0, %v1222
        %v1224 = vpop.f32.mrb[0].mxu0
        %1225 = vdwg.mxu0
        %1227 = vrot.lane.b32.xlu0 %v1223, 8
        %v1228 = vpop.permute.xlu0 %1227
        %vm1230 = vcmask 130112
        %1231 = vst.msk [vmem:[#allocation4] sm:$0xff] %vm1230, %v1228
        %1232 = vrot.lane.b32.xlu0 %v879, 112
        %v1233 = vpop.permute.xlu0 %1232
        %1234 = vrot.lane.b32.xlu0 %v882, 112
        %v1235 = vpop.permute.xlu0 %1234
        %1236 = vrot.lane.b32.xlu0 %v883, 112
        %v1237 = vpop.permute.xlu0 %1236
        %v1238 = vsel %vm886, %v1233, 0
        %v1240 = vsel %vm886, %v1235, 0
        %v1242 = vsel %vm886, %v1237, 0
        %1244 = vmatprep.subr.mxu0 0.0
        %1245 = vmatpush1.xpose.msra.mxu0 %v1240
        %1246 = vmatprep.subr.mxu0 0.0
        %1247 = vmatpush1.xpose.msra.mxu0 %v1242
        %1248 = vmatprep.subr.mxu0 0.0
        %1249 = vmatpush1.xpose.msra.mxu0 0.0
        %1250 = vmatprep.subr.mxu0 0.0
        %1251 = vmatpush1.xpose.msra.mxu0 0.0
        %1252 = vmatprep.subr.mxu0 0.0
        %1253 = vmatpush1.xpose.msra.mxu0 0.0
        %1254 = vmatprep.subr.mxu0 0.0
        %1255 = vmatpush1.xpose.msra.mxu0 0.0
        %1256 = vmatprep.subr.mxu0 0.0
        %1257 = vmatpush1.xpose.msra.mxu0 0.0
        %1258 = vmatprep.subr.mxu0 0.0
        %1259 = vmatpush1.xpose.msra.mxu0 0.0
        %1260 = vmatprep.subr.mxu0 0.0
        %1261 = vmatpush1.xpose.msra.mxu0 0.0
        %1262 = vmatprep.subr.mxu0 0.0
        %1263 = vmatpush1.xpose.msra.mxu0 0.0
        %1264 = vmatprep.subr.mxu0 0.0
        %1265 = vmatpush1.xpose.msra.mxu0 0.0
        %1266 = vmatprep.subr.mxu0 0.0
        %1267 = vmatpush1.xpose.msra.mxu0 0.0
        %1268 = vmatprep.subr.mxu0 0.0
        %1269 = vmatpush1.xpose.msra.mxu0 0.0
        %1270 = vmatprep.subr.mxu0 0.0
        %1271 = vmatpush1.xpose.msra.mxu0 0.0
        %1272 = vmatprep.subr.mxu0 0.0
        %1273 = vmatpush1.xpose.msra.mxu0 0.0
        %1274 = vmatprep.subr.mxu0 0.0
        %1275 = vmatpush1.xpose.msra.mxu0 0.0
        %1276 = vmatprep.subr.mxu0 0.0
        %1277 = vmatpush1.xpose.msra.mxu0 0.0
        %1278 = vmatprep.subr.mxu0 0.0
        %1279 = vmatpush1.xpose.msra.mxu0 0.0
        %1280 = vmatprep.subr.mxu0 0.0
        %1281 = vmatpush1.xpose.msra.mxu0 0.0
        %1282 = vmatprep.subr.mxu0 0.0
        %1283 = vmatpush1.xpose.msra.mxu0 0.0
        %1284 = vmatprep.subr.mxu0 0.0
        %1285 = vmatpush1.xpose.msra.mxu0 0.0
        %1286 = vmatprep.subr.mxu0 0.0
        %1287 = vmatpush1.xpose.msra.mxu0 0.0
        %1288 = vmatprep.subr.mxu0 0.0
        %1289 = vmatpush1.xpose.msra.mxu0 0.0
        %1290 = vmatprep.subr.mxu0 0.0
        %1291 = vmatpush1.xpose.msra.mxu0 0.0
        %1292 = vmatprep.subr.mxu0 0.0
        %1293 = vmatpush1.xpose.msra.mxu0 0.0
        %1294 = vmatprep.subr.mxu0 0.0
        %1295 = vmatpush1.xpose.msra.mxu0 0.0
        %1296 = vmatprep.subr.mxu0 0.0
        %1297 = vmatpush1.xpose.msra.mxu0 0.0
        %1298 = vmatprep.subr.mxu0 0.0
        %1299 = vmatpush1.xpose.msra.mxu0 0.0
        %1300 = vmatprep.subr.mxu0 0.0
        %1301 = vmatpush1.xpose.msra.mxu0 0.0
        %1302 = vmatprep.subr.mxu0 0.0
        %1303 = vmatpush1.xpose.msra.mxu0 0.0
        %1304 = vmatprep.subr.mxu0 0.0
        %1305 = vmatpush1.xpose.msra.mxu0 0.0
        %1306 = vmatprep.subr.mxu0 0.0
        %1307 = vmatpush1.xpose.msra.mxu0 0.0
        %1308 = vmatprep.mubr.f32.mxu0 0.0
        %1309 = vmatmul.mubr.f32.gmra.mrb[0].mxu0 %v1238
        %v1310 = vpop.f32.mrb[0].mxu0
        %v1311 = vadd.f32 0.0, %v1310
        %v1312 = vpop.f32.mrb[0].mxu0
        %1313 = vdwg.mxu0
        %v1314 = vsel %vm966, %v1311, -inf
        %1315 = vmax.xlane.f32.xlu0 %v1314
        %v1316 = vpop.xlane.xlu0 %1315
        %v1317 = vsub.f32 %v1311, %v1316
        %v1318 = vmul.f32 %v1317, 1.442695
        %v1319 = vpow.pop %v1318
        %v1320 = vsel %vm966, %v1319, 0.0
        %1321 = vadd.xlane.f32.xlu0 %v1320
        %v1322 = vpop.xlane.xlu0 %1321
        %v1323 = vrcp.pop %v1322
        %v1324 = vmul.f32 %v1319, %v1323
        %1325 = vrot.lane.b32.xlu0 %v884, 112
        %v1326 = vpop.permute.xlu0 %1325
        %1327 = vrot.lane.b32.xlu0 %v885, 112
        %v1328 = vpop.permute.xlu0 %1327
        %v1332 = vsel %vm966, %v1324, 0
        %1334 = vmatprep.subr.mxu0 0.0
        %1335 = vmatpush1.msra.mxu0 %v1326
        %1336 = vmatprep.subr.mxu0 0.0
        %1337 = vmatpush1.msra.mxu0 %v1328
        %1338 = vmatprep.subr.mxu0 0.0
        %1339 = vmatpush1.msra.mxu0 0.0
        %1340 = vmatprep.subr.mxu0 0.0
        %1341 = vmatpush1.msra.mxu0 0.0
        %1342 = vmatprep.subr.mxu0 0.0
        %1343 = vmatpush1.msra.mxu0 0.0
        %1344 = vmatprep.subr.mxu0 0.0
        %1345 = vmatpush1.msra.mxu0 0.0
        %1346 = vmatprep.subr.mxu0 0.0
        %1347 = vmatpush1.msra.mxu0 0.0
        %1348 = vmatprep.subr.mxu0 0.0
        %1349 = vmatpush1.msra.mxu0 0.0
        %1350 = vmatprep.subr.mxu0 0.0
        %1351 = vmatpush1.msra.mxu0 0.0
        %1352 = vmatprep.subr.mxu0 0.0
        %1353 = vmatpush1.msra.mxu0 0.0
        %1354 = vmatprep.subr.mxu0 0.0
        %1355 = vmatpush1.msra.mxu0 0.0
        %1356 = vmatprep.subr.mxu0 0.0
        %1357 = vmatpush1.msra.mxu0 0.0
        %1358 = vmatprep.subr.mxu0 0.0
        %1359 = vmatpush1.msra.mxu0 0.0
        %1360 = vmatprep.subr.mxu0 0.0
        %1361 = vmatpush1.msra.mxu0 0.0
        %1362 = vmatprep.subr.mxu0 0.0
        %1363 = vmatpush1.msra.mxu0 0.0
        %1364 = vmatprep.subr.mxu0 0.0
        %1365 = vmatpush1.msra.mxu0 0.0
        %1366 = vmatprep.subr.mxu0 0.0
        %1367 = vmatpush1.msra.mxu0 0.0
        %1368 = vmatprep.subr.mxu0 0.0
        %1369 = vmatpush1.msra.mxu0 0.0
        %1370 = vmatprep.subr.mxu0 0.0
        %1371 = vmatpush1.msra.mxu0 0.0
        %1372 = vmatprep.subr.mxu0 0.0
        %1373 = vmatpush1.msra.mxu0 0.0
        %1374 = vmatprep.subr.mxu0 0.0
        %1375 = vmatpush1.msra.mxu0 0.0
        %1376 = vmatprep.subr.mxu0 0.0
        %1377 = vmatpush1.msra.mxu0 0.0
        %1378 = vmatprep.subr.mxu0 0.0
        %1379 = vmatpush1.msra.mxu0 0.0
        %1380 = vmatprep.subr.mxu0 0.0
        %1381 = vmatpush1.msra.mxu0 0.0
        %1382 = vmatprep.subr.mxu0 0.0
        %1383 = vmatpush1.msra.mxu0 0.0
        %1384 = vmatprep.subr.mxu0 0.0
        %1385 = vmatpush1.msra.mxu0 0.0
        %1386 = vmatprep.subr.mxu0 0.0
        %1387 = vmatpush1.msra.mxu0 0.0
        %1388 = vmatprep.subr.mxu0 0.0
        %1389 = vmatpush1.msra.mxu0 0.0
        %1390 = vmatprep.subr.mxu0 0.0
        %1391 = vmatpush1.msra.mxu0 0.0
        %1392 = vmatprep.subr.mxu0 0.0
        %1393 = vmatpush1.msra.mxu0 0.0
        %1394 = vmatprep.subr.mxu0 0.0
        %1395 = vmatpush1.msra.mxu0 0.0
        %1396 = vmatprep.subr.mxu0 0.0
        %1397 = vmatpush1.msra.mxu0 0.0
        %1398 = vmatprep.mubr.f32.mxu0 0.0
        %1399 = vmatmul.mubr.f32.gmra.mrb[0].mxu0 %v1332
        %v1400 = vpop.f32.mrb[0].mxu0
        %v1401 = vadd.f32 0.0, %v1400
        %v1402 = vpop.f32.mrb[0].mxu0
        %1403 = vdwg.mxu0
        %1405 = vrot.lane.b32.xlu0 %v1401, 16
        %v1406 = vpop.permute.xlu0 %1405
        %vm1408 = vcmask 195712
        %1409 = vst.msk [vmem:[#allocation4] sm:$0xff] %vm1408, %v1406
        %1410 = vrot.lane.b32.xlu0 %v879, 104
        %v1411 = vpop.permute.xlu0 %1410
        %1412 = vrot.lane.b32.xlu0 %v882, 104
        %v1413 = vpop.permute.xlu0 %1412
        %1414 = vrot.lane.b32.xlu0 %v883, 104
        %v1415 = vpop.permute.xlu0 %1414
        %v1416 = vsel %vm886, %v1411, 0
        %v1418 = vsel %vm886, %v1413, 0
        %v1420 = vsel %vm886, %v1415, 0
        %1422 = vmatprep.subr.mxu0 0.0
        %1423 = vmatpush1.xpose.msra.mxu0 %v1418
        %1424 = vmatprep.subr.mxu0 0.0
        %1425 = vmatpush1.xpose.msra.mxu0 %v1420
        %1426 = vmatprep.subr.mxu0 0.0
        %1427 = vmatpush1.xpose.msra.mxu0 0.0
        %1428 = vmatprep.subr.mxu0 0.0
        %1429 = vmatpush1.xpose.msra.mxu0 0.0
        %1430 = vmatprep.subr.mxu0 0.0
        %1431 = vmatpush1.xpose.msra.mxu0 0.0
        %1432 = vmatprep.subr.mxu0 0.0
        %1433 = vmatpush1.xpose.msra.mxu0 0.0
        %1434 = vmatprep.subr.mxu0 0.0
        %1435 = vmatpush1.xpose.msra.mxu0 0.0
        %1436 = vmatprep.subr.mxu0 0.0
        %1437 = vmatpush1.xpose.msra.mxu0 0.0
        %1438 = vmatprep.subr.mxu0 0.0
        %1439 = vmatpush1.xpose.msra.mxu0 0.0
        %1440 = vmatprep.subr.mxu0 0.0
        %1441 = vmatpush1.xpose.msra.mxu0 0.0
        %1442 = vmatprep.subr.mxu0 0.0
        %1443 = vmatpush1.xpose.msra.mxu0 0.0
        %1444 = vmatprep.subr.mxu0 0.0
        %1445 = vmatpush1.xpose.msra.mxu0 0.0
        %1446 = vmatprep.subr.mxu0 0.0
        %1447 = vmatpush1.xpose.msra.mxu0 0.0
        %1448 = vmatprep.subr.mxu0 0.0
        %1449 = vmatpush1.xpose.msra.mxu0 0.0
        %1450 = vmatprep.subr.mxu0 0.0
        %1451 = vmatpush1.xpose.msra.mxu0 0.0
        %1452 = vmatprep.subr.mxu0 0.0
        %1453 = vmatpush1.xpose.msra.mxu0 0.0
        %1454 = vmatprep.subr.mxu0 0.0
        %1455 = vmatpush1.xpose.msra.mxu0 0.0
        %1456 = vmatprep.subr.mxu0 0.0
        %1457 = vmatpush1.xpose.msra.mxu0 0.0
        %1458 = vmatprep.subr.mxu0 0.0
        %1459 = vmatpush1.xpose.msra.mxu0 0.0
        %1460 = vmatprep.subr.mxu0 0.0
        %1461 = vmatpush1.xpose.msra.mxu0 0.0
        %1462 = vmatprep.subr.mxu0 0.0
        %1463 = vmatpush1.xpose.msra.mxu0 0.0
        %1464 = vmatprep.subr.mxu0 0.0
        %1465 = vmatpush1.xpose.msra.mxu0 0.0
        %1466 = vmatprep.subr.mxu0 0.0
        %1467 = vmatpush1.xpose.msra.mxu0 0.0
        %1468 = vmatprep.subr.mxu0 0.0
        %1469 = vmatpush1.xpose.msra.mxu0 0.0
        %1470 = vmatprep.subr.mxu0 0.0
        %1471 = vmatpush1.xpose.msra.mxu0 0.0
        %1472 = vmatprep.subr.mxu0 0.0
        %1473 = vmatpush1.xpose.msra.mxu0 0.0
        %1474 = vmatprep.subr.mxu0 0.0
        %1475 = vmatpush1.xpose.msra.mxu0 0.0
        %1476 = vmatprep.subr.mxu0 0.0
        %1477 = vmatpush1.xpose.msra.mxu0 0.0
        %1478 = vmatprep.subr.mxu0 0.0
        %1479 = vmatpush1.xpose.msra.mxu0 0.0
        %1480 = vmatprep.subr.mxu0 0.0
        %1481 = vmatpush1.xpose.msra.mxu0 0.0
        %1482 = vmatprep.subr.mxu0 0.0
        %1483 = vmatpush1.xpose.msra.mxu0 0.0
        %1484 = vmatprep.subr.mxu0 0.0
        %1485 = vmatpush1.xpose.msra.mxu0 0.0
        %1486 = vmatprep.mubr.f32.mxu0 0.0
        %1487 = vmatmul.mubr.f32.gmra.mrb[0].mxu0 %v1416
        %v1488 = vpop.f32.mrb[0].mxu0
        %v1489 = vadd.f32 0.0, %v1488
        %v1490 = vpop.f32.mrb[0].mxu0
        %1491 = vdwg.mxu0
        %v1492 = vsel %vm966, %v1489, -inf
        %1493 = vmax.xlane.f32.xlu0 %v1492
        %v1494 = vpop.xlane.xlu0 %1493
        %v1495 = vsub.f32 %v1489, %v1494
        %v1496 = vmul.f32 %v1495, 1.442695
        %v1497 = vpow.pop %v1496
        %v1498 = vsel %vm966, %v1497, 0.0
        %1499 = vadd.xlane.f32.xlu0 %v1498
        %v1500 = vpop.xlane.xlu0 %1499
        %v1501 = vrcp.pop %v1500
        %v1502 = vmul.f32 %v1497, %v1501
        %1503 = vrot.lane.b32.xlu0 %v884, 104
        %v1504 = vpop.permute.xlu0 %1503
        %1505 = vrot.lane.b32.xlu0 %v885, 104
        %v1506 = vpop.permute.xlu0 %1505
        %v1510 = vsel %vm966, %v1502, 0
        %1512 = vmatprep.subr.mxu0 0.0
        %1513 = vmatpush1.msra.mxu0 %v1504
        %1514 = vmatprep.subr.mxu0 0.0
        %1515 = vmatpush1.msra.mxu0 %v1506
        %1516 = vmatprep.subr.mxu0 0.0
        %1517 = vmatpush1.msra.mxu0 0.0
        %1518 = vmatprep.subr.mxu0 0.0
        %1519 = vmatpush1.msra.mxu0 0.0
        %1520 = vmatprep.subr.mxu0 0.0
        %1521 = vmatpush1.msra.mxu0 0.0
        %1522 = vmatprep.subr.mxu0 0.0
        %1523 = vmatpush1.msra.mxu0 0.0
        %1524 = vmatprep.subr.mxu0 0.0
        %1525 = vmatpush1.msra.mxu0 0.0
        %1526 = vmatprep.subr.mxu0 0.0
        %1527 = vmatpush1.msra.mxu0 0.0
        %1528 = vmatprep.subr.mxu0 0.0
        %1529 = vmatpush1.msra.mxu0 0.0
        %1530 = vmatprep.subr.mxu0 0.0
        %1531 = vmatpush1.msra.mxu0 0.0
        %1532 = vmatprep.subr.mxu0 0.0
        %1533 = vmatpush1.msra.mxu0 0.0
        %1534 = vmatprep.subr.mxu0 0.0
        %1535 = vmatpush1.msra.mxu0 0.0
        %1536 = vmatprep.subr.mxu0 0.0
        %1537 = vmatpush1.msra.mxu0 0.0
        %1538 = vmatprep.subr.mxu0 0.0
        %1539 = vmatpush1.msra.mxu0 0.0
        %1540 = vmatprep.subr.mxu0 0.0
        %1541 = vmatpush1.msra.mxu0 0.0
        %1542 = vmatprep.subr.mxu0 0.0
        %1543 = vmatpush1.msra.mxu0 0.0
        %1544 = vmatprep.subr.mxu0 0.0
        %1545 = vmatpush1.msra.mxu0 0.0
        %1546 = vmatprep.subr.mxu0 0.0
        %1547 = vmatpush1.msra.mxu0 0.0
        %1548 = vmatprep.subr.mxu0 0.0
        %1549 = vmatpush1.msra.mxu0 0.0
        %1550 = vmatprep.subr.mxu0 0.0
        %1551 = vmatpush1.msra.mxu0 0.0
        %1552 = vmatprep.subr.mxu0 0.0
        %1553 = vmatpush1.msra.mxu0 0.0
        %1554 = vmatprep.subr.mxu0 0.0
        %1555 = vmatpush1.msra.mxu0 0.0
        %1556 = vmatprep.subr.mxu0 0.0
        %1557 = vmatpush1.msra.mxu0 0.0
        %1558 = vmatprep.subr.mxu0 0.0
        %1559 = vmatpush1.msra.mxu0 0.0
        %1560 = vmatprep.subr.mxu0 0.0
        %1561 = vmatpush1.msra.mxu0 0.0
        %1562 = vmatprep.subr.mxu0 0.0
        %1563 = vmatpush1.msra.mxu0 0.0
        %1564 = vmatprep.subr.mxu0 0.0
        %1565 = vmatpush1.msra.mxu0 0.0
        %1566 = vmatprep.subr.mxu0 0.0
        %1567 = vmatpush1.msra.mxu0 0.0
        %1568 = vmatprep.subr.mxu0 0.0
        %1569 = vmatpush1.msra.mxu0 0.0
        %1570 = vmatprep.subr.mxu0 0.0
        %1571 = vmatpush1.msra.mxu0 0.0
        %1572 = vmatprep.subr.mxu0 0.0
        %1573 = vmatpush1.msra.mxu0 0.0
        %1574 = vmatprep.subr.mxu0 0.0
        %1575 = vmatpush1.msra.mxu0 0.0
        %1576 = vmatprep.mubr.f32.mxu0 0.0
        %1577 = vmatmul.mubr.f32.gmra.mrb[0].mxu0 %v1510
        %v1578 = vpop.f32.mrb[0].mxu0
        %v1579 = vadd.f32 0.0, %v1578
        %v1580 = vpop.f32.mrb[0].mxu0
        %1581 = vdwg.mxu0
        %1583 = vrot.lane.b32.xlu0 %v1579, 24
        %v1584 = vpop.permute.xlu0 %1583
        %vm1586 = vcmask 261312
        %1587 = vst.msk [vmem:[#allocation4] sm:$0xff] %vm1586, %v1584
        %v1588 = vld [vmem:[#allocation4] sm:$0xff]
        %v1589 = vld [vmem:[#allocation8] sm:$0xff]
        %v1590 = vld [vmem:[#allocation8 + $0x8] sm:$0xff]
        %v1591 = vld [vmem:[#allocation8 + $0x10] sm:$0xff]
        %v1592 = vld [vmem:[#allocation8 + $0x18] sm:$0xff]
        %v1593 = vld [vmem:[%s8] sm:$0x1]
        %v1595 = vlaneseq
        %v1596 = vshrl.u32 %v1595, 7
        %v1597 = vsub.s32 0, %v1596
        %v1598 = vrot.slane %v1593, %v1597
        %v1601 = vsel %vm808, %v1588, 0
        %1603 = vmatprep.subr.mxu0 0.0
        %1604 = vmatpush1.msra.mxu0 %v1589
        %1605 = vmatprep.subr.mxu0 0.0
        %1606 = vmatpush1.msra.mxu0 %v1590
        %1607 = vmatprep.subr.mxu0 0.0
        %1608 = vmatpush1.msra.mxu0 %v1591
        %1609 = vmatprep.subr.mxu0 0.0
        %1610 = vmatpush1.msra.mxu0 %v1592
        %1611 = vmatprep.subr.mxu0 0.0
        %1612 = vmatpush1.msra.mxu0 0.0
        %1613 = vmatprep.subr.mxu0 0.0
        %1614 = vmatpush1.msra.mxu0 0.0
        %1615 = vmatprep.subr.mxu0 0.0
        %1616 = vmatpush1.msra.mxu0 0.0
        %1617 = vmatprep.subr.mxu0 0.0
        %1618 = vmatpush1.msra.mxu0 0.0
        %1619 = vmatprep.subr.mxu0 0.0
        %1620 = vmatpush1.msra.mxu0 0.0
        %1621 = vmatprep.subr.mxu0 0.0
        %1622 = vmatpush1.msra.mxu0 0.0
        %1623 = vmatprep.subr.mxu0 0.0
        %1624 = vmatpush1.msra.mxu0 0.0
        %1625 = vmatprep.subr.mxu0 0.0
        %1626 = vmatpush1.msra.mxu0 0.0
        %1627 = vmatprep.subr.mxu0 0.0
        %1628 = vmatpush1.msra.mxu0 0.0
        %1629 = vmatprep.subr.mxu0 0.0
        %1630 = vmatpush1.msra.mxu0 0.0
        %1631 = vmatprep.subr.mxu0 0.0
        %1632 = vmatpush1.msra.mxu0 0.0
        %1633 = vmatprep.subr.mxu0 0.0
        %1634 = vmatpush1.msra.mxu0 0.0
        %1635 = vmatprep.subr.mxu0 0.0
        %1636 = vmatpush1.msra.mxu0 0.0
        %1637 = vmatprep.subr.mxu0 0.0
        %1638 = vmatpush1.msra.mxu0 0.0
        %1639 = vmatprep.subr.mxu0 0.0
        %1640 = vmatpush1.msra.mxu0 0.0
        %1641 = vmatprep.subr.mxu0 0.0
        %1642 = vmatpush1.msra.mxu0 0.0
        %1643 = vmatprep.subr.mxu0 0.0
        %1644 = vmatpush1.msra.mxu0 0.0
        %1645 = vmatprep.subr.mxu0 0.0
        %1646 = vmatpush1.msra.mxu0 0.0
        %1647 = vmatprep.subr.mxu0 0.0
        %1648 = vmatpush1.msra.mxu0 0.0
        %1649 = vmatprep.subr.mxu0 0.0
        %1650 = vmatpush1.msra.mxu0 0.0
        %1651 = vmatprep.subr.mxu0 0.0
        %1652 = vmatpush1.msra.mxu0 0.0
        %1653 = vmatprep.subr.mxu0 0.0
        %1654 = vmatpush1.msra.mxu0 0.0
        %1655 = vmatprep.subr.mxu0 0.0
        %1656 = vmatpush1.msra.mxu0 0.0
        %1657 = vmatprep.subr.mxu0 0.0
        %1658 = vmatpush1.msra.mxu0 0.0
        %1659 = vmatprep.subr.mxu0 0.0
        %1660 = vmatpush1.msra.mxu0 0.0
        %1661 = vmatprep.subr.mxu0 0.0
        %1662 = vmatpush1.msra.mxu0 0.0
        %1663 = vmatprep.subr.mxu0 0.0
        %1664 = vmatpush1.msra.mxu0 0.0
        %1665 = vmatprep.subr.mxu0 0.0
        %1666 = vmatpush1.msra.mxu0 0.0
        %1667 = vmatprep.mubr.f32.mxu0 0.0
        %1668 = vmatmul.mubr.f32.gmra.mrb[0].mxu0 %v1601
        %v1669 = vpop.f32.mrb[0].mxu0
        %v1670 = vadd.f32 %v1598, %v1669
        %v1671 = vpop.f32.mrb[0].mxu0
        %1672 = vdwg.mxu0
        %v1673 = vadd.f32 %v796, %v1670
        %v1674 = vsel %vm808, %v1673, 0.0
        %1675 = vadd.xlane.f32.xlu0 %v1674
        %v1676 = vpop.xlane.xlu0 %1675
        %v1677 = vrcp.pop 32.0
        %v1678 = vmul.f32 %v1676, %v1677
        %v1679 = vsub.f32 %v1673, %v1678
        %v1680 = vmul.f32 %v1679, %v1679
        %v1681 = vsel %vm808, %v1680, 0.0
        %1682 = vadd.xlane.f32.xlu0 %v1681
        %v1683 = vpop.xlane.xlu0 %1682
        %v1684 = vmul.f32 %v1683, %v1677
        %v1685 = vadd.f32 %v1684, 1e-05
        %v1686 = vrsqrt.pop %v1685
        %v1687 = vmul.f32 %v1679, %v1686
        %v1688 = vld [vmem:[%s13] sm:$0x1]
        %v1690 = vlaneseq
        %v1691 = vshrl.u32 %v1690, 7
        %v1692 = vsub.s32 0, %v1691
        %v1693 = vrot.slane %v1688, %v1692
        %v1695 = vmul.f32 %v1687, %v1693
        %v1696 = vld [vmem:[%s14] sm:$0x1]
        %v1698 = vlaneseq
        %v1699 = vshrl.u32 %v1698, 7
        %v1700 = vsub.s32 0, %v1699
        %v1701 = vrot.slane %v1696, %v1700
        %v1703 = vadd.f32 %v1695, %v1701
        %v1704 = vld [vmem:[#allocation10] sm:$0xff]
        %v1705 = vld [vmem:[#allocation10 + $0x8] sm:$0xff]
        %v1706 = vld [vmem:[#allocation10 + $0x10] sm:$0xff]
        %v1707 = vld [vmem:[#allocation10 + $0x18] sm:$0xff]
        %v1708 = vld [vmem:[%s10] sm:$0x1]
        %v1710 = vlaneseq
        %v1711 = vshrl.u32 %v1710, 7
        %v1712 = vsub.s32 0, %v1711
        %v1713 = vrot.slane %v1708, %v1712
        %v1716 = vsel %vm808, %v1703, 0
        %1718 = vmatprep.subr.mxu0 0.0
        %1719 = vmatpush1.msra.mxu0 %v1704
        %1720 = vmatprep.subr.mxu0 0.0
        %1721 = vmatpush1.msra.mxu0 %v1705
        %1722 = vmatprep.subr.mxu0 0.0
        %1723 = vmatpush1.msra.mxu0 %v1706
        %1724 = vmatprep.subr.mxu0 0.0
        %1725 = vmatpush1.msra.mxu0 %v1707
        %1726 = vmatprep.subr.mxu0 0.0
        %1727 = vmatpush1.msra.mxu0 0.0
        %1728 = vmatprep.subr.mxu0 0.0
        %1729 = vmatpush1.msra.mxu0 0.0
        %1730 = vmatprep.subr.mxu0 0.0
        %1731 = vmatpush1.msra.mxu0 0.0
        %1732 = vmatprep.subr.mxu0 0.0
        %1733 = vmatpush1.msra.mxu0 0.0
        %1734 = vmatprep.subr.mxu0 0.0
        %1735 = vmatpush1.msra.mxu0 0.0
        %1736 = vmatprep.subr.mxu0 0.0
        %1737 = vmatpush1.msra.mxu0 0.0
        %1738 = vmatprep.subr.mxu0 0.0
        %1739 = vmatpush1.msra.mxu0 0.0
        %1740 = vmatprep.subr.mxu0 0.0
        %1741 = vmatpush1.msra.mxu0 0.0
        %1742 = vmatprep.subr.mxu0 0.0
        %1743 = vmatpush1.msra.mxu0 0.0
        %1744 = vmatprep.subr.mxu0 0.0
        %1745 = vmatpush1.msra.mxu0 0.0
        %1746 = vmatprep.subr.mxu0 0.0
        %1747 = vmatpush1.msra.mxu0 0.0
        %1748 = vmatprep.subr.mxu0 0.0
        %1749 = vmatpush1.msra.mxu0 0.0
        %1750 = vmatprep.subr.mxu0 0.0
        %1751 = vmatpush1.msra.mxu0 0.0
        %1752 = vmatprep.subr.mxu0 0.0
        %1753 = vmatpush1.msra.mxu0 0.0
        %1754 = vmatprep.subr.mxu0 0.0
        %1755 = vmatpush1.msra.mxu0 0.0
        %1756 = vmatprep.subr.mxu0 0.0
        %1757 = vmatpush1.msra.mxu0 0.0
        %1758 = vmatprep.subr.mxu0 0.0
        %1759 = vmatpush1.msra.mxu0 0.0
        %1760 = vmatprep.subr.mxu0 0.0
        %1761 = vmatpush1.msra.mxu0 0.0
        %1762 = vmatprep.subr.mxu0 0.0
        %1763 = vmatpush1.msra.mxu0 0.0
        %1764 = vmatprep.subr.mxu0 0.0
        %1765 = vmatpush1.msra.mxu0 0.0
        %1766 = vmatprep.subr.mxu0 0.0
        %1767 = vmatpush1.msra.mxu0 0.0
        %1768 = vmatprep.subr.mxu0 0.0
        %1769 = vmatpush1.msra.mxu0 0.0
        %1770 = vmatprep.subr.mxu0 0.0
        %1771 = vmatpush1.msra.mxu0 0.0
        %1772 = vmatprep.subr.mxu0 0.0
        %1773 = vmatpush1.msra.mxu0 0.0
        %1774 = vmatprep.subr.mxu0 0.0
        %1775 = vmatpush1.msra.mxu0 0.0
        %1776 = vmatprep.subr.mxu0 0.0
        %1777 = vmatpush1.msra.mxu0 0.0
        %1778 = vmatprep.subr.mxu0 0.0
        %1779 = vmatpush1.msra.mxu0 0.0
        %1780 = vmatprep.subr.mxu0 0.0
        %1781 = vmatpush1.msra.mxu0 0.0
        %1782 = vmatprep.mubr.f32.mxu0 0.0
        %1783 = vmatmul.mubr.f32.gmra.mrb[0].mxu0 %v1716
        %v1784 = vpop.f32.mrb[0].mxu0
        %v1785 = vadd.f32 %v1713, %v1784
        %v1786 = vpop.f32.mrb[0].mxu0
        %1787 = vdwg.mxu0
        %v1788 = vmax.f32 %v1785, 0.0
        %v1789 = vld [vmem:[%s11] sm:$0xff]
        %v1790 = vld [vmem:[%s11 + $0x8] sm:$0xff]
        %v1791 = vld [vmem:[%s11 + $0x10] sm:$0xff]
        %v1792 = vld [vmem:[%s11 + $0x18] sm:$0xff]
        %v1793 = vld [vmem:[%s11 + $0x20] sm:$0xff]
        %v1794 = vld [vmem:[%s11 + $0x28] sm:$0xff]
        %v1795 = vld [vmem:[%s11 + $0x30] sm:$0xff]
        %v1796 = vld [vmem:[%s11 + $0x38] sm:$0xff]
        %v1797 = vld [vmem:[%s12] sm:$0x1]
        %v1799 = vlaneseq
        %v1800 = vshrl.u32 %v1799, 7
        %v1801 = vsub.s32 0, %v1800
        %v1802 = vrot.slane %v1797, %v1801
        %vm1804 = vcmask 523264
        %v1806 = vsel %vm1804, %v1788, 0
        %1808 = vmatprep.subr.mxu0 0.0
        %1809 = vmatpush1.msra.mxu0 %v1789
        %1810 = vmatprep.subr.mxu0 0.0
        %1811 = vmatpush1.msra.mxu0 %v1790
        %1812 = vmatprep.subr.mxu0 0.0
        %1813 = vmatpush1.msra.mxu0 %v1791
        %1814 = vmatprep.subr.mxu0 0.0
        %1815 = vmatpush1.msra.mxu0 %v1792
        %1816 = vmatprep.subr.mxu0 0.0
        %1817 = vmatpush1.msra.mxu0 %v1793
        %1818 = vmatprep.subr.mxu0 0.0
        %1819 = vmatpush1.msra.mxu0 %v1794
        %1820 = vmatprep.subr.mxu0 0.0
        %1821 = vmatpush1.msra.mxu0 %v1795
        %1822 = vmatprep.subr.mxu0 0.0
        %1823 = vmatpush1.msra.mxu0 %v1796
        %1824 = vmatprep.subr.mxu0 0.0
        %1825 = vmatpush1.msra.mxu0 0.0
        %1826 = vmatprep.subr.mxu0 0.0
        %1827 = vmatpush1.msra.mxu0 0.0
        %1828 = vmatprep.subr.mxu0 0.0
        %1829 = vmatpush1.msra.mxu0 0.0
        %1830 = vmatprep.subr.mxu0 0.0
        %1831 = vmatpush1.msra.mxu0 0.0
        %1832 = vmatprep.subr.mxu0 0.0
        %1833 = vmatpush1.msra.mxu0 0.0
        %1834 = vmatprep.subr.mxu0 0.0
        %1835 = vmatpush1.msra.mxu0 0.0
        %1836 = vmatprep.subr.mxu0 0.0
        %1837 = vmatpush1.msra.mxu0 0.0
        %1838 = vmatprep.subr.mxu0 0.0
        %1839 = vmatpush1.msra.mxu0 0.0
        %1840 = vmatprep.subr.mxu0 0.0
        %1841 = vmatpush1.msra.mxu0 0.0
        %1842 = vmatprep.subr.mxu0 0.0
        %1843 = vmatpush1.msra.mxu0 0.0
        %1844 = vmatprep.subr.mxu0 0.0
        %1845 = vmatpush1.msra.mxu0 0.0
        %1846 = vmatprep.subr.mxu0 0.0
        %1847 = vmatpush1.msra.mxu0 0.0
        %1848 = vmatprep.subr.mxu0 0.0
        %1849 = vmatpush1.msra.mxu0 0.0
        %1850 = vmatprep.subr.mxu0 0.0
        %1851 = vmatpush1.msra.mxu0 0.0
        %1852 = vmatprep.subr.mxu0 0.0
        %1853 = vmatpush1.msra.mxu0 0.0
        %1854 = vmatprep.subr.mxu0 0.0
        %1855 = vmatpush1.msra.mxu0 0.0
        %1856 = vmatprep.subr.mxu0 0.0
        %1857 = vmatpush1.msra.mxu0 0.0
        %1858 = vmatprep.subr.mxu0 0.0
        %1859 = vmatpush1.msra.mxu0 0.0
        %1860 = vmatprep.subr.mxu0 0.0
        %1861 = vmatpush1.msra.mxu0 0.0
        %1862 = vmatprep.subr.mxu0 0.0
        %1863 = vmatpush1.msra.mxu0 0.0
        %1864 = vmatprep.subr.mxu0 0.0
        %1865 = vmatpush1.msra.mxu0 0.0
        %1866 = vmatprep.subr.mxu0 0.0
        %1867 = vmatpush1.msra.mxu0 0.0
        %1868 = vmatprep.subr.mxu0 0.0
        %1869 = vmatpush1.msra.mxu0 0.0
        %1870 = vmatprep.subr.mxu0 0.0
        %1871 = vmatpush1.msra.mxu0 0.0
        %1872 = vmatprep.mubr.f32.mxu0 0.0
        %1873 = vmatmul.mubr.f32.gmra.mrb[0].mxu0 %v1806
        %v1874 = vpop.f32.mrb[0].mxu0
        %v1875 = vadd.f32 %v1802, %v1874
        %v1876 = vpop.f32.mrb[0].mxu0
        %1877 = vdwg.mxu0
        %v1878 = vadd.f32 %v1703, %v1875
        %v1879 = vsel %vm808, %v1878, 0.0
        %1880 = vadd.xlane.f32.xlu0 %v1879
        %v1881 = vpop.xlane.xlu0 %1880
        %v1882 = vmul.f32 %v1881, %v1677
        %v1883 = vsub.f32 %v1878, %v1882
        %v1884 = vmul.f32 %v1883, %v1883
        %v1885 = vsel %vm808, %v1884, 0.0
        %1886 = vadd.xlane.f32.xlu0 %v1885
        %v1887 = vpop.xlane.xlu0 %1886
        %v1888 = vmul.f32 %v1887, %v1677
        %v1889 = vadd.f32 %v1888, 1e-05
        %v1890 = vrsqrt.pop %v1889
        %v1891 = vmul.f32 %v1883, %v1890
        %v1892 = vld [vmem:[%s15] sm:$0x1]
        %v1894 = vlaneseq
        %v1895 = vshrl.u32 %v1894, 7
        %v1896 = vsub.s32 0, %v1895
        %v1897 = vrot.slane %v1892, %v1896
        %v1899 = vmul.f32 %v1891, %v1897
        %v1900 = vld [vmem:[%s16] sm:$0x1]
        %v1902 = vlaneseq
        %v1903 = vshrl.u32 %v1902, 7
        %v1904 = vsub.s32 0, %v1903
        %v1905 = vrot.slane %v1900, %v1904
        %v1907 = vadd.f32 %v1899, %v1905
        %1908 = vst.msk [vmem:[%s599] sm:$0xff] %vm808, %v1907
        %s1909 = sand.u32 %s417, 1
        %s1910 = scalar_lea.sflag [#allocation7], %s1909
        %s1911 = sand.u32 %s417, 1
        %s1912 = smul.addr %s1911, 8
        %s1913 = scalar_lea.vmem [#allocation11], %s1912
        // Predicated region
        $region105: #{tpu_custom_call.1} parent=87 // pred_check
          %p1914 = pneg %p427
        $region106: #{tpu_custom_call.1} parent=87 // pred_check_branch
          %1916 = sbr.rel (%p1914) target = $region108
        $region107: #{tpu_custom_call.1} parent=87 // pred_region
          %s1918 = ssub.s32 128, 128
          %1919 = vsyncadd %s1910, %s1918
          %s1920 = smul.addr %s37, 2
          %s1921 = sadd.s32 %s38, %s1920
          %s1922 = smul.addr %s1921, 128
          %s1923 = scalar_lea.hbm %s17, %s1922
          %s1925 = sshll.u32 %s1913, 4
          %s1926 = int_to_ptr.vmem [resolvable:$true] %s1925
          %1928 = dma.vmem_to_hbm [thread:$0]  %s1926, 128, %s1923, %s1910
        $region108: #{tpu_custom_call.1} parent=87 // pred_fallthru
          _
      $region88: #{tpu_custom_call.1} parent=5 // pred_fallthru
        _
      %p1929 = scmp.le.s32.totalorder 2, %s28
      // Predicated region
      $region109: #{tpu_custom_call.1} parent=5 // pred_check
        %p1930 = pneg %p1929
      $region110: #{tpu_custom_call.1} parent=5 // pred_check_branch
        %1932 = sbr.rel (%p1930) target = $region112
      $region111: #{tpu_custom_call.1} parent=5 // pred_region
        %s1933 = ssub.s32 %s28, 2
        // Predicated region
        $region113: #{tpu_custom_call.1} parent=111 // pred_check
          %p1934 = pneg %p433
        $region114: #{tpu_custom_call.1} parent=111 // pred_check_branch
          %1936 = sbr.rel (%p1934) target = $region116
        $region115: #{tpu_custom_call.1} parent=111 // pred_region
          %s1937 = sand.u32 %s418, 1
          %s1938 = scalar_lea.sflag [#allocation7], %s1937
          %s1939 = sand.u32 %s418, 1
          %s1940 = smul.addr %s1939, 8
          %s1941 = scalar_lea.vmem [#allocation11], %s1940
          %1942 = dma.done %s1938, 128
        $region116: #{tpu_custom_call.1} parent=111 // pred_fallthru
          _
      $region112: #{tpu_custom_call.1} parent=5 // pred_fallthru
        _
    $region6: #{tpu_custom_call.1} parent=1 // loop_footer
      %s32 = sadd.s32 1, %s28
    $region7: #{tpu_custom_call.1} parent=1 // loop_footer_branch
      %27 = sbr.rel target = $region3
    $region8: #{tpu_custom_call.1} parent=1 // loop_exit
      _
    %1943 = vsyncpa [#allocation6], 1
    %s1944 = scalar_lea.sflag [#allocation6], 1
    %1945 = vsyncpa %s1944, 1
    %1946 = vsyncpa [#allocation9], 1
    %1947 = vsyncpa [#allocation7], 1
    %s1948 = scalar_lea.sflag [#allocation7], 1
    %1949 = vsyncpa %s1948, 1

</llo_original>
